<compile_context>
chip_gen: v7x
topology: tpu7x:2x2x1
jax: 0.10.0
libtpu: 0.0.40
codegen_flags: <defaults>
</compile_context>

<pallas_src>
import numpy as np
import jax
import jax.numpy as jnp
from jax import lax
from jax.experimental import pallas as pl
from jax.experimental.pallas import tpu as pltpu


# ----------------------------------------------------------------------------
# Fused activation: ONE transcendental evaluation -> (f(x), f'(x), f''(x)).
#   f1 == None means f' == 1 (identity), f2 == None means f'' == 0.
# Pure jnp, reused by both the Pallas kernel and the pure-JAX reference.
# ----------------------------------------------------------------------------
def _apply_act(name, pre):
    if name == 'none':
        return pre, None, None
    if name in ('relu', 'leaky_relu', 'lrelu'):
        slope = 0.0 if name == 'relu' else 0.01
        pos = pre >= 0
        y = jnp.where(pos, pre, slope * pre)
        f1 = jnp.where(pos, 1.0, slope).astype(pre.dtype)
        return y, f1, None                       # f'' == 0: term skipped
    if name == 'sigmoid':
        y = jax.nn.sigmoid(pre)                  # single EUP path
        f1 = y * (1.0 - y)
        f2 = (1.0 - 2.0 * y) * f1
        return y, f1, f2
    if name == 'tanh':
        y = jnp.tanh(pre)                        # single EUP path
        f1 = 1.0 - y * y
        f2 = -2.0 * y * f1
        return y, f1, f2
    if name in ('sin', 'siren'):
        s = jnp.sin(pre)
        c = jnp.cos(pre)
        return s, c, -s                          # sin/cos evaluated once each
    raise ValueError(f"unknown activation {name}")


# ----------------------------------------------------------------------------
# Fused kernel: entire Sequential stack in one pallas_call.
# Slab layout (persistent, features on the lane axis):
#   slab[0]              : x        (B_pad, Dmax)
#   slab[1 : 1+Hdim]     : dx/dh_h  (Hdim, B_pad, Dmax)
#   slab[1+Hdim : ]      : d2x/dh2  (Hdim, B_pad, Dmax)
# Per layer: ONE MXU contraction of the flattened slab against the padded W,
# then in-place activation / derivative updates written back into out_ref.
# ----------------------------------------------------------------------------
def _make_fused_kernel(acts, B_pad, Hdim, has_j, has_h, Dmax):
    n_layers = len(acts)
    G = 1 + (Hdim if has_j else 0) + (Hdim if has_h else 0)
    R = G * B_pad

    def kernel(slab_ref, w_ref, b_ref, out_ref):
        S = slab_ref[...]                            # (G, B_pad, Dmax)
        for li in range(n_layers):                   # unrolled at trace time
            W = w_ref[li]                            # (Dmax, Dmax), zero-padded
            bias = b_ref[li]                         # (1, Dmax), zero-padded

            # --- single MXU push: flattened slab rows vs. W^T ---------------
            S_lin = lax.dot_general(
                S.reshape(R, Dmax), W,
                (((1,), (1,)), ((), ())),
                precision=lax.Precision.HIGHEST,
                preferred_element_type=jnp.float32,
            ).reshape(G, B_pad, Dmax)

            # --- value rows: bias + activation -------------------------------
            pre = S_lin[0] + bias                    # (B_pad, Dmax)
            y, f1, f2 = _apply_act(acts[li], pre)
            out_ref[pl.ds(0, 1)] = y[None]

            # --- derivative rows: stride-0 broadcast, no jnp.tile ------------
            if has_j:
                Jlin = S_lin[1:1 + Hdim]             # (Hdim, B_pad, Dmax)
                Jn = Jlin if f1 is None else f1[None] * Jlin
                out_ref[pl.ds(1, Hdim)] = Jn
                if has_h:
                    Hlin = S_lin[1 + Hdim:]          # (Hdim, B_pad, Dmax)
                    Hn = Hlin if f1 is None else f1[None] * Hlin
                    if f2 is not None:               # skipped when f'' == 0
                        Hn = Hn + f2[None] * (Jlin * Jlin)
                    out_ref[pl.ds(1 + Hdim, Hdim)] = Hn

            if li + 1 < n_layers:
                S = out_ref[...]                     # persistent slab read-back

    return kernel


# ----------------------------------------------------------------------------
# Sequential(MLP, MLP, ...) forward — matches PyTorch Sequential.forward.
#   x       : (B, in_dim)
#   dx_dh   : (B, in_dim, nhdim) or None
#   d2x_dh2 : (B, in_dim, nhdim) or None
# Returns (y, dy_dh, d2y_dh2) in the PyTorch layout.
# ----------------------------------------------------------------------------
def sequential_forward(mlps, x, dx_dh=None, d2x_dh2=None):
    layers = [layer for mlp in mlps for layer in mlp]
    acts = [act for (_, _, act) in layers]
    B, in_dim = x.shape
    dims = [in_dim] + [W.shape[0] for (W, _, _) in layers]
    Dout_last = dims[-1]
    Dmax = max(dims)
    L = len(layers)

    has_j = dx_dh is not None
    has_h = has_j and (d2x_dh2 is not None)       # matches nested PyTorch logic
    Hdim = dx_dh.shape[-1] if has_j else 0
    G = 1 + (Hdim if has_j else 0) + (Hdim if has_h else 0)
    B_pad = -(-B // 8) * 8                        # sublane-aligned slot blocks

    # --- packed parameters: one weight slab, one bias slab -------------------
    Wp = jnp.zeros((L, Dmax, Dmax), jnp.float32)
    bp = jnp.zeros((L, 1, Dmax), jnp.float32)
    for li, (W, b, _) in enumerate(layers):
        Wp = Wp.at[li, :W.shape[0], :W.shape[1]].set(W.astype(jnp.float32))
        bp = bp.at[li, 0, :b.shape[0]].set(b.astype(jnp.float32))

    # --- input slab (G, B_pad, Dmax): x ; J per h ; H per h -------------------
    slab = jnp.zeros((G, B_pad, Dmax), jnp.float32)
    slab = slab.at[0, :B, :in_dim].set(x.astype(jnp.float32))
    if has_j:
        slab = slab.at[1:1 + Hdim, :B, :in_dim].set(
            jnp.transpose(dx_dh, (2, 0, 1)).astype(jnp.float32))
    if has_h:
        slab = slab.at[1 + Hdim:, :B, :in_dim].set(
            jnp.transpose(d2x_dh2, (2, 0, 1)).astype(jnp.float32))

    vmem = pl.BlockSpec(memory_space=pltpu.MemorySpace.VMEM)
    out = pl.pallas_call(
        _make_fused_kernel(acts, B_pad, Hdim, has_j, has_h, Dmax),
        out_shape=jax.ShapeDtypeStruct((G, B_pad, Dmax), jnp.float32),
        in_specs=[vmem, vmem, vmem],
        out_specs=vmem,
        compiler_params=pltpu.CompilerParams(
            vmem_limit_bytes=32 * 1024 * 1024),    # explicit; safe on v5e/v6e/v7x
    )(slab, Wp, bp)

    # --- split the single coalesced output back to PyTorch layout ------------
    y = out[0, :B, :Dout_last]
    dy_dh = d2y_dh2 = None
    if has_j:
        dy_dh = jnp.transpose(out[1:1 + Hdim, :B, :Dout_last], (1, 2, 0))
    if has_h:
        d2y_dh2 = jnp.transpose(out[1 + Hdim:, :B, :Dout_last], (1, 2, 0))
    return y, dy_dh, d2y_dh2


# ----------------------------------------------------------------------------
# Pure-JAX reference (mirrors the PyTorch module exactly) — for validation.
# ----------------------------------------------------------------------------
def _reference_forward(layers, x, dx_dh=None, d2x_dh2=None):
    hp = lax.Precision.HIGHEST
    for (W, b, act) in layers:
        pre = jnp.einsum('bd,od->bo', x, W, precision=hp) + b
        if dx_dh is not None:
            dJ = jnp.einsum('od,bdh->boh', W, dx_dh, precision=hp)
            dH = (jnp.einsum('od,bdh->boh', W, d2x_dh2, precision=hp)
                  if d2x_dh2 is not None else None)
        else:
            dJ, dH = None, None
        y, f1, f2 = _apply_act(act, pre)
        x = y
        if dJ is not None:
            f1v = jnp.ones_like(pre) if f1 is None else f1
            dx_dh = f1v[:, :, None] * dJ
            if dH is not None:
                d2x_dh2 = dH * f1v[:, :, None]
                if f2 is not None:
                    d2x_dh2 = d2x_dh2 + f2[:, :, None] * dJ ** 2
            else:
                d2x_dh2 = None
        else:
            dx_dh, d2x_dh2 = None, None
    return x, dx_dh, d2x_dh2


# ----------------------------------------------------------------------------
# Parameter construction (deterministic, mirrors the PyTorch __init__ ranges)
# ----------------------------------------------------------------------------
def init_mlp(key, in_dim, h_dims, activations):
    assert len(h_dims) == len(activations)
    layers = []
    d = in_dim
    for i, (h, act) in enumerate(zip(h_dims, activations)):
        key, kw, kb = jax.random.split(key, 3)
        if act == 'siren':
            bound = (30.0 / d) if i == 0 else float(np.sqrt(6.0 / d))
        else:
            bound = 1.0 / float(np.sqrt(d))       # torch.nn.Linear-like default
        W = jax.random.uniform(kw, (h, d), jnp.float32, -bound, bound)
        b = jax.random.uniform(kb, (h,), jnp.float32,
                               -1.0 / float(np.sqrt(d)), 1.0 / float(np.sqrt(d)))
        layers.append((W, b, act))
        d = h
    return layers, key


if __name__ == "__main__":
    key = jax.random.PRNGKey(0)
    B, in_dim, hidden = 8, 2, 32

    # Sequential(MLP(2 -> [32, 32], siren), MLP(32 -> [32, 1], sin/none))
    mlp1, key = init_mlp(key, in_dim, [hidden, hidden], ['siren', 'siren'])
    mlp2, key = init_mlp(key, hidden, [hidden, 1], ['sin', 'none'])
    mlps = [mlp1, mlp2]

    key, kx = jax.random.split(key)
    x = jax.random.uniform(kx, (B, in_dim), jnp.float32, -1.0, 1.0)
    # Seed derivatives w.r.t. the input coordinates h = x
    dx_dh = jnp.broadcast_to(jnp.eye(in_dim, dtype=jnp.float32), (B, in_dim, in_dim))
    d2x_dh2 = jnp.zeros((B, in_dim, in_dim), jnp.float32)

    y, dy_dh, d2y_dh2 = sequential_forward(mlps, x, dx_dh, d2x_dh2)
    jax.block_until_ready((y, dy_dh, d2y_dh2))

    assert y.shape == (B, 1)
    assert dy_dh.shape == (B, 1, in_dim)
    assert d2y_dh2.shape == (B, 1, in_dim)

    # Validate against the pure-JAX reference of the PyTorch module.
    layers_flat = [l for mlp in mlps for l in mlp]
    y_r, dy_r, d2y_r = _reference_forward(layers_flat, x, dx_dh, d2x_dh2)
    np.testing.assert_allclose(np.asarray(y), np.asarray(y_r), rtol=1e-4, atol=1e-4)
    np.testing.assert_allclose(np.asarray(dy_dh), np.asarray(dy_r), rtol=1e-4, atol=1e-4)
    np.testing.assert_allclose(np.asarray(d2y_dh2), np.asarray(d2y_r), rtol=1e-4, atol=1e-4)

    print("KERNEL_OK")
</pallas_src>

<mosaic_0001>
module attributes {stable_mosaic.version = 11 : i64} {
  func.func @kernel(%arg0: memref<5x8x32xf32, #tpu.memory_space<vmem>>, %arg1: memref<4x32x32xf32, #tpu.memory_space<vmem>>, %arg2: memref<4x1x32xf32, #tpu.memory_space<vmem>>, %arg3: memref<5x8x32xf32, #tpu.memory_space<vmem>>) attributes {dimension_semantics = [], scalar_prefetch = 0 : i64, scratch_operands = 0 : i64, tpu.core_type = #tpu.core_type<tc>} {
    %c0 = arith.constant 0 : index
    %c0_0 = arith.constant 0 : index
    %c0_1 = arith.constant 0 : index
    %0 = vector.load %arg0[%c0, %c0_0, %c0_1] : memref<5x8x32xf32, #tpu.memory_space<vmem>>, vector<5x8x32xf32>
    %c0_2 = arith.constant 0 : index
    %c0_3 = arith.constant 0 : index
    %c0_4 = arith.constant 0 : index
    %1 = vector.load %arg1[%c0_2, %c0_3, %c0_4] : memref<4x32x32xf32, #tpu.memory_space<vmem>>, vector<1x32x32xf32>
    %2 = vector.shape_cast %1 : vector<1x32x32xf32> to vector<32x32xf32>
    %c0_5 = arith.constant 0 : index
    %c0_6 = arith.constant 0 : index
    %c0_7 = arith.constant 0 : index
    %3 = vector.load %arg2[%c0_5, %c0_6, %c0_7] : memref<4x1x32xf32, #tpu.memory_space<vmem>>, vector<1x1x32xf32>
    %4 = vector.shape_cast %3 : vector<1x1x32xf32> to vector<1x32xf32>
    %5 = vector.shape_cast %0 : vector<5x8x32xf32> to vector<40x32xf32>
    %cst = arith.constant dense<0.000000e+00> : vector<40x32xf32>
    %6 = tpu.matmul %5, %2, %cst {dimension_numbers = #tpu.dot_dimension_numbers<[1], [1], [0], [0], [0, 0, 1, 0], [], []>, precision = #tpu.contract_precision<fp32>} : vector<40x32xf32>, vector<32x32xf32>, vector<40x32xf32> -> vector<40x32xf32>
    %7 = vector.shape_cast %6 : vector<40x32xf32> to vector<5x8x32xf32>
    %8 = vector.extract_strided_slice %7 {offsets = [0, 0, 0], sizes = [1, 8, 32], strides = [1, 1, 1]} : vector<5x8x32xf32> to vector<1x8x32xf32>
    %9 = vector.shape_cast %8 : vector<1x8x32xf32> to vector<8x32xf32>
    %10 = vector.broadcast %4 : vector<1x32xf32> to vector<8x32xf32>
    %11 = arith.addf %9, %10 : vector<8x32xf32>
    %12 = math.sin %11 : vector<8x32xf32>
    %13 = math.cos %11 : vector<8x32xf32>
    %cst_8 = arith.constant 0.000000e+00 : f32
    %14 = vector.broadcast %cst_8 : f32 to vector<8x32xf32>
    %15 = arith.subf %14, %12 : vector<8x32xf32>
    %16 = vector.shape_cast %12 : vector<8x32xf32> to vector<1x8x32xf32>
    %c0_9 = arith.constant 0 : index
    %c0_10 = arith.constant 0 : index
    %c0_11 = arith.constant 0 : index
    %17 = vector.load %arg3[%c0_9, %c0_10, %c0_11] : memref<5x8x32xf32, #tpu.memory_space<vmem>>, vector<1x8x32xf32>
    tpu.vector_store %arg3[%c0_9, %c0_10, %c0_11], %16 {strides = array<i32>} : memref<5x8x32xf32, #tpu.memory_space<vmem>>, vector<1x8x32xf32>,
    %18 = vector.extract_strided_slice %7 {offsets = [1, 0, 0], sizes = [2, 8, 32], strides = [1, 1, 1]} : vector<5x8x32xf32> to vector<2x8x32xf32>
    %19 = vector.shape_cast %13 : vector<8x32xf32> to vector<1x8x32xf32>
    %20 = vector.broadcast %19 : vector<1x8x32xf32> to vector<2x8x32xf32>
    %21 = arith.mulf %20, %18 : vector<2x8x32xf32>
    %c1 = arith.constant 1 : index
    %c0_12 = arith.constant 0 : index
    %c0_13 = arith.constant 0 : index
    %22 = vector.load %arg3[%c1, %c0_12, %c0_13] : memref<5x8x32xf32, #tpu.memory_space<vmem>>, vector<2x8x32xf32>
    tpu.vector_store %arg3[%c1, %c0_12, %c0_13], %21 {strides = array<i32>} : memref<5x8x32xf32, #tpu.memory_space<vmem>>, vector<2x8x32xf32>,
    %23 = vector.extract_strided_slice %7 {offsets = [3, 0, 0], sizes = [2, 8, 32], strides = [1, 1, 1]} : vector<5x8x32xf32> to vector<2x8x32xf32>
    %24 = vector.shape_cast %13 : vector<8x32xf32> to vector<1x8x32xf32>
    %25 = vector.broadcast %24 : vector<1x8x32xf32> to vector<2x8x32xf32>
    %26 = arith.mulf %25, %23 : vector<2x8x32xf32>
    %27 = vector.shape_cast %15 : vector<8x32xf32> to vector<1x8x32xf32>
    %28 = arith.mulf %18, %18 : vector<2x8x32xf32>
    %29 = vector.broadcast %27 : vector<1x8x32xf32> to vector<2x8x32xf32>
    %30 = arith.mulf %29, %28 : vector<2x8x32xf32>
    %31 = arith.addf %26, %30 : vector<2x8x32xf32>
    %c3 = arith.constant 3 : index
    %c0_14 = arith.constant 0 : index
    %c0_15 = arith.constant 0 : index
    %32 = vector.load %arg3[%c3, %c0_14, %c0_15] : memref<5x8x32xf32, #tpu.memory_space<vmem>>, vector<2x8x32xf32>
    tpu.vector_store %arg3[%c3, %c0_14, %c0_15], %31 {strides = array<i32>} : memref<5x8x32xf32, #tpu.memory_space<vmem>>, vector<2x8x32xf32>,
    %c0_16 = arith.constant 0 : index
    %c0_17 = arith.constant 0 : index
    %c0_18 = arith.constant 0 : index
    %33 = vector.load %arg3[%c0_16, %c0_17, %c0_18] : memref<5x8x32xf32, #tpu.memory_space<vmem>>, vector<5x8x32xf32>
    %c1_19 = arith.constant 1 : index
    %c0_20 = arith.constant 0 : index
    %c0_21 = arith.constant 0 : index
    %34 = vector.load %arg1[%c1_19, %c0_20, %c0_21] : memref<4x32x32xf32, #tpu.memory_space<vmem>>, vector<1x32x32xf32>
    %35 = vector.shape_cast %34 : vector<1x32x32xf32> to vector<32x32xf32>
    %c1_22 = arith.constant 1 : index
    %c0_23 = arith.constant 0 : index
    %c0_24 = arith.constant 0 : index
    %36 = vector.load %arg2[%c1_22, %c0_23, %c0_24] : memref<4x1x32xf32, #tpu.memory_space<vmem>>, vector<1x1x32xf32>
    %37 = vector.shape_cast %36 : vector<1x1x32xf32> to vector<1x32xf32>
    %38 = vector.shape_cast %33 : vector<5x8x32xf32> to vector<40x32xf32>
    %cst_25 = arith.constant dense<0.000000e+00> : vector<40x32xf32>
    %39 = tpu.matmul %38, %35, %cst_25 {dimension_numbers = #tpu.dot_dimension_numbers<[1], [1], [0], [0], [0, 0, 1, 0], [], []>, precision = #tpu.contract_precision<fp32>} : vector<40x32xf32>, vector<32x32xf32>, vector<40x32xf32> -> vector<40x32xf32>
    %40 = vector.shape_cast %39 : vector<40x32xf32> to vector<5x8x32xf32>
    %41 = vector.extract_strided_slice %40 {offsets = [0, 0, 0], sizes = [1, 8, 32], strides = [1, 1, 1]} : vector<5x8x32xf32> to vector<1x8x32xf32>
    %42 = vector.shape_cast %41 : vector<1x8x32xf32> to vector<8x32xf32>
    %43 = vector.broadcast %37 : vector<1x32xf32> to vector<8x32xf32>
    %44 = arith.addf %42, %43 : vector<8x32xf32>
    %45 = math.sin %44 : vector<8x32xf32>
    %46 = math.cos %44 : vector<8x32xf32>
    %cst_26 = arith.constant 0.000000e+00 : f32
    %47 = vector.broadcast %cst_26 : f32 to vector<8x32xf32>
    %48 = arith.subf %47, %45 : vector<8x32xf32>
    %49 = vector.shape_cast %45 : vector<8x32xf32> to vector<1x8x32xf32>
    %c0_27 = arith.constant 0 : index
    %c0_28 = arith.constant 0 : index
    %c0_29 = arith.constant 0 : index
    %50 = vector.load %arg3[%c0_27, %c0_28, %c0_29] : memref<5x8x32xf32, #tpu.memory_space<vmem>>, vector<1x8x32xf32>
    tpu.vector_store %arg3[%c0_27, %c0_28, %c0_29], %49 {strides = array<i32>} : memref<5x8x32xf32, #tpu.memory_space<vmem>>, vector<1x8x32xf32>,
    %51 = vector.extract_strided_slice %40 {offsets = [1, 0, 0], sizes = [2, 8, 32], strides = [1, 1, 1]} : vector<5x8x32xf32> to vector<2x8x32xf32>
    %52 = vector.shape_cast %46 : vector<8x32xf32> to vector<1x8x32xf32>
    %53 = vector.broadcast %52 : vector<1x8x32xf32> to vector<2x8x32xf32>
    %54 = arith.mulf %53, %51 : vector<2x8x32xf32>
    %c1_30 = arith.constant 1 : index
    %c0_31 = arith.constant 0 : index
    %c0_32 = arith.constant 0 : index
    %55 = vector.load %arg3[%c1_30, %c0_31, %c0_32] : memref<5x8x32xf32, #tpu.memory_space<vmem>>, vector<2x8x32xf32>
    tpu.vector_store %arg3[%c1_30, %c0_31, %c0_32], %54 {strides = array<i32>} : memref<5x8x32xf32, #tpu.memory_space<vmem>>, vector<2x8x32xf32>,
    %56 = vector.extract_strided_slice %40 {offsets = [3, 0, 0], sizes = [2, 8, 32], strides = [1, 1, 1]} : vector<5x8x32xf32> to vector<2x8x32xf32>
    %57 = vector.shape_cast %46 : vector<8x32xf32> to vector<1x8x32xf32>
    %58 = vector.broadcast %57 : vector<1x8x32xf32> to vector<2x8x32xf32>
    %59 = arith.mulf %58, %56 : vector<2x8x32xf32>
    %60 = vector.shape_cast %48 : vector<8x32xf32> to vector<1x8x32xf32>
    %61 = arith.mulf %51, %51 : vector<2x8x32xf32>
    %62 = vector.broadcast %60 : vector<1x8x32xf32> to vector<2x8x32xf32>
    %63 = arith.mulf %62, %61 : vector<2x8x32xf32>
    %64 = arith.addf %59, %63 : vector<2x8x32xf32>
    %c3_33 = arith.constant 3 : index
    %c0_34 = arith.constant 0 : index
    %c0_35 = arith.constant 0 : index
    %65 = vector.load %arg3[%c3_33, %c0_34, %c0_35] : memref<5x8x32xf32, #tpu.memory_space<vmem>>, vector<2x8x32xf32>
    tpu.vector_store %arg3[%c3_33, %c0_34, %c0_35], %64 {strides = array<i32>} : memref<5x8x32xf32, #tpu.memory_space<vmem>>, vector<2x8x32xf32>,
    %c0_36 = arith.constant 0 : index
    %c0_37 = arith.constant 0 : index
    %c0_38 = arith.constant 0 : index
    %66 = vector.load %arg3[%c0_36, %c0_37, %c0_38] : memref<5x8x32xf32, #tpu.memory_space<vmem>>, vector<5x8x32xf32>
    %c2 = arith.constant 2 : index
    %c0_39 = arith.constant 0 : index
    %c0_40 = arith.constant 0 : index
    %67 = vector.load %arg1[%c2, %c0_39, %c0_40] : memref<4x32x32xf32, #tpu.memory_space<vmem>>, vector<1x32x32xf32>
    %68 = vector.shape_cast %67 : vector<1x32x32xf32> to vector<32x32xf32>
    %c2_41 = arith.constant 2 : index
    %c0_42 = arith.constant 0 : index
    %c0_43 = arith.constant 0 : index
    %69 = vector.load %arg2[%c2_41, %c0_42, %c0_43] : memref<4x1x32xf32, #tpu.memory_space<vmem>>, vector<1x1x32xf32>
    %70 = vector.shape_cast %69 : vector<1x1x32xf32> to vector<1x32xf32>
    %71 = vector.shape_cast %66 : vector<5x8x32xf32> to vector<40x32xf32>
    %cst_44 = arith.constant dense<0.000000e+00> : vector<40x32xf32>
    %72 = tpu.matmul %71, %68, %cst_44 {dimension_numbers = #tpu.dot_dimension_numbers<[1], [1], [0], [0], [0, 0, 1, 0], [], []>, precision = #tpu.contract_precision<fp32>} : vector<40x32xf32>, vector<32x32xf32>, vector<40x32xf32> -> vector<40x32xf32>
    %73 = vector.shape_cast %72 : vector<40x32xf32> to vector<5x8x32xf32>
    %74 = vector.extract_strided_slice %73 {offsets = [0, 0, 0], sizes = [1, 8, 32], strides = [1, 1, 1]} : vector<5x8x32xf32> to vector<1x8x32xf32>
    %75 = vector.shape_cast %74 : vector<1x8x32xf32> to vector<8x32xf32>
    %76 = vector.broadcast %70 : vector<1x32xf32> to vector<8x32xf32>
    %77 = arith.addf %75, %76 : vector<8x32xf32>
    %78 = math.sin %77 : vector<8x32xf32>
    %79 = math.cos %77 : vector<8x32xf32>
    %cst_45 = arith.constant 0.000000e+00 : f32
    %80 = vector.broadcast %cst_45 : f32 to vector<8x32xf32>
    %81 = arith.subf %80, %78 : vector<8x32xf32>
    %82 = vector.shape_cast %78 : vector<8x32xf32> to vector<1x8x32xf32>
    %c0_46 = arith.constant 0 : index
    %c0_47 = arith.constant 0 : index
    %c0_48 = arith.constant 0 : index
    %83 = vector.load %arg3[%c0_46, %c0_47, %c0_48] : memref<5x8x32xf32, #tpu.memory_space<vmem>>, vector<1x8x32xf32>
    tpu.vector_store %arg3[%c0_46, %c0_47, %c0_48], %82 {strides = array<i32>} : memref<5x8x32xf32, #tpu.memory_space<vmem>>, vector<1x8x32xf32>,
    %84 = vector.extract_strided_slice %73 {offsets = [1, 0, 0], sizes = [2, 8, 32], strides = [1, 1, 1]} : vector<5x8x32xf32> to vector<2x8x32xf32>
    %85 = vector.shape_cast %79 : vector<8x32xf32> to vector<1x8x32xf32>
    %86 = vector.broadcast %85 : vector<1x8x32xf32> to vector<2x8x32xf32>
    %87 = arith.mulf %86, %84 : vector<2x8x32xf32>
    %c1_49 = arith.constant 1 : index
    %c0_50 = arith.constant 0 : index
    %c0_51 = arith.constant 0 : index
    %88 = vector.load %arg3[%c1_49, %c0_50, %c0_51] : memref<5x8x32xf32, #tpu.memory_space<vmem>>, vector<2x8x32xf32>
    tpu.vector_store %arg3[%c1_49, %c0_50, %c0_51], %87 {strides = array<i32>} : memref<5x8x32xf32, #tpu.memory_space<vmem>>, vector<2x8x32xf32>,
    %89 = vector.extract_strided_slice %73 {offsets = [3, 0, 0], sizes = [2, 8, 32], strides = [1, 1, 1]} : vector<5x8x32xf32> to vector<2x8x32xf32>
    %90 = vector.shape_cast %79 : vector<8x32xf32> to vector<1x8x32xf32>
    %91 = vector.broadcast %90 : vector<1x8x32xf32> to vector<2x8x32xf32>
    %92 = arith.mulf %91, %89 : vector<2x8x32xf32>
    %93 = vector.shape_cast %81 : vector<8x32xf32> to vector<1x8x32xf32>
    %94 = arith.mulf %84, %84 : vector<2x8x32xf32>
    %95 = vector.broadcast %93 : vector<1x8x32xf32> to vector<2x8x32xf32>
    %96 = arith.mulf %95, %94 : vector<2x8x32xf32>
    %97 = arith.addf %92, %96 : vector<2x8x32xf32>
    %c3_52 = arith.constant 3 : index
    %c0_53 = arith.constant 0 : index
    %c0_54 = arith.constant 0 : index
    %98 = vector.load %arg3[%c3_52, %c0_53, %c0_54] : memref<5x8x32xf32, #tpu.memory_space<vmem>>, vector<2x8x32xf32>
    tpu.vector_store %arg3[%c3_52, %c0_53, %c0_54], %97 {strides = array<i32>} : memref<5x8x32xf32, #tpu.memory_space<vmem>>, vector<2x8x32xf32>,
    %c0_55 = arith.constant 0 : index
    %c0_56 = arith.constant 0 : index
    %c0_57 = arith.constant 0 : index
    %99 = vector.load %arg3[%c0_55, %c0_56, %c0_57] : memref<5x8x32xf32, #tpu.memory_space<vmem>>, vector<5x8x32xf32>
    %c3_58 = arith.constant 3 : index
    %c0_59 = arith.constant 0 : index
    %c0_60 = arith.constant 0 : index
    %100 = vector.load %arg1[%c3_58, %c0_59, %c0_60] : memref<4x32x32xf32, #tpu.memory_space<vmem>>, vector<1x32x32xf32>
    %101 = vector.shape_cast %100 : vector<1x32x32xf32> to vector<32x32xf32>
    %c3_61 = arith.constant 3 : index
    %c0_62 = arith.constant 0 : index
    %c0_63 = arith.constant 0 : index
    %102 = vector.load %arg2[%c3_61, %c0_62, %c0_63] : memref<4x1x32xf32, #tpu.memory_space<vmem>>, vector<1x1x32xf32>
    %103 = vector.shape_cast %102 : vector<1x1x32xf32> to vector<1x32xf32>
    %104 = vector.shape_cast %99 : vector<5x8x32xf32> to vector<40x32xf32>
    %cst_64 = arith.constant dense<0.000000e+00> : vector<40x32xf32>
    %105 = tpu.matmul %104, %101, %cst_64 {dimension_numbers = #tpu.dot_dimension_numbers<[1], [1], [0], [0], [0, 0, 1, 0], [], []>, precision = #tpu.contract_precision<fp32>} : vector<40x32xf32>, vector<32x32xf32>, vector<40x32xf32> -> vector<40x32xf32>
    %106 = vector.shape_cast %105 : vector<40x32xf32> to vector<5x8x32xf32>
    %107 = vector.extract_strided_slice %106 {offsets = [0, 0, 0], sizes = [1, 8, 32], strides = [1, 1, 1]} : vector<5x8x32xf32> to vector<1x8x32xf32>
    %108 = vector.shape_cast %107 : vector<1x8x32xf32> to vector<8x32xf32>
    %109 = vector.broadcast %103 : vector<1x32xf32> to vector<8x32xf32>
    %110 = arith.addf %108, %109 : vector<8x32xf32>
    %111 = vector.shape_cast %110 : vector<8x32xf32> to vector<1x8x32xf32>
    %c0_65 = arith.constant 0 : index
    %c0_66 = arith.constant 0 : index
    %c0_67 = arith.constant 0 : index
    %112 = vector.load %arg3[%c0_65, %c0_66, %c0_67] : memref<5x8x32xf32, #tpu.memory_space<vmem>>, vector<1x8x32xf32>
    tpu.vector_store %arg3[%c0_65, %c0_66, %c0_67], %111 {strides = array<i32>} : memref<5x8x32xf32, #tpu.memory_space<vmem>>, vector<1x8x32xf32>,
    %113 = vector.extract_strided_slice %106 {offsets = [1, 0, 0], sizes = [2, 8, 32], strides = [1, 1, 1]} : vector<5x8x32xf32> to vector<2x8x32xf32>
    %c1_68 = arith.constant 1 : index
    %c0_69 = arith.constant 0 : index
    %c0_70 = arith.constant 0 : index
    %114 = vector.load %arg3[%c1_68, %c0_69, %c0_70] : memref<5x8x32xf32, #tpu.memory_space<vmem>>, vector<2x8x32xf32>
    tpu.vector_store %arg3[%c1_68, %c0_69, %c0_70], %113 {strides = array<i32>} : memref<5x8x32xf32, #tpu.memory_space<vmem>>, vector<2x8x32xf32>,
    %115 = vector.extract_strided_slice %106 {offsets = [3, 0, 0], sizes = [2, 8, 32], strides = [1, 1, 1]} : vector<5x8x32xf32> to vector<2x8x32xf32>
    %c3_71 = arith.constant 3 : index
    %c0_72 = arith.constant 0 : index
    %c0_73 = arith.constant 0 : index
    %116 = vector.load %arg3[%c3_71, %c0_72, %c0_73] : memref<5x8x32xf32, #tpu.memory_space<vmem>>, vector<2x8x32xf32>
    tpu.vector_store %arg3[%c3_71, %c0_72, %c0_73], %115 {strides = array<i32>} : memref<5x8x32xf32, #tpu.memory_space<vmem>>, vector<2x8x32xf32>,
    return
  }
}

</mosaic_0001>

<llo_original>
// kernel: tpu_custom_call.1
$region0: #{tpu_custom_call.1}
  #allocation0 [shape = 'u32[]', space=smem, size = 0x4, offset = 0x4, fixed_abs, tag = 'smem constant byte address 0x4 - core index']
  #allocation1 [shape = 'u32[144,128]{1,0:T(1,128)}', space=vmem, size = 0x12000, scoped, tag = 'internal scratch']
  %s0 = inlined_call_operand.hbm [shape: f32[5,8,32], index: 0, kind: input, shape index: {}]
  %s1 = inlined_call_operand.hbm [shape: f32[4,32,32], index: 1, kind: input, shape index: {}]
  %s2 = inlined_call_operand.vmem [shape: f32[4,1,32], index: 2, kind: input, shape index: {}]
  %s3 = inlined_call_operand.hbm [shape: f32[5,8,32], index: 3, kind: output, shape index: {}]
  %s4 = sld [smem:[#allocation0]]
  $region30: #{tpu_custom_call.1} parent=0
    _
  %s6 = ssub.s32 1, %s4
  %s7 = scalar_select 0, %s6, %s4
  $region1: #{tpu_custom_call.1} parent=0
    #allocation2 [shape = 'u8[20480]{0}', space=vmem, size = 0x5000, scoped, tag = 'input window, operand 0, single buffered']
    #allocation3 [shape = 's32[1]{0}', space=sflag, size = 0x4, scoped, tag = 'scoped memory for tpu_custom_call.1']
    #allocation4 [shape = 's32[1]{0}', space=sflag, size = 0x4, scoped, tag = 'scoped memory for tpu_custom_call.1']
    #allocation5 [shape = 'u8[65536]{0}', space=vmem, size = 0x10000, scoped, tag = 'input window, operand 1, single buffered']
    #allocation6 [shape = 's32[1]{0}', space=sflag, size = 0x4, scoped, tag = 'scoped memory for tpu_custom_call.1']
    #allocation7 [shape = 'u8[20480]{0}', space=vmem, size = 0x5000, scoped, tag = 'output window, operand 0, single buffered']
    %8 = vsyncpa [#allocation3], 0
    %9 = vsyncpa [#allocation6], 0
    %10 = vsyncpa [#allocation4], 0
    // Predicated region
    $region2: #{tpu_custom_call.1} parent=1 // pred_check
      _
    $region3: #{tpu_custom_call.1} parent=1 // pred_check_branch
      %12 = sbr.rel (0) target = $region5
    $region4: #{tpu_custom_call.1} parent=1 // pred_region
      %s14 = ssub.s32 640, 640
      %15 = vsyncadd [#allocation3], %s14
      %s16 = sshll.u32 [#allocation2], 4
      %s17 = int_to_ptr.vmem [resolvable:$true] %s16
      %22 = dma.hbm_to_vmem [thread:$0]  %s0, 640, %s17, [#allocation3], 128, 128, 8
    $region5: #{tpu_custom_call.1} parent=1 // pred_fallthru
      _
    // Predicated region
    $region6: #{tpu_custom_call.1} parent=1 // pred_check
      _
    $region7: #{tpu_custom_call.1} parent=1 // pred_check_branch
      %24 = sbr.rel (0) target = $region9
    $region8: #{tpu_custom_call.1} parent=1 // pred_region
      %s26 = ssub.s32 2048, 2048
      %27 = vsyncadd [#allocation6], %s26
      %s28 = sshll.u32 [#allocation5], 4
      %s29 = int_to_ptr.vmem [resolvable:$true] %s28
      %34 = dma.hbm_to_vmem [thread:$0]  %s1, 2048, %s29, [#allocation6], 128, 128, 8
    $region9: #{tpu_custom_call.1} parent=1 // pred_fallthru
      _
    // Predicated region
    $region10: #{tpu_custom_call.1} parent=1 // pred_check
      _
    $region11: #{tpu_custom_call.1} parent=1 // pred_check_branch
      %36 = sbr.rel (0) target = $region13
    $region12: #{tpu_custom_call.1} parent=1 // pred_region
      _
    $region13: #{tpu_custom_call.1} parent=1 // pred_fallthru
      _
    // Predicated region
    $region14: #{tpu_custom_call.1} parent=1 // pred_check
      _
    $region15: #{tpu_custom_call.1} parent=1 // pred_check_branch
      %38 = sbr.rel (0) target = $region17
    $region16: #{tpu_custom_call.1} parent=1 // pred_region
      %39 = dma.done [#allocation3], 640
    $region17: #{tpu_custom_call.1} parent=1 // pred_fallthru
      _
    // Predicated region
    $region18: #{tpu_custom_call.1} parent=1 // pred_check
      _
    $region19: #{tpu_custom_call.1} parent=1 // pred_check_branch
      %41 = sbr.rel (0) target = $region21
    $region20: #{tpu_custom_call.1} parent=1 // pred_region
      %42 = dma.done [#allocation6], 2048
    $region21: #{tpu_custom_call.1} parent=1 // pred_fallthru
      _
    %v43 = vld [vmem:[#allocation2] sm:$0xff]
    %v44 = vld [vmem:[#allocation2 + $0x8] sm:$0xff]
    %v45 = vld [vmem:[#allocation2 + $0x10] sm:$0xff]
    %v46 = vld [vmem:[#allocation2 + $0x18] sm:$0xff]
    %v47 = vld [vmem:[#allocation2 + $0x20] sm:$0xff]
    %v48 = vld [vmem:[#allocation5] sm:$0xff]
    %v49 = vld [vmem:[#allocation5 + $0x8] sm:$0xff]
    %v50 = vld [vmem:[#allocation5 + $0x10] sm:$0xff]
    %v51 = vld [vmem:[#allocation5 + $0x18] sm:$0xff]
    %v52 = vld [vmem:[%s2] sm:$0x1]
    %vm53 = vcmask 261120
    %v55 = vsel %vm53, %v43, 0
    %v58 = vsel %vm53, %v44, 0
    %v61 = vsel %vm53, %v45, 0
    %v64 = vsel %vm53, %v46, 0
    %v67 = vsel %vm53, %v47, 0
    %v70 = vsel %vm53, %v48, 0
    %v73 = vsel %vm53, %v49, 0
    %v76 = vsel %vm53, %v50, 0
    %v79 = vsel %vm53, %v51, 0
    %81 = vmatprep.subr.mxu0 0.0
    %v82 = vand.u32 %v70, 4294901760
    %83 = vmatpush1.xpose.msra.mxu0 %v82
    %84 = vmatprep.subr.mxu0 0.0
    %v85 = vand.u32 %v73, 4294901760
    %86 = vmatpush1.xpose.msra.mxu0 %v85
    %87 = vmatprep.subr.mxu0 0.0
    %v88 = vand.u32 %v76, 4294901760
    %89 = vmatpush1.xpose.msra.mxu0 %v88
    %90 = vmatprep.subr.mxu0 0.0
    %v91 = vand.u32 %v79, 4294901760
    %92 = vmatpush1.xpose.msra.mxu0 %v91
    %93 = vmatprep.subr.mxu0 0.0
    %94 = vmatpush1.xpose.msra.mxu0 0.0
    %95 = vmatprep.subr.mxu0 0.0
    %96 = vmatpush1.xpose.msra.mxu0 0.0
    %97 = vmatprep.subr.mxu0 0.0
    %98 = vmatpush1.xpose.msra.mxu0 0.0
    %99 = vmatprep.subr.mxu0 0.0
    %100 = vmatpush1.xpose.msra.mxu0 0.0
    %101 = vmatprep.subr.mxu0 0.0
    %102 = vmatpush1.xpose.msra.mxu0 0.0
    %103 = vmatprep.subr.mxu0 0.0
    %104 = vmatpush1.xpose.msra.mxu0 0.0
    %105 = vmatprep.subr.mxu0 0.0
    %106 = vmatpush1.xpose.msra.mxu0 0.0
    %107 = vmatprep.subr.mxu0 0.0
    %108 = vmatpush1.xpose.msra.mxu0 0.0
    %109 = vmatprep.subr.mxu0 0.0
    %110 = vmatpush1.xpose.msra.mxu0 0.0
    %111 = vmatprep.subr.mxu0 0.0
    %112 = vmatpush1.xpose.msra.mxu0 0.0
    %113 = vmatprep.subr.mxu0 0.0
    %114 = vmatpush1.xpose.msra.mxu0 0.0
    %115 = vmatprep.subr.mxu0 0.0
    %116 = vmatpush1.xpose.msra.mxu0 0.0
    %117 = vmatprep.subr.mxu0 0.0
    %118 = vmatpush1.xpose.msra.mxu0 0.0
    %119 = vmatprep.subr.mxu0 0.0
    %120 = vmatpush1.xpose.msra.mxu0 0.0
    %121 = vmatprep.subr.mxu0 0.0
    %122 = vmatpush1.xpose.msra.mxu0 0.0
    %123 = vmatprep.subr.mxu0 0.0
    %124 = vmatpush1.xpose.msra.mxu0 0.0
    %125 = vmatprep.subr.mxu0 0.0
    %126 = vmatpush1.xpose.msra.mxu0 0.0
    %127 = vmatprep.subr.mxu0 0.0
    %128 = vmatpush1.xpose.msra.mxu0 0.0
    %129 = vmatprep.subr.mxu0 0.0
    %130 = vmatpush1.xpose.msra.mxu0 0.0
    %131 = vmatprep.subr.mxu0 0.0
    %132 = vmatpush1.xpose.msra.mxu0 0.0
    %133 = vmatprep.subr.mxu0 0.0
    %134 = vmatpush1.xpose.msra.mxu0 0.0
    %135 = vmatprep.subr.mxu0 0.0
    %136 = vmatpush1.xpose.msra.mxu0 0.0
    %137 = vmatprep.subr.mxu0 0.0
    %138 = vmatpush1.xpose.msra.mxu0 0.0
    %139 = vmatprep.subr.mxu0 0.0
    %140 = vmatpush1.xpose.msra.mxu0 0.0
    %141 = vmatprep.subr.mxu0 0.0
    %142 = vmatpush1.xpose.msra.mxu0 0.0
    %143 = vmatprep.subr.mxu0 0.0
    %144 = vmatpush1.xpose.msra.mxu0 0.0
    %145 = vmatprep.subr.mxu0 0.0
    %146 = vmatpush1.xpose.msra.mxu0 0.0
    %147 = vmatprep.subr.mxu0 0.0
    %148 = vmatpush1.xpose.msra.mxu0 0.0
    %149 = vmatprep.mubr.f32.mxu0 0.0
    %v150 = vand.u32 %v55, 4294901760
    %v151 = vsub.f32 %v55, %v150
    %v152 = vand.u32 %v151, 4294901760
    %v153 = vsub.f32 %v151, %v152
    %v154 = vand.u32 %v153, 4294901760
    %155 = vmatmul.mubr.f32.gmra.mrb[0].mxu0 %v154
    %v156 = vpop.f32.mrb[0].mxu0
    %v157 = vadd.f32 0.0, %v156
    %v158 = vpop.f32.mrb[0].mxu0
    %159 = vmatprep.mubr.f32.mxu0 0.0
    %v160 = vand.u32 %v58, 4294901760
    %v161 = vsub.f32 %v58, %v160
    %v162 = vand.u32 %v161, 4294901760
    %v163 = vsub.f32 %v161, %v162
    %v164 = vand.u32 %v163, 4294901760
    %165 = vmatmul.mubr.f32.gmra.mrb[0].mxu0 %v164
    %v166 = vpop.f32.mrb[0].mxu0
    %v167 = vadd.f32 0.0, %v166
    %v168 = vpop.f32.mrb[0].mxu0
    %169 = vmatprep.mubr.f32.mxu0 0.0
    %v170 = vand.u32 %v61, 4294901760
    %v171 = vsub.f32 %v61, %v170
    %v172 = vand.u32 %v171, 4294901760
    %v173 = vsub.f32 %v171, %v172
    %v174 = vand.u32 %v173, 4294901760
    %175 = vmatmul.mubr.f32.gmra.mrb[0].mxu0 %v174
    %v176 = vpop.f32.mrb[0].mxu0
    %v177 = vadd.f32 0.0, %v176
    %v178 = vpop.f32.mrb[0].mxu0
    %179 = vmatprep.mubr.f32.mxu0 0.0
    %v180 = vand.u32 %v64, 4294901760
    %v181 = vsub.f32 %v64, %v180
    %v182 = vand.u32 %v181, 4294901760
    %v183 = vsub.f32 %v181, %v182
    %v184 = vand.u32 %v183, 4294901760
    %185 = vmatmul.mubr.f32.gmra.mrb[0].mxu0 %v184
    %v186 = vpop.f32.mrb[0].mxu0
    %v187 = vadd.f32 0.0, %v186
    %v188 = vpop.f32.mrb[0].mxu0
    %189 = vmatprep.mubr.f32.mxu0 0.0
    %v190 = vand.u32 %v67, 4294901760
    %v191 = vsub.f32 %v67, %v190
    %v192 = vand.u32 %v191, 4294901760
    %v193 = vsub.f32 %v191, %v192
    %v194 = vand.u32 %v193, 4294901760
    %195 = vmatmul.mubr.f32.gmra.mrb[0].mxu0 %v194
    %v196 = vpop.f32.mrb[0].mxu0
    %v197 = vadd.f32 0.0, %v196
    %v198 = vpop.f32.mrb[0].mxu0
    %199 = vdwg.mxu0
    %200 = vmatprep.subr.mxu0 0.0
    %v201 = vand.u32 %v70, 4294901760
    %v202 = vsub.f32 %v70, %v201
    %v203 = vand.u32 %v202, 4294901760
    %v204 = vsub.f32 %v202, %v203
    %v205 = vand.u32 %v204, 4294901760
    %206 = vmatpush1.xpose.msra.mxu0 %v205
    %207 = vmatprep.subr.mxu0 0.0
    %v208 = vand.u32 %v73, 4294901760
    %v209 = vsub.f32 %v73, %v208
    %v210 = vand.u32 %v209, 4294901760
    %v211 = vsub.f32 %v209, %v210
    %v212 = vand.u32 %v211, 4294901760
    %213 = vmatpush1.xpose.msra.mxu0 %v212
    %214 = vmatprep.subr.mxu0 0.0
    %v215 = vand.u32 %v76, 4294901760
    %v216 = vsub.f32 %v76, %v215
    %v217 = vand.u32 %v216, 4294901760
    %v218 = vsub.f32 %v216, %v217
    %v219 = vand.u32 %v218, 4294901760
    %220 = vmatpush1.xpose.msra.mxu0 %v219
    %221 = vmatprep.subr.mxu0 0.0
    %v222 = vand.u32 %v79, 4294901760
    %v223 = vsub.f32 %v79, %v222
    %v224 = vand.u32 %v223, 4294901760
    %v225 = vsub.f32 %v223, %v224
    %v226 = vand.u32 %v225, 4294901760
    %227 = vmatpush1.xpose.msra.mxu0 %v226
    %228 = vmatprep.subr.mxu0 0.0
    %229 = vmatpush1.xpose.msra.mxu0 0.0
    %230 = vmatprep.subr.mxu0 0.0
    %231 = vmatpush1.xpose.msra.mxu0 0.0
    %232 = vmatprep.subr.mxu0 0.0
    %233 = vmatpush1.xpose.msra.mxu0 0.0
    %234 = vmatprep.subr.mxu0 0.0
    %235 = vmatpush1.xpose.msra.mxu0 0.0
    %236 = vmatprep.subr.mxu0 0.0
    %237 = vmatpush1.xpose.msra.mxu0 0.0
    %238 = vmatprep.subr.mxu0 0.0
    %239 = vmatpush1.xpose.msra.mxu0 0.0
    %240 = vmatprep.subr.mxu0 0.0
    %241 = vmatpush1.xpose.msra.mxu0 0.0
    %242 = vmatprep.subr.mxu0 0.0
    %243 = vmatpush1.xpose.msra.mxu0 0.0
    %244 = vmatprep.subr.mxu0 0.0
    %245 = vmatpush1.xpose.msra.mxu0 0.0
    %246 = vmatprep.subr.mxu0 0.0
    %247 = vmatpush1.xpose.msra.mxu0 0.0
    %248 = vmatprep.subr.mxu0 0.0
    %249 = vmatpush1.xpose.msra.mxu0 0.0
    %250 = vmatprep.subr.mxu0 0.0
    %251 = vmatpush1.xpose.msra.mxu0 0.0
    %252 = vmatprep.subr.mxu0 0.0
    %253 = vmatpush1.xpose.msra.mxu0 0.0
    %254 = vmatprep.subr.mxu0 0.0
    %255 = vmatpush1.xpose.msra.mxu0 0.0
    %256 = vmatprep.subr.mxu0 0.0
    %257 = vmatpush1.xpose.msra.mxu0 0.0
    %258 = vmatprep.subr.mxu0 0.0
    %259 = vmatpush1.xpose.msra.mxu0 0.0
    %260 = vmatprep.subr.mxu0 0.0
    %261 = vmatpush1.xpose.msra.mxu0 0.0
    %262 = vmatprep.subr.mxu0 0.0
    %263 = vmatpush1.xpose.msra.mxu0 0.0
    %264 = vmatprep.subr.mxu0 0.0
    %265 = vmatpush1.xpose.msra.mxu0 0.0
    %266 = vmatprep.subr.mxu0 0.0
    %267 = vmatpush1.xpose.msra.mxu0 0.0
    %268 = vmatprep.subr.mxu0 0.0
    %269 = vmatpush1.xpose.msra.mxu0 0.0
    %270 = vmatprep.subr.mxu0 0.0
    %271 = vmatpush1.xpose.msra.mxu0 0.0
    %272 = vmatprep.subr.mxu0 0.0
    %273 = vmatpush1.xpose.msra.mxu0 0.0
    %274 = vmatprep.subr.mxu0 0.0
    %275 = vmatpush1.xpose.msra.mxu0 0.0
    %276 = vmatprep.subr.mxu0 0.0
    %277 = vmatpush1.xpose.msra.mxu0 0.0
    %278 = vmatprep.subr.mxu0 0.0
    %279 = vmatpush1.xpose.msra.mxu0 0.0
    %280 = vmatprep.subr.mxu0 0.0
    %281 = vmatpush1.xpose.msra.mxu0 0.0
    %282 = vmatprep.subr.mxu0 0.0
    %283 = vmatpush1.xpose.msra.mxu0 0.0
    %284 = vmatprep.mubr.f32.mxu0 0.0
    %v285 = vand.u32 %v55, 4294901760
    %286 = vmatmul.mubr.f32.gmra.mrb[0].mxu0 %v285
    %v287 = vpop.f32.mrb[0].mxu0
    %v288 = vadd.f32 %v157, %v287
    %v289 = vpop.f32.mrb[0].mxu0
    %290 = vmatprep.mubr.f32.mxu0 0.0
    %v291 = vand.u32 %v58, 4294901760
    %292 = vmatmul.mubr.f32.gmra.mrb[0].mxu0 %v291
    %v293 = vpop.f32.mrb[0].mxu0
    %v294 = vadd.f32 %v167, %v293
    %v295 = vpop.f32.mrb[0].mxu0
    %296 = vmatprep.mubr.f32.mxu0 0.0
    %v297 = vand.u32 %v61, 4294901760
    %298 = vmatmul.mubr.f32.gmra.mrb[0].mxu0 %v297
    %v299 = vpop.f32.mrb[0].mxu0
    %v300 = vadd.f32 %v177, %v299
    %v301 = vpop.f32.mrb[0].mxu0
    %302 = vmatprep.mubr.f32.mxu0 0.0
    %v303 = vand.u32 %v64, 4294901760
    %304 = vmatmul.mubr.f32.gmra.mrb[0].mxu0 %v303
    %v305 = vpop.f32.mrb[0].mxu0
    %v306 = vadd.f32 %v187, %v305
    %v307 = vpop.f32.mrb[0].mxu0
    %308 = vmatprep.mubr.f32.mxu0 0.0
    %v309 = vand.u32 %v67, 4294901760
    %310 = vmatmul.mubr.f32.gmra.mrb[0].mxu0 %v309
    %v311 = vpop.f32.mrb[0].mxu0
    %v312 = vadd.f32 %v197, %v311
    %v313 = vpop.f32.mrb[0].mxu0
    %314 = vdwg.mxu0
    %315 = vmatprep.subr.mxu0 0.0
    %v316 = vand.u32 %v70, 4294901760
    %v317 = vsub.f32 %v70, %v316
    %318 = vmatpush1.xpose.msra.mxu0 %v317
    %319 = vmatprep.subr.mxu0 0.0
    %v320 = vand.u32 %v73, 4294901760
    %v321 = vsub.f32 %v73, %v320
    %322 = vmatpush1.xpose.msra.mxu0 %v321
    %323 = vmatprep.subr.mxu0 0.0
    %v324 = vand.u32 %v76, 4294901760
    %v325 = vsub.f32 %v76, %v324
    %326 = vmatpush1.xpose.msra.mxu0 %v325
    %327 = vmatprep.subr.mxu0 0.0
    %v328 = vand.u32 %v79, 4294901760
    %v329 = vsub.f32 %v79, %v328
    %330 = vmatpush1.xpose.msra.mxu0 %v329
    %331 = vmatprep.subr.mxu0 0.0
    %332 = vmatpush1.xpose.msra.mxu0 0.0
    %333 = vmatprep.subr.mxu0 0.0
    %334 = vmatpush1.xpose.msra.mxu0 0.0
    %335 = vmatprep.subr.mxu0 0.0
    %336 = vmatpush1.xpose.msra.mxu0 0.0
    %337 = vmatprep.subr.mxu0 0.0
    %338 = vmatpush1.xpose.msra.mxu0 0.0
    %339 = vmatprep.subr.mxu0 0.0
    %340 = vmatpush1.xpose.msra.mxu0 0.0
    %341 = vmatprep.subr.mxu0 0.0
    %342 = vmatpush1.xpose.msra.mxu0 0.0
    %343 = vmatprep.subr.mxu0 0.0
    %344 = vmatpush1.xpose.msra.mxu0 0.0
    %345 = vmatprep.subr.mxu0 0.0
    %346 = vmatpush1.xpose.msra.mxu0 0.0
    %347 = vmatprep.subr.mxu0 0.0
    %348 = vmatpush1.xpose.msra.mxu0 0.0
    %349 = vmatprep.subr.mxu0 0.0
    %350 = vmatpush1.xpose.msra.mxu0 0.0
    %351 = vmatprep.subr.mxu0 0.0
    %352 = vmatpush1.xpose.msra.mxu0 0.0
    %353 = vmatprep.subr.mxu0 0.0
    %354 = vmatpush1.xpose.msra.mxu0 0.0
    %355 = vmatprep.subr.mxu0 0.0
    %356 = vmatpush1.xpose.msra.mxu0 0.0
    %357 = vmatprep.subr.mxu0 0.0
    %358 = vmatpush1.xpose.msra.mxu0 0.0
    %359 = vmatprep.subr.mxu0 0.0
    %360 = vmatpush1.xpose.msra.mxu0 0.0
    %361 = vmatprep.subr.mxu0 0.0
    %362 = vmatpush1.xpose.msra.mxu0 0.0
    %363 = vmatprep.subr.mxu0 0.0
    %364 = vmatpush1.xpose.msra.mxu0 0.0
    %365 = vmatprep.subr.mxu0 0.0
    %366 = vmatpush1.xpose.msra.mxu0 0.0
    %367 = vmatprep.subr.mxu0 0.0
    %368 = vmatpush1.xpose.msra.mxu0 0.0
    %369 = vmatprep.subr.mxu0 0.0
    %370 = vmatpush1.xpose.msra.mxu0 0.0
    %371 = vmatprep.subr.mxu0 0.0
    %372 = vmatpush1.xpose.msra.mxu0 0.0
    %373 = vmatprep.subr.mxu0 0.0
    %374 = vmatpush1.xpose.msra.mxu0 0.0
    %375 = vmatprep.subr.mxu0 0.0
    %376 = vmatpush1.xpose.msra.mxu0 0.0
    %377 = vmatprep.subr.mxu0 0.0
    %378 = vmatpush1.xpose.msra.mxu0 0.0
    %379 = vmatprep.subr.mxu0 0.0
    %380 = vmatpush1.xpose.msra.mxu0 0.0
    %381 = vmatprep.subr.mxu0 0.0
    %382 = vmatpush1.xpose.msra.mxu0 0.0
    %383 = vmatprep.subr.mxu0 0.0
    %384 = vmatpush1.xpose.msra.mxu0 0.0
    %385 = vmatprep.subr.mxu0 0.0
    %386 = vmatpush1.xpose.msra.mxu0 0.0
    %387 = vmatprep.mubr.f32.mxu0 0.0
    %v388 = vand.u32 %v55, 4294901760
    %v389 = vsub.f32 %v55, %v388
    %390 = vmatmul.mubr.f32.gmra.mrb[0].mxu0 %v389
    %v391 = vpop.f32.mrb[0].mxu0
    %v392 = vadd.f32 %v288, %v391
    %v393 = vpop.f32.mrb[0].mxu0
    %394 = vmatprep.mubr.f32.mxu0 0.0
    %v395 = vand.u32 %v58, 4294901760
    %v396 = vsub.f32 %v58, %v395
    %397 = vmatmul.mubr.f32.gmra.mrb[0].mxu0 %v396
    %v398 = vpop.f32.mrb[0].mxu0
    %v399 = vadd.f32 %v294, %v398
    %v400 = vpop.f32.mrb[0].mxu0
    %401 = vmatprep.mubr.f32.mxu0 0.0
    %v402 = vand.u32 %v61, 4294901760
    %v403 = vsub.f32 %v61, %v402
    %404 = vmatmul.mubr.f32.gmra.mrb[0].mxu0 %v403
    %v405 = vpop.f32.mrb[0].mxu0
    %v406 = vadd.f32 %v300, %v405
    %v407 = vpop.f32.mrb[0].mxu0
    %408 = vmatprep.mubr.f32.mxu0 0.0
    %v409 = vand.u32 %v64, 4294901760
    %v410 = vsub.f32 %v64, %v409
    %411 = vmatmul.mubr.f32.gmra.mrb[0].mxu0 %v410
    %v412 = vpop.f32.mrb[0].mxu0
    %v413 = vadd.f32 %v306, %v412
    %v414 = vpop.f32.mrb[0].mxu0
    %415 = vmatprep.mubr.f32.mxu0 0.0
    %v416 = vand.u32 %v67, 4294901760
    %v417 = vsub.f32 %v67, %v416
    %418 = vmatmul.mubr.f32.gmra.mrb[0].mxu0 %v417
    %v419 = vpop.f32.mrb[0].mxu0
    %v420 = vadd.f32 %v312, %v419
    %v421 = vpop.f32.mrb[0].mxu0
    %422 = vdwg.mxu0
    %423 = vmatprep.subr.mxu0 0.0
    %v424 = vand.u32 %v70, 4294901760
    %425 = vmatpush1.xpose.msra.mxu0 %v424
    %426 = vmatprep.subr.mxu0 0.0
    %v427 = vand.u32 %v73, 4294901760
    %428 = vmatpush1.xpose.msra.mxu0 %v427
    %429 = vmatprep.subr.mxu0 0.0
    %v430 = vand.u32 %v76, 4294901760
    %431 = vmatpush1.xpose.msra.mxu0 %v430
    %432 = vmatprep.subr.mxu0 0.0
    %v433 = vand.u32 %v79, 4294901760
    %434 = vmatpush1.xpose.msra.mxu0 %v433
    %435 = vmatprep.subr.mxu0 0.0
    %436 = vmatpush1.xpose.msra.mxu0 0.0
    %437 = vmatprep.subr.mxu0 0.0
    %438 = vmatpush1.xpose.msra.mxu0 0.0
    %439 = vmatprep.subr.mxu0 0.0
    %440 = vmatpush1.xpose.msra.mxu0 0.0
    %441 = vmatprep.subr.mxu0 0.0
    %442 = vmatpush1.xpose.msra.mxu0 0.0
    %443 = vmatprep.subr.mxu0 0.0
    %444 = vmatpush1.xpose.msra.mxu0 0.0
    %445 = vmatprep.subr.mxu0 0.0
    %446 = vmatpush1.xpose.msra.mxu0 0.0
    %447 = vmatprep.subr.mxu0 0.0
    %448 = vmatpush1.xpose.msra.mxu0 0.0
    %449 = vmatprep.subr.mxu0 0.0
    %450 = vmatpush1.xpose.msra.mxu0 0.0
    %451 = vmatprep.subr.mxu0 0.0
    %452 = vmatpush1.xpose.msra.mxu0 0.0
    %453 = vmatprep.subr.mxu0 0.0
    %454 = vmatpush1.xpose.msra.mxu0 0.0
    %455 = vmatprep.subr.mxu0 0.0
    %456 = vmatpush1.xpose.msra.mxu0 0.0
    %457 = vmatprep.subr.mxu0 0.0
    %458 = vmatpush1.xpose.msra.mxu0 0.0
    %459 = vmatprep.subr.mxu0 0.0
    %460 = vmatpush1.xpose.msra.mxu0 0.0
    %461 = vmatprep.subr.mxu0 0.0
    %462 = vmatpush1.xpose.msra.mxu0 0.0
    %463 = vmatprep.subr.mxu0 0.0
    %464 = vmatpush1.xpose.msra.mxu0 0.0
    %465 = vmatprep.subr.mxu0 0.0
    %466 = vmatpush1.xpose.msra.mxu0 0.0
    %467 = vmatprep.subr.mxu0 0.0
    %468 = vmatpush1.xpose.msra.mxu0 0.0
    %469 = vmatprep.subr.mxu0 0.0
    %470 = vmatpush1.xpose.msra.mxu0 0.0
    %471 = vmatprep.subr.mxu0 0.0
    %472 = vmatpush1.xpose.msra.mxu0 0.0
    %473 = vmatprep.subr.mxu0 0.0
    %474 = vmatpush1.xpose.msra.mxu0 0.0
    %475 = vmatprep.subr.mxu0 0.0
    %476 = vmatpush1.xpose.msra.mxu0 0.0
    %477 = vmatprep.subr.mxu0 0.0
    %478 = vmatpush1.xpose.msra.mxu0 0.0
    %479 = vmatprep.subr.mxu0 0.0
    %480 = vmatpush1.xpose.msra.mxu0 0.0
    %481 = vmatprep.subr.mxu0 0.0
    %482 = vmatpush1.xpose.msra.mxu0 0.0
    %483 = vmatprep.subr.mxu0 0.0
    %484 = vmatpush1.xpose.msra.mxu0 0.0
    %485 = vmatprep.subr.mxu0 0.0
    %486 = vmatpush1.xpose.msra.mxu0 0.0
    %487 = vmatprep.subr.mxu0 0.0
    %488 = vmatpush1.xpose.msra.mxu0 0.0
    %489 = vmatprep.subr.mxu0 0.0
    %490 = vmatpush1.xpose.msra.mxu0 0.0
    %491 = vmatprep.mubr.f32.mxu0 0.0
    %v492 = vand.u32 %v55, 4294901760
    %v493 = vsub.f32 %v55, %v492
    %v494 = vand.u32 %v493, 4294901760
    %495 = vmatmul.mubr.f32.gmra.mrb[0].mxu0 %v494
    %v496 = vpop.f32.mrb[0].mxu0
    %v497 = vadd.f32 %v392, %v496
    %v498 = vpop.f32.mrb[0].mxu0
    %499 = vmatprep.mubr.f32.mxu0 0.0
    %v500 = vand.u32 %v58, 4294901760
    %v501 = vsub.f32 %v58, %v500
    %v502 = vand.u32 %v501, 4294901760
    %503 = vmatmul.mubr.f32.gmra.mrb[0].mxu0 %v502
    %v504 = vpop.f32.mrb[0].mxu0
    %v505 = vadd.f32 %v399, %v504
    %v506 = vpop.f32.mrb[0].mxu0
    %507 = vmatprep.mubr.f32.mxu0 0.0
    %v508 = vand.u32 %v61, 4294901760
    %v509 = vsub.f32 %v61, %v508
    %v510 = vand.u32 %v509, 4294901760
    %511 = vmatmul.mubr.f32.gmra.mrb[0].mxu0 %v510
    %v512 = vpop.f32.mrb[0].mxu0
    %v513 = vadd.f32 %v406, %v512
    %v514 = vpop.f32.mrb[0].mxu0
    %515 = vmatprep.mubr.f32.mxu0 0.0
    %v516 = vand.u32 %v64, 4294901760
    %v517 = vsub.f32 %v64, %v516
    %v518 = vand.u32 %v517, 4294901760
    %519 = vmatmul.mubr.f32.gmra.mrb[0].mxu0 %v518
    %v520 = vpop.f32.mrb[0].mxu0
    %v521 = vadd.f32 %v413, %v520
    %v522 = vpop.f32.mrb[0].mxu0
    %523 = vmatprep.mubr.f32.mxu0 0.0
    %v524 = vand.u32 %v67, 4294901760
    %v525 = vsub.f32 %v67, %v524
    %v526 = vand.u32 %v525, 4294901760
    %527 = vmatmul.mubr.f32.gmra.mrb[0].mxu0 %v526
    %v528 = vpop.f32.mrb[0].mxu0
    %v529 = vadd.f32 %v420, %v528
    %v530 = vpop.f32.mrb[0].mxu0
    %531 = vdwg.mxu0
    %532 = vmatprep.subr.mxu0 0.0
    %v533 = vand.u32 %v70, 4294901760
    %v534 = vsub.f32 %v70, %v533
    %v535 = vand.u32 %v534, 4294901760
    %536 = vmatpush1.xpose.msra.mxu0 %v535
    %537 = vmatprep.subr.mxu0 0.0
    %v538 = vand.u32 %v73, 4294901760
    %v539 = vsub.f32 %v73, %v538
    %v540 = vand.u32 %v539, 4294901760
    %541 = vmatpush1.xpose.msra.mxu0 %v540
    %542 = vmatprep.subr.mxu0 0.0
    %v543 = vand.u32 %v76, 4294901760
    %v544 = vsub.f32 %v76, %v543
    %v545 = vand.u32 %v544, 4294901760
    %546 = vmatpush1.xpose.msra.mxu0 %v545
    %547 = vmatprep.subr.mxu0 0.0
    %v548 = vand.u32 %v79, 4294901760
    %v549 = vsub.f32 %v79, %v548
    %v550 = vand.u32 %v549, 4294901760
    %551 = vmatpush1.xpose.msra.mxu0 %v550
    %552 = vmatprep.subr.mxu0 0.0
    %553 = vmatpush1.xpose.msra.mxu0 0.0
    %554 = vmatprep.subr.mxu0 0.0
    %555 = vmatpush1.xpose.msra.mxu0 0.0
    %556 = vmatprep.subr.mxu0 0.0
    %557 = vmatpush1.xpose.msra.mxu0 0.0
    %558 = vmatprep.subr.mxu0 0.0
    %559 = vmatpush1.xpose.msra.mxu0 0.0
    %560 = vmatprep.subr.mxu0 0.0
    %561 = vmatpush1.xpose.msra.mxu0 0.0
    %562 = vmatprep.subr.mxu0 0.0
    %563 = vmatpush1.xpose.msra.mxu0 0.0
    %564 = vmatprep.subr.mxu0 0.0
    %565 = vmatpush1.xpose.msra.mxu0 0.0
    %566 = vmatprep.subr.mxu0 0.0
    %567 = vmatpush1.xpose.msra.mxu0 0.0
    %568 = vmatprep.subr.mxu0 0.0
    %569 = vmatpush1.xpose.msra.mxu0 0.0
    %570 = vmatprep.subr.mxu0 0.0
    %571 = vmatpush1.xpose.msra.mxu0 0.0
    %572 = vmatprep.subr.mxu0 0.0
    %573 = vmatpush1.xpose.msra.mxu0 0.0
    %574 = vmatprep.subr.mxu0 0.0
    %575 = vmatpush1.xpose.msra.mxu0 0.0
    %576 = vmatprep.subr.mxu0 0.0
    %577 = vmatpush1.xpose.msra.mxu0 0.0
    %578 = vmatprep.subr.mxu0 0.0
    %579 = vmatpush1.xpose.msra.mxu0 0.0
    %580 = vmatprep.subr.mxu0 0.0
    %581 = vmatpush1.xpose.msra.mxu0 0.0
    %582 = vmatprep.subr.mxu0 0.0
    %583 = vmatpush1.xpose.msra.mxu0 0.0
    %584 = vmatprep.subr.mxu0 0.0
    %585 = vmatpush1.xpose.msra.mxu0 0.0
    %586 = vmatprep.subr.mxu0 0.0
    %587 = vmatpush1.xpose.msra.mxu0 0.0
    %588 = vmatprep.subr.mxu0 0.0
    %589 = vmatpush1.xpose.msra.mxu0 0.0
    %590 = vmatprep.subr.mxu0 0.0
    %591 = vmatpush1.xpose.msra.mxu0 0.0
    %592 = vmatprep.subr.mxu0 0.0
    %593 = vmatpush1.xpose.msra.mxu0 0.0
    %594 = vmatprep.subr.mxu0 0.0
    %595 = vmatpush1.xpose.msra.mxu0 0.0
    %596 = vmatprep.subr.mxu0 0.0
    %597 = vmatpush1.xpose.msra.mxu0 0.0
    %598 = vmatprep.subr.mxu0 0.0
    %599 = vmatpush1.xpose.msra.mxu0 0.0
    %600 = vmatprep.subr.mxu0 0.0
    %601 = vmatpush1.xpose.msra.mxu0 0.0
    %602 = vmatprep.subr.mxu0 0.0
    %603 = vmatpush1.xpose.msra.mxu0 0.0
    %604 = vmatprep.subr.mxu0 0.0
    %605 = vmatpush1.xpose.msra.mxu0 0.0
    %606 = vmatprep.subr.mxu0 0.0
    %607 = vmatpush1.xpose.msra.mxu0 0.0
    %608 = vmatprep.mubr.f32.mxu0 0.0
    %v609 = vand.u32 %v55, 4294901760
    %610 = vmatmul.mubr.f32.gmra.mrb[0].mxu0 %v609
    %v611 = vpop.f32.mrb[0].mxu0
    %v612 = vadd.f32 %v497, %v611
    %v613 = vpop.f32.mrb[0].mxu0
    %614 = vmatprep.mubr.f32.mxu0 0.0
    %v615 = vand.u32 %v58, 4294901760
    %616 = vmatmul.mubr.f32.gmra.mrb[0].mxu0 %v615
    %v617 = vpop.f32.mrb[0].mxu0
    %v618 = vadd.f32 %v505, %v617
    %v619 = vpop.f32.mrb[0].mxu0
    %620 = vmatprep.mubr.f32.mxu0 0.0
    %v621 = vand.u32 %v61, 4294901760
    %622 = vmatmul.mubr.f32.gmra.mrb[0].mxu0 %v621
    %v623 = vpop.f32.mrb[0].mxu0
    %v624 = vadd.f32 %v513, %v623
    %v625 = vpop.f32.mrb[0].mxu0
    %626 = vmatprep.mubr.f32.mxu0 0.0
    %v627 = vand.u32 %v64, 4294901760
    %628 = vmatmul.mubr.f32.gmra.mrb[0].mxu0 %v627
    %v629 = vpop.f32.mrb[0].mxu0
    %v630 = vadd.f32 %v521, %v629
    %v631 = vpop.f32.mrb[0].mxu0
    %632 = vmatprep.mubr.f32.mxu0 0.0
    %v633 = vand.u32 %v67, 4294901760
    %634 = vmatmul.mubr.f32.gmra.mrb[0].mxu0 %v633
    %v635 = vpop.f32.mrb[0].mxu0
    %v636 = vadd.f32 %v529, %v635
    %v637 = vpop.f32.mrb[0].mxu0
    %638 = vdwg.mxu0
    %639 = vmatprep.subr.mxu0 0.0
    %v640 = vand.u32 %v70, 4294901760
    %641 = vmatpush1.xpose.msra.mxu0 %v640
    %642 = vmatprep.subr.mxu0 0.0
    %v643 = vand.u32 %v73, 4294901760
    %644 = vmatpush1.xpose.msra.mxu0 %v643
    %645 = vmatprep.subr.mxu0 0.0
    %v646 = vand.u32 %v76, 4294901760
    %647 = vmatpush1.xpose.msra.mxu0 %v646
    %648 = vmatprep.subr.mxu0 0.0
    %v649 = vand.u32 %v79, 4294901760
    %650 = vmatpush1.xpose.msra.mxu0 %v649
    %651 = vmatprep.subr.mxu0 0.0
    %652 = vmatpush1.xpose.msra.mxu0 0.0
    %653 = vmatprep.subr.mxu0 0.0
    %654 = vmatpush1.xpose.msra.mxu0 0.0
    %655 = vmatprep.subr.mxu0 0.0
    %656 = vmatpush1.xpose.msra.mxu0 0.0
    %657 = vmatprep.subr.mxu0 0.0
    %658 = vmatpush1.xpose.msra.mxu0 0.0
    %659 = vmatprep.subr.mxu0 0.0
    %660 = vmatpush1.xpose.msra.mxu0 0.0
    %661 = vmatprep.subr.mxu0 0.0
    %662 = vmatpush1.xpose.msra.mxu0 0.0
    %663 = vmatprep.subr.mxu0 0.0
    %664 = vmatpush1.xpose.msra.mxu0 0.0
    %665 = vmatprep.subr.mxu0 0.0
    %666 = vmatpush1.xpose.msra.mxu0 0.0
    %667 = vmatprep.subr.mxu0 0.0
    %668 = vmatpush1.xpose.msra.mxu0 0.0
    %669 = vmatprep.subr.mxu0 0.0
    %670 = vmatpush1.xpose.msra.mxu0 0.0
    %671 = vmatprep.subr.mxu0 0.0
    %672 = vmatpush1.xpose.msra.mxu0 0.0
    %673 = vmatprep.subr.mxu0 0.0
    %674 = vmatpush1.xpose.msra.mxu0 0.0
    %675 = vmatprep.subr.mxu0 0.0
    %676 = vmatpush1.xpose.msra.mxu0 0.0
    %677 = vmatprep.subr.mxu0 0.0
    %678 = vmatpush1.xpose.msra.mxu0 0.0
    %679 = vmatprep.subr.mxu0 0.0
    %680 = vmatpush1.xpose.msra.mxu0 0.0
    %681 = vmatprep.subr.mxu0 0.0
    %682 = vmatpush1.xpose.msra.mxu0 0.0
    %683 = vmatprep.subr.mxu0 0.0
    %684 = vmatpush1.xpose.msra.mxu0 0.0
    %685 = vmatprep.subr.mxu0 0.0
    %686 = vmatpush1.xpose.msra.mxu0 0.0
    %687 = vmatprep.subr.mxu0 0.0
    %688 = vmatpush1.xpose.msra.mxu0 0.0
    %689 = vmatprep.subr.mxu0 0.0
    %690 = vmatpush1.xpose.msra.mxu0 0.0
    %691 = vmatprep.subr.mxu0 0.0
    %692 = vmatpush1.xpose.msra.mxu0 0.0
    %693 = vmatprep.subr.mxu0 0.0
    %694 = vmatpush1.xpose.msra.mxu0 0.0
    %695 = vmatprep.subr.mxu0 0.0
    %696 = vmatpush1.xpose.msra.mxu0 0.0
    %697 = vmatprep.subr.mxu0 0.0
    %698 = vmatpush1.xpose.msra.mxu0 0.0
    %699 = vmatprep.subr.mxu0 0.0
    %700 = vmatpush1.xpose.msra.mxu0 0.0
    %701 = vmatprep.subr.mxu0 0.0
    %702 = vmatpush1.xpose.msra.mxu0 0.0
    %703 = vmatprep.subr.mxu0 0.0
    %704 = vmatpush1.xpose.msra.mxu0 0.0
    %705 = vmatprep.subr.mxu0 0.0
    %706 = vmatpush1.xpose.msra.mxu0 0.0
    %707 = vmatprep.mubr.f32.mxu0 0.0
    %v708 = vand.u32 %v55, 4294901760
    %709 = vmatmul.mubr.f32.gmra.mrb[0].mxu0 %v708
    %v710 = vpop.f32.mrb[0].mxu0
    %v711 = vadd.f32 %v612, %v710
    %v712 = vpop.f32.mrb[0].mxu0
    %713 = vmatprep.mubr.f32.mxu0 0.0
    %v714 = vand.u32 %v58, 4294901760
    %715 = vmatmul.mubr.f32.gmra.mrb[0].mxu0 %v714
    %v716 = vpop.f32.mrb[0].mxu0
    %v717 = vadd.f32 %v618, %v716
    %v718 = vpop.f32.mrb[0].mxu0
    %719 = vmatprep.mubr.f32.mxu0 0.0
    %v720 = vand.u32 %v61, 4294901760
    %721 = vmatmul.mubr.f32.gmra.mrb[0].mxu0 %v720
    %v722 = vpop.f32.mrb[0].mxu0
    %v723 = vadd.f32 %v624, %v722
    %v724 = vpop.f32.mrb[0].mxu0
    %725 = vmatprep.mubr.f32.mxu0 0.0
    %v726 = vand.u32 %v64, 4294901760
    %727 = vmatmul.mubr.f32.gmra.mrb[0].mxu0 %v726
    %v728 = vpop.f32.mrb[0].mxu0
    %v729 = vadd.f32 %v630, %v728
    %v730 = vpop.f32.mrb[0].mxu0
    %731 = vmatprep.mubr.f32.mxu0 0.0
    %v732 = vand.u32 %v67, 4294901760
    %733 = vmatmul.mubr.f32.gmra.mrb[0].mxu0 %v732
    %v734 = vpop.f32.mrb[0].mxu0
    %v735 = vadd.f32 %v636, %v734
    %v736 = vpop.f32.mrb[0].mxu0
    %737 = vdwg.mxu0
    %v739 = vlaneseq
    %v740 = vshrl.u32 %v739, 7
    %v741 = vsub.s32 0, %v740
    %v742 = vrot.slane %v52, %v741
    %v744 = vadd.f32 %v711, %v742
    %v745 = vand.u32 2147483647, %v744
    %vm746 = vcmp.le.f32.partialorder %v745, 0.7853982
    %vm747 = vcmp.lt.s32.totalorder %v744, 0
    %v748 = vand.u32 %v744, 2139095040
    %v749 = vshrl.u32 %v748, 23
    %v750 = vsub.s32 %v749, 127
    %v751 = vand.u32 2147483647, %v744
    %v752 = vand.u32 %v751, 8388607
    %v753 = vor.u32 %v752, 8388608
    %v754 = vsub.s32 0, %v753
    %v755 = vadd.s32 %v750, 1
    %vm756 = vcmp.gt.s32.totalorder %v755, 0
    %v757 = vsel %vm756, %v755, 0
    %v758 = vshrl.u32 %v757, 5
    %v759 = vand.u32 %v757, 31
    %v760 = vsub.s32 32, %v759
    %v761 = vshrl.u32 683565275, %v760
    %v762 = vshll.u32 683565275, %v759
    %v763 = vshrl.u32 2475754826, %v760
    %v764 = vor.u32 %v762, %v763
    %v765 = vshll.u32 2475754826, %v759
    %v766 = vshrl.u32 2131351028, %v760
    %v767 = vor.u32 %v765, %v766
    %v768 = vshll.u32 2131351028, %v759
    %v769 = vshrl.u32 2102212464, %v760
    %v770 = vor.u32 %v768, %v769
    %v771 = vshll.u32 2102212464, %v759
    %v772 = vshrl.u32 920167782, %v760
    %v773 = vor.u32 %v771, %v772
    %v774 = vshll.u32 920167782, %v759
    %v775 = vshrl.u32 1326507024, %v760
    %v776 = vor.u32 %v774, %v775
    %vm777 = vcmp.lt.s32.totalorder %v758, 1
    %vm778 = vcmp.lt.s32.totalorder %v758, 2
    %vm779 = vcmp.lt.s32.totalorder %v758, 3
    %vm780 = vcmp.lt.s32.totalorder %v758, 4
    %v781 = vsel %vm777, %v761, %v764
    %v782 = vsel %vm780, %v770, 2102212464
    %v783 = vsel %vm779, %v767, %v782
    %v784 = vsel %vm778, %v781, %v783
    %v785 = vsel %vm777, %v764, %v767
    %v786 = vsel %vm780, %v773, 920167782
    %v787 = vsel %vm779, %v770, %v786
    %v788 = vsel %vm778, %v785, %v787
    %v789 = vsel %vm777, %v767, %v770
    %v790 = vsel %vm780, %v776, 1326507024
    %v791 = vsel %vm779, %v773, %v790
    %v792 = vsel %vm778, %v789, %v791
    %v793 = vshll.u32 %v753, 8
    %v794 = vmul.u32.u64.compose %v793, %v792
    %v795 = vextract.low.u32 %v794
    %v796 = vextract.high.u32 %v794
    %v797 = vmul.u32.u64.compose %v793, %v788
    %v798 = vextract.low.u32 %v797
    %v799 = vextract.high.u32 %v797
    %v800 = vmul.u32 %v793, %v784
    %v801 = vadd.s32 %v796, %v798
    %vm802 = vc.u32 %v796, %v798
    %v803 = vadd.s32 %v799, 1
    %v804 = vsel %vm802, %v803, %v799
    %v805 = vadd.s32 %v800, %v804
    %v806 = vadd.s32 %v805, 536870912
    %v807 = vshrl.u32 %v806, 30
    %v808 = vshll.u32 %v807, 30
    %v809 = vsub.s32 %v805, %v808
    %vm810 = vcmp.lt.s32.totalorder %v809, 0
    %v811 = vsub.s32 0, %v809
    %v812 = vsel %vm810, %v811, %v809
    %v813 = vclz %v812
    %v814 = vsub.s32 %v813, 2
    %vm815 = vcmp.gt.s32.totalorder 0, %v814
    %v816 = vsel %vm815, 0, %v814
    %v817 = vsub.s32 32, %v816
    %v818 = vshll.u32 %v809, %v816
    %v819 = vshrl.u32 %v801, %v817
    %v820 = vor.u32 %v818, %v819
    %v821 = vsub.s32 4294967266, %v816
    %v822 = vadd.s32 %v821, 127
    %v823 = vshll.u32 %v822, 23
    %v824 = vor.u32 4788187, %v823
    %v825 = vand.u32 2147483647, %v824
    %v827 = vcvt.s32.f32 %v820
    %v828 = vmul.f32 %v827, %v825
    %v829 = vxor.u32 %v828, 2147483648
    %v830 = vsel %vm747, %v829, %v828
    %v831 = vsub.s32 4, %v807
    %v832 = vsel %vm747, %v831, %v807
    %v833 = vsel %vm746, %v744, %v830
    %v834 = vsel %vm746, 0, %v832
    %v835 = vcosq.f32.pop %v833
    %v836 = vsinq.f32.pop %v833
    %vm837 = vweird.f32 %v744
    %v838 = vadd.s32 %v834, 3
    %v839 = vand.u32 %v838, 3
    %vm840 = vcmp.lt.s32.totalorder %v839, 2
    %vm841 = vcmp.eq.s32.totalorder %v839, 0
    %v842 = vxor.u32 %v836, 2147483648
    %v843 = vsel %vm841, %v835, %v842
    %vm844 = vcmp.eq.s32.totalorder %v839, 2
    %v845 = vxor.u32 %v835, 2147483648
    %v846 = vsel %vm844, %v845, %v836
    %v847 = vsel %vm840, %v843, %v846
    %v848 = vsel %vm837, nan, %v847
    %v849 = vand.u32 2147483647, %v744
    %vm850 = vcmp.le.f32.partialorder %v849, 0.7853982
    %vm851 = vcmp.lt.s32.totalorder %v744, 0
    %v852 = vand.u32 %v744, 2139095040
    %v853 = vshrl.u32 %v852, 23
    %v854 = vsub.s32 %v853, 127
    %v855 = vand.u32 2147483647, %v744
    %v856 = vand.u32 %v855, 8388607
    %v857 = vor.u32 %v856, 8388608
    %v858 = vsub.s32 0, %v857
    %v859 = vadd.s32 %v854, 1
    %vm860 = vcmp.gt.s32.totalorder %v859, 0
    %v861 = vsel %vm860, %v859, 0
    %v862 = vshrl.u32 %v861, 5
    %v863 = vand.u32 %v861, 31
    %v864 = vsub.s32 32, %v863
    %v865 = vshrl.u32 683565275, %v864
    %v866 = vshll.u32 683565275, %v863
    %v867 = vshrl.u32 2475754826, %v864
    %v868 = vor.u32 %v866, %v867
    %v869 = vshll.u32 2475754826, %v863
    %v870 = vshrl.u32 2131351028, %v864
    %v871 = vor.u32 %v869, %v870
    %v872 = vshll.u32 2131351028, %v863
    %v873 = vshrl.u32 2102212464, %v864
    %v874 = vor.u32 %v872, %v873
    %v875 = vshll.u32 2102212464, %v863
    %v876 = vshrl.u32 920167782, %v864
    %v877 = vor.u32 %v875, %v876
    %v878 = vshll.u32 920167782, %v863
    %v879 = vshrl.u32 1326507024, %v864
    %v880 = vor.u32 %v878, %v879
    %vm881 = vcmp.lt.s32.totalorder %v862, 1
    %vm882 = vcmp.lt.s32.totalorder %v862, 2
    %vm883 = vcmp.lt.s32.totalorder %v862, 3
    %vm884 = vcmp.lt.s32.totalorder %v862, 4
    %v885 = vsel %vm881, %v865, %v868
    %v886 = vsel %vm884, %v874, 2102212464
    %v887 = vsel %vm883, %v871, %v886
    %v888 = vsel %vm882, %v885, %v887
    %v889 = vsel %vm881, %v868, %v871
    %v890 = vsel %vm884, %v877, 920167782
    %v891 = vsel %vm883, %v874, %v890
    %v892 = vsel %vm882, %v889, %v891
    %v893 = vsel %vm881, %v871, %v874
    %v894 = vsel %vm884, %v880, 1326507024
    %v895 = vsel %vm883, %v877, %v894
    %v896 = vsel %vm882, %v893, %v895
    %v897 = vshll.u32 %v857, 8
    %v898 = vmul.u32.u64.compose %v897, %v896
    %v899 = vextract.low.u32 %v898
    %v900 = vextract.high.u32 %v898
    %v901 = vmul.u32.u64.compose %v897, %v892
    %v902 = vextract.low.u32 %v901
    %v903 = vextract.high.u32 %v901
    %v904 = vmul.u32 %v897, %v888
    %v905 = vadd.s32 %v900, %v902
    %vm906 = vc.u32 %v900, %v902
    %v907 = vadd.s32 %v903, 1
    %v908 = vsel %vm906, %v907, %v903
    %v909 = vadd.s32 %v904, %v908
    %v910 = vadd.s32 %v909, 536870912
    %v911 = vshrl.u32 %v910, 30
    %v912 = vshll.u32 %v911, 30
    %v913 = vsub.s32 %v909, %v912
    %vm914 = vcmp.lt.s32.totalorder %v913, 0
    %v915 = vsub.s32 0, %v913
    %v916 = vsel %vm914, %v915, %v913
    %v917 = vclz %v916
    %v918 = vsub.s32 %v917, 2
    %vm919 = vcmp.gt.s32.totalorder 0, %v918
    %v920 = vsel %vm919, 0, %v918
    %v921 = vsub.s32 32, %v920
    %v922 = vshll.u32 %v913, %v920
    %v923 = vshrl.u32 %v905, %v921
    %v924 = vor.u32 %v922, %v923
    %v925 = vsub.s32 4294967266, %v920
    %v926 = vadd.s32 %v925, 127
    %v927 = vshll.u32 %v926, 23
    %v928 = vor.u32 4788187, %v927
    %v929 = vand.u32 2147483647, %v928
    %v931 = vcvt.s32.f32 %v924
    %v932 = vmul.f32 %v931, %v929
    %v933 = vxor.u32 %v932, 2147483648
    %v934 = vsel %vm851, %v933, %v932
    %v935 = vsub.s32 4, %v911
    %v936 = vsel %vm851, %v935, %v911
    %v937 = vsel %vm850, %v744, %v934
    %v938 = vsel %vm850, 0, %v936
    %v939 = vcosq.f32.pop %v937
    %v940 = vsinq.f32.pop %v937
    %vm941 = vweird.f32 %v744
    %v942 = vand.u32 %v938, 3
    %vm943 = vcmp.lt.s32.totalorder %v942, 2
    %vm944 = vcmp.eq.s32.totalorder %v942, 0
    %v945 = vxor.u32 %v940, 2147483648
    %v946 = vsel %vm944, %v939, %v945
    %vm947 = vcmp.eq.s32.totalorder %v942, 2
    %v948 = vxor.u32 %v939, 2147483648
    %v949 = vsel %vm947, %v948, %v940
    %v950 = vsel %vm943, %v946, %v949
    %v951 = vsel %vm941, nan, %v950
    %v952 = vsub.f32 0.0, %v848
    %953 = vst.msk [vmem:[#allocation7] sm:$0xff] %vm53, %v848
    %v954 = vmul.f32 %v951, %v717
    %v955 = vmul.f32 %v951, %v723
    %s956 = scalar_lea.vmem [#allocation7], 8
    %957 = vst.msk [vmem:[%s956] sm:$0xff] %vm53, %v954
    %958 = vst.msk [vmem:[%s956 + $0x8] sm:$0xff] %vm53, %v955
    %v959 = vmul.f32 %v951, %v729
    %v960 = vmul.f32 %v951, %v735
    %v961 = vmul.f32 %v717, %v717
    %v962 = vmul.f32 %v723, %v723
    %v963 = vmul.f32 %v952, %v961
    %v964 = vmul.f32 %v952, %v962
    %v965 = vadd.f32 %v959, %v963
    %v966 = vadd.f32 %v960, %v964
    %s967 = scalar_lea.vmem [#allocation7], 24
    %968 = vst.msk [vmem:[%s967] sm:$0xff] %vm53, %v965
    %969 = vst.msk [vmem:[%s967 + $0x8] sm:$0xff] %vm53, %v966
    %v970 = vld [vmem:[#allocation7] sm:$0xff]
    %v971 = vld [vmem:[#allocation7 + $0x8] sm:$0xff]
    %v972 = vld [vmem:[#allocation7 + $0x10] sm:$0xff]
    %v973 = vld [vmem:[#allocation7 + $0x18] sm:$0xff]
    %v974 = vld [vmem:[#allocation7 + $0x20] sm:$0xff]
    %s975 = scalar_lea.vmem [#allocation5], 32
    %v976 = vld [vmem:[%s975] sm:$0xff]
    %v977 = vld [vmem:[%s975 + $0x8] sm:$0xff]
    %v978 = vld [vmem:[%s975 + $0x10] sm:$0xff]
    %v979 = vld [vmem:[%s975 + $0x18] sm:$0xff]
    %s980 = scalar_lea.vmem %s2, 1
    %v981 = vld [vmem:[%s980] sm:$0x1]
    %v983 = vsel %vm53, %v970, 0
    %v986 = vsel %vm53, %v971, 0
    %v989 = vsel %vm53, %v972, 0
    %v992 = vsel %vm53, %v973, 0
    %v995 = vsel %vm53, %v974, 0
    %v998 = vsel %vm53, %v976, 0
    %v1001 = vsel %vm53, %v977, 0
    %v1004 = vsel %vm53, %v978, 0
    %v1007 = vsel %vm53, %v979, 0
    %1009 = vmatprep.subr.mxu0 0.0
    %v1010 = vand.u32 %v998, 4294901760
    %1011 = vmatpush1.xpose.msra.mxu0 %v1010
    %1012 = vmatprep.subr.mxu0 0.0
    %v1013 = vand.u32 %v1001, 4294901760
    %1014 = vmatpush1.xpose.msra.mxu0 %v1013
    %1015 = vmatprep.subr.mxu0 0.0
    %v1016 = vand.u32 %v1004, 4294901760
    %1017 = vmatpush1.xpose.msra.mxu0 %v1016
    %1018 = vmatprep.subr.mxu0 0.0
    %v1019 = vand.u32 %v1007, 4294901760
    %1020 = vmatpush1.xpose.msra.mxu0 %v1019
    %1021 = vmatprep.subr.mxu0 0.0
    %1022 = vmatpush1.xpose.msra.mxu0 0.0
    %1023 = vmatprep.subr.mxu0 0.0
    %1024 = vmatpush1.xpose.msra.mxu0 0.0
    %1025 = vmatprep.subr.mxu0 0.0
    %1026 = vmatpush1.xpose.msra.mxu0 0.0
    %1027 = vmatprep.subr.mxu0 0.0
    %1028 = vmatpush1.xpose.msra.mxu0 0.0
    %1029 = vmatprep.subr.mxu0 0.0
    %1030 = vmatpush1.xpose.msra.mxu0 0.0
    %1031 = vmatprep.subr.mxu0 0.0
    %1032 = vmatpush1.xpose.msra.mxu0 0.0
    %1033 = vmatprep.subr.mxu0 0.0
    %1034 = vmatpush1.xpose.msra.mxu0 0.0
    %1035 = vmatprep.subr.mxu0 0.0
    %1036 = vmatpush1.xpose.msra.mxu0 0.0
    %1037 = vmatprep.subr.mxu0 0.0
    %1038 = vmatpush1.xpose.msra.mxu0 0.0
    %1039 = vmatprep.subr.mxu0 0.0
    %1040 = vmatpush1.xpose.msra.mxu0 0.0
    %1041 = vmatprep.subr.mxu0 0.0
    %1042 = vmatpush1.xpose.msra.mxu0 0.0
    %1043 = vmatprep.subr.mxu0 0.0
    %1044 = vmatpush1.xpose.msra.mxu0 0.0
    %1045 = vmatprep.subr.mxu0 0.0
    %1046 = vmatpush1.xpose.msra.mxu0 0.0
    %1047 = vmatprep.subr.mxu0 0.0
    %1048 = vmatpush1.xpose.msra.mxu0 0.0
    %1049 = vmatprep.subr.mxu0 0.0
    %1050 = vmatpush1.xpose.msra.mxu0 0.0
    %1051 = vmatprep.subr.mxu0 0.0
    %1052 = vmatpush1.xpose.msra.mxu0 0.0
    %1053 = vmatprep.subr.mxu0 0.0
    %1054 = vmatpush1.xpose.msra.mxu0 0.0
    %1055 = vmatprep.subr.mxu0 0.0
    %1056 = vmatpush1.xpose.msra.mxu0 0.0
    %1057 = vmatprep.subr.mxu0 0.0
    %1058 = vmatpush1.xpose.msra.mxu0 0.0
    %1059 = vmatprep.subr.mxu0 0.0
    %1060 = vmatpush1.xpose.msra.mxu0 0.0
    %1061 = vmatprep.subr.mxu0 0.0
    %1062 = vmatpush1.xpose.msra.mxu0 0.0
    %1063 = vmatprep.subr.mxu0 0.0
    %1064 = vmatpush1.xpose.msra.mxu0 0.0
    %1065 = vmatprep.subr.mxu0 0.0
    %1066 = vmatpush1.xpose.msra.mxu0 0.0
    %1067 = vmatprep.subr.mxu0 0.0
    %1068 = vmatpush1.xpose.msra.mxu0 0.0
    %1069 = vmatprep.subr.mxu0 0.0
    %1070 = vmatpush1.xpose.msra.mxu0 0.0
    %1071 = vmatprep.subr.mxu0 0.0
    %1072 = vmatpush1.xpose.msra.mxu0 0.0
    %1073 = vmatprep.subr.mxu0 0.0
    %1074 = vmatpush1.xpose.msra.mxu0 0.0
    %1075 = vmatprep.subr.mxu0 0.0
    %1076 = vmatpush1.xpose.msra.mxu0 0.0
    %1077 = vmatprep.mubr.f32.mxu0 0.0
    %v1078 = vand.u32 %v983, 4294901760
    %v1079 = vsub.f32 %v983, %v1078
    %v1080 = vand.u32 %v1079, 4294901760
    %v1081 = vsub.f32 %v1079, %v1080
    %v1082 = vand.u32 %v1081, 4294901760
    %1083 = vmatmul.mubr.f32.gmra.mrb[0].mxu0 %v1082
    %v1084 = vpop.f32.mrb[0].mxu0
    %v1085 = vadd.f32 0.0, %v1084
    %v1086 = vpop.f32.mrb[0].mxu0
    %1087 = vmatprep.mubr.f32.mxu0 0.0
    %v1088 = vand.u32 %v986, 4294901760
    %v1089 = vsub.f32 %v986, %v1088
    %v1090 = vand.u32 %v1089, 4294901760
    %v1091 = vsub.f32 %v1089, %v1090
    %v1092 = vand.u32 %v1091, 4294901760
    %1093 = vmatmul.mubr.f32.gmra.mrb[0].mxu0 %v1092
    %v1094 = vpop.f32.mrb[0].mxu0
    %v1095 = vadd.f32 0.0, %v1094
    %v1096 = vpop.f32.mrb[0].mxu0
    %1097 = vmatprep.mubr.f32.mxu0 0.0
    %v1098 = vand.u32 %v989, 4294901760
    %v1099 = vsub.f32 %v989, %v1098
    %v1100 = vand.u32 %v1099, 4294901760
    %v1101 = vsub.f32 %v1099, %v1100
    %v1102 = vand.u32 %v1101, 4294901760
    %1103 = vmatmul.mubr.f32.gmra.mrb[0].mxu0 %v1102
    %v1104 = vpop.f32.mrb[0].mxu0
    %v1105 = vadd.f32 0.0, %v1104
    %v1106 = vpop.f32.mrb[0].mxu0
    %1107 = vmatprep.mubr.f32.mxu0 0.0
    %v1108 = vand.u32 %v992, 4294901760
    %v1109 = vsub.f32 %v992, %v1108
    %v1110 = vand.u32 %v1109, 4294901760
    %v1111 = vsub.f32 %v1109, %v1110
    %v1112 = vand.u32 %v1111, 4294901760
    %1113 = vmatmul.mubr.f32.gmra.mrb[0].mxu0 %v1112
    %v1114 = vpop.f32.mrb[0].mxu0
    %v1115 = vadd.f32 0.0, %v1114
    %v1116 = vpop.f32.mrb[0].mxu0
    %1117 = vmatprep.mubr.f32.mxu0 0.0
    %v1118 = vand.u32 %v995, 4294901760
    %v1119 = vsub.f32 %v995, %v1118
    %v1120 = vand.u32 %v1119, 4294901760
    %v1121 = vsub.f32 %v1119, %v1120
    %v1122 = vand.u32 %v1121, 4294901760
    %1123 = vmatmul.mubr.f32.gmra.mrb[0].mxu0 %v1122
    %v1124 = vpop.f32.mrb[0].mxu0
    %v1125 = vadd.f32 0.0, %v1124
    %v1126 = vpop.f32.mrb[0].mxu0
    %1127 = vdwg.mxu0
    %1128 = vmatprep.subr.mxu0 0.0
    %v1129 = vand.u32 %v998, 4294901760
    %v1130 = vsub.f32 %v998, %v1129
    %v1131 = vand.u32 %v1130, 4294901760
    %v1132 = vsub.f32 %v1130, %v1131
    %v1133 = vand.u32 %v1132, 4294901760
    %1134 = vmatpush1.xpose.msra.mxu0 %v1133
    %1135 = vmatprep.subr.mxu0 0.0
    %v1136 = vand.u32 %v1001, 4294901760
    %v1137 = vsub.f32 %v1001, %v1136
    %v1138 = vand.u32 %v1137, 4294901760
    %v1139 = vsub.f32 %v1137, %v1138
    %v1140 = vand.u32 %v1139, 4294901760
    %1141 = vmatpush1.xpose.msra.mxu0 %v1140
    %1142 = vmatprep.subr.mxu0 0.0
    %v1143 = vand.u32 %v1004, 4294901760
    %v1144 = vsub.f32 %v1004, %v1143
    %v1145 = vand.u32 %v1144, 4294901760
    %v1146 = vsub.f32 %v1144, %v1145
    %v1147 = vand.u32 %v1146, 4294901760
    %1148 = vmatpush1.xpose.msra.mxu0 %v1147
    %1149 = vmatprep.subr.mxu0 0.0
    %v1150 = vand.u32 %v1007, 4294901760
    %v1151 = vsub.f32 %v1007, %v1150
    %v1152 = vand.u32 %v1151, 4294901760
    %v1153 = vsub.f32 %v1151, %v1152
    %v1154 = vand.u32 %v1153, 4294901760
    %1155 = vmatpush1.xpose.msra.mxu0 %v1154
    %1156 = vmatprep.subr.mxu0 0.0
    %1157 = vmatpush1.xpose.msra.mxu0 0.0
    %1158 = vmatprep.subr.mxu0 0.0
    %1159 = vmatpush1.xpose.msra.mxu0 0.0
    %1160 = vmatprep.subr.mxu0 0.0
    %1161 = vmatpush1.xpose.msra.mxu0 0.0
    %1162 = vmatprep.subr.mxu0 0.0
    %1163 = vmatpush1.xpose.msra.mxu0 0.0
    %1164 = vmatprep.subr.mxu0 0.0
    %1165 = vmatpush1.xpose.msra.mxu0 0.0
    %1166 = vmatprep.subr.mxu0 0.0
    %1167 = vmatpush1.xpose.msra.mxu0 0.0
    %1168 = vmatprep.subr.mxu0 0.0
    %1169 = vmatpush1.xpose.msra.mxu0 0.0
    %1170 = vmatprep.subr.mxu0 0.0
    %1171 = vmatpush1.xpose.msra.mxu0 0.0
    %1172 = vmatprep.subr.mxu0 0.0
    %1173 = vmatpush1.xpose.msra.mxu0 0.0
    %1174 = vmatprep.subr.mxu0 0.0
    %1175 = vmatpush1.xpose.msra.mxu0 0.0
    %1176 = vmatprep.subr.mxu0 0.0
    %1177 = vmatpush1.xpose.msra.mxu0 0.0
    %1178 = vmatprep.subr.mxu0 0.0
    %1179 = vmatpush1.xpose.msra.mxu0 0.0
    %1180 = vmatprep.subr.mxu0 0.0
    %1181 = vmatpush1.xpose.msra.mxu0 0.0
    %1182 = vmatprep.subr.mxu0 0.0
    %1183 = vmatpush1.xpose.msra.mxu0 0.0
    %1184 = vmatprep.subr.mxu0 0.0
    %1185 = vmatpush1.xpose.msra.mxu0 0.0
    %1186 = vmatprep.subr.mxu0 0.0
    %1187 = vmatpush1.xpose.msra.mxu0 0.0
    %1188 = vmatprep.subr.mxu0 0.0
    %1189 = vmatpush1.xpose.msra.mxu0 0.0
    %1190 = vmatprep.subr.mxu0 0.0
    %1191 = vmatpush1.xpose.msra.mxu0 0.0
    %1192 = vmatprep.subr.mxu0 0.0
    %1193 = vmatpush1.xpose.msra.mxu0 0.0
    %1194 = vmatprep.subr.mxu0 0.0
    %1195 = vmatpush1.xpose.msra.mxu0 0.0
    %1196 = vmatprep.subr.mxu0 0.0
    %1197 = vmatpush1.xpose.msra.mxu0 0.0
    %1198 = vmatprep.subr.mxu0 0.0
    %1199 = vmatpush1.xpose.msra.mxu0 0.0
    %1200 = vmatprep.subr.mxu0 0.0
    %1201 = vmatpush1.xpose.msra.mxu0 0.0
    %1202 = vmatprep.subr.mxu0 0.0
    %1203 = vmatpush1.xpose.msra.mxu0 0.0
    %1204 = vmatprep.subr.mxu0 0.0
    %1205 = vmatpush1.xpose.msra.mxu0 0.0
    %1206 = vmatprep.subr.mxu0 0.0
    %1207 = vmatpush1.xpose.msra.mxu0 0.0
    %1208 = vmatprep.subr.mxu0 0.0
    %1209 = vmatpush1.xpose.msra.mxu0 0.0
    %1210 = vmatprep.subr.mxu0 0.0
    %1211 = vmatpush1.xpose.msra.mxu0 0.0
    %1212 = vmatprep.mubr.f32.mxu0 0.0
    %v1213 = vand.u32 %v983, 4294901760
    %1214 = vmatmul.mubr.f32.gmra.mrb[0].mxu0 %v1213
    %v1215 = vpop.f32.mrb[0].mxu0
    %v1216 = vadd.f32 %v1085, %v1215
    %v1217 = vpop.f32.mrb[0].mxu0
    %1218 = vmatprep.mubr.f32.mxu0 0.0
    %v1219 = vand.u32 %v986, 4294901760
    %1220 = vmatmul.mubr.f32.gmra.mrb[0].mxu0 %v1219
    %v1221 = vpop.f32.mrb[0].mxu0
    %v1222 = vadd.f32 %v1095, %v1221
    %v1223 = vpop.f32.mrb[0].mxu0
    %1224 = vmatprep.mubr.f32.mxu0 0.0
    %v1225 = vand.u32 %v989, 4294901760
    %1226 = vmatmul.mubr.f32.gmra.mrb[0].mxu0 %v1225
    %v1227 = vpop.f32.mrb[0].mxu0
    %v1228 = vadd.f32 %v1105, %v1227
    %v1229 = vpop.f32.mrb[0].mxu0
    %1230 = vmatprep.mubr.f32.mxu0 0.0
    %v1231 = vand.u32 %v992, 4294901760
    %1232 = vmatmul.mubr.f32.gmra.mrb[0].mxu0 %v1231
    %v1233 = vpop.f32.mrb[0].mxu0
    %v1234 = vadd.f32 %v1115, %v1233
    %v1235 = vpop.f32.mrb[0].mxu0
    %1236 = vmatprep.mubr.f32.mxu0 0.0
    %v1237 = vand.u32 %v995, 4294901760
    %1238 = vmatmul.mubr.f32.gmra.mrb[0].mxu0 %v1237
    %v1239 = vpop.f32.mrb[0].mxu0
    %v1240 = vadd.f32 %v1125, %v1239
    %v1241 = vpop.f32.mrb[0].mxu0
    %1242 = vdwg.mxu0
    %1243 = vmatprep.subr.mxu0 0.0
    %v1244 = vand.u32 %v998, 4294901760
    %v1245 = vsub.f32 %v998, %v1244
    %1246 = vmatpush1.xpose.msra.mxu0 %v1245
    %1247 = vmatprep.subr.mxu0 0.0
    %v1248 = vand.u32 %v1001, 4294901760
    %v1249 = vsub.f32 %v1001, %v1248
    %1250 = vmatpush1.xpose.msra.mxu0 %v1249
    %1251 = vmatprep.subr.mxu0 0.0
    %v1252 = vand.u32 %v1004, 4294901760
    %v1253 = vsub.f32 %v1004, %v1252
    %1254 = vmatpush1.xpose.msra.mxu0 %v1253
    %1255 = vmatprep.subr.mxu0 0.0
    %v1256 = vand.u32 %v1007, 4294901760
    %v1257 = vsub.f32 %v1007, %v1256
    %1258 = vmatpush1.xpose.msra.mxu0 %v1257
    %1259 = vmatprep.subr.mxu0 0.0
    %1260 = vmatpush1.xpose.msra.mxu0 0.0
    %1261 = vmatprep.subr.mxu0 0.0
    %1262 = vmatpush1.xpose.msra.mxu0 0.0
    %1263 = vmatprep.subr.mxu0 0.0
    %1264 = vmatpush1.xpose.msra.mxu0 0.0
    %1265 = vmatprep.subr.mxu0 0.0
    %1266 = vmatpush1.xpose.msra.mxu0 0.0
    %1267 = vmatprep.subr.mxu0 0.0
    %1268 = vmatpush1.xpose.msra.mxu0 0.0
    %1269 = vmatprep.subr.mxu0 0.0
    %1270 = vmatpush1.xpose.msra.mxu0 0.0
    %1271 = vmatprep.subr.mxu0 0.0
    %1272 = vmatpush1.xpose.msra.mxu0 0.0
    %1273 = vmatprep.subr.mxu0 0.0
    %1274 = vmatpush1.xpose.msra.mxu0 0.0
    %1275 = vmatprep.subr.mxu0 0.0
    %1276 = vmatpush1.xpose.msra.mxu0 0.0
    %1277 = vmatprep.subr.mxu0 0.0
    %1278 = vmatpush1.xpose.msra.mxu0 0.0
    %1279 = vmatprep.subr.mxu0 0.0
    %1280 = vmatpush1.xpose.msra.mxu0 0.0
    %1281 = vmatprep.subr.mxu0 0.0
    %1282 = vmatpush1.xpose.msra.mxu0 0.0
    %1283 = vmatprep.subr.mxu0 0.0
    %1284 = vmatpush1.xpose.msra.mxu0 0.0
    %1285 = vmatprep.subr.mxu0 0.0
    %1286 = vmatpush1.xpose.msra.mxu0 0.0
    %1287 = vmatprep.subr.mxu0 0.0
    %1288 = vmatpush1.xpose.msra.mxu0 0.0
    %1289 = vmatprep.subr.mxu0 0.0
    %1290 = vmatpush1.xpose.msra.mxu0 0.0
    %1291 = vmatprep.subr.mxu0 0.0
    %1292 = vmatpush1.xpose.msra.mxu0 0.0
    %1293 = vmatprep.subr.mxu0 0.0
    %1294 = vmatpush1.xpose.msra.mxu0 0.0
    %1295 = vmatprep.subr.mxu0 0.0
    %1296 = vmatpush1.xpose.msra.mxu0 0.0
    %1297 = vmatprep.subr.mxu0 0.0
    %1298 = vmatpush1.xpose.msra.mxu0 0.0
    %1299 = vmatprep.subr.mxu0 0.0
    %1300 = vmatpush1.xpose.msra.mxu0 0.0
    %1301 = vmatprep.subr.mxu0 0.0
    %1302 = vmatpush1.xpose.msra.mxu0 0.0
    %1303 = vmatprep.subr.mxu0 0.0
    %1304 = vmatpush1.xpose.msra.mxu0 0.0
    %1305 = vmatprep.subr.mxu0 0.0
    %1306 = vmatpush1.xpose.msra.mxu0 0.0
    %1307 = vmatprep.subr.mxu0 0.0
    %1308 = vmatpush1.xpose.msra.mxu0 0.0
    %1309 = vmatprep.subr.mxu0 0.0
    %1310 = vmatpush1.xpose.msra.mxu0 0.0
    %1311 = vmatprep.subr.mxu0 0.0
    %1312 = vmatpush1.xpose.msra.mxu0 0.0
    %1313 = vmatprep.subr.mxu0 0.0
    %1314 = vmatpush1.xpose.msra.mxu0 0.0
    %1315 = vmatprep.mubr.f32.mxu0 0.0
    %v1316 = vand.u32 %v983, 4294901760
    %v1317 = vsub.f32 %v983, %v1316
    %1318 = vmatmul.mubr.f32.gmra.mrb[0].mxu0 %v1317
    %v1319 = vpop.f32.mrb[0].mxu0
    %v1320 = vadd.f32 %v1216, %v1319
    %v1321 = vpop.f32.mrb[0].mxu0
    %1322 = vmatprep.mubr.f32.mxu0 0.0
    %v1323 = vand.u32 %v986, 4294901760
    %v1324 = vsub.f32 %v986, %v1323
    %1325 = vmatmul.mubr.f32.gmra.mrb[0].mxu0 %v1324
    %v1326 = vpop.f32.mrb[0].mxu0
    %v1327 = vadd.f32 %v1222, %v1326
    %v1328 = vpop.f32.mrb[0].mxu0
    %1329 = vmatprep.mubr.f32.mxu0 0.0
    %v1330 = vand.u32 %v989, 4294901760
    %v1331 = vsub.f32 %v989, %v1330
    %1332 = vmatmul.mubr.f32.gmra.mrb[0].mxu0 %v1331
    %v1333 = vpop.f32.mrb[0].mxu0
    %v1334 = vadd.f32 %v1228, %v1333
    %v1335 = vpop.f32.mrb[0].mxu0
    %1336 = vmatprep.mubr.f32.mxu0 0.0
    %v1337 = vand.u32 %v992, 4294901760
    %v1338 = vsub.f32 %v992, %v1337
    %1339 = vmatmul.mubr.f32.gmra.mrb[0].mxu0 %v1338
    %v1340 = vpop.f32.mrb[0].mxu0
    %v1341 = vadd.f32 %v1234, %v1340
    %v1342 = vpop.f32.mrb[0].mxu0
    %1343 = vmatprep.mubr.f32.mxu0 0.0
    %v1344 = vand.u32 %v995, 4294901760
    %v1345 = vsub.f32 %v995, %v1344
    %1346 = vmatmul.mubr.f32.gmra.mrb[0].mxu0 %v1345
    %v1347 = vpop.f32.mrb[0].mxu0
    %v1348 = vadd.f32 %v1240, %v1347
    %v1349 = vpop.f32.mrb[0].mxu0
    %1350 = vdwg.mxu0
    %1351 = vmatprep.subr.mxu0 0.0
    %v1352 = vand.u32 %v998, 4294901760
    %1353 = vmatpush1.xpose.msra.mxu0 %v1352
    %1354 = vmatprep.subr.mxu0 0.0
    %v1355 = vand.u32 %v1001, 4294901760
    %1356 = vmatpush1.xpose.msra.mxu0 %v1355
    %1357 = vmatprep.subr.mxu0 0.0
    %v1358 = vand.u32 %v1004, 4294901760
    %1359 = vmatpush1.xpose.msra.mxu0 %v1358
    %1360 = vmatprep.subr.mxu0 0.0
    %v1361 = vand.u32 %v1007, 4294901760
    %1362 = vmatpush1.xpose.msra.mxu0 %v1361
    %1363 = vmatprep.subr.mxu0 0.0
    %1364 = vmatpush1.xpose.msra.mxu0 0.0
    %1365 = vmatprep.subr.mxu0 0.0
    %1366 = vmatpush1.xpose.msra.mxu0 0.0
    %1367 = vmatprep.subr.mxu0 0.0
    %1368 = vmatpush1.xpose.msra.mxu0 0.0
    %1369 = vmatprep.subr.mxu0 0.0
    %1370 = vmatpush1.xpose.msra.mxu0 0.0
    %1371 = vmatprep.subr.mxu0 0.0
    %1372 = vmatpush1.xpose.msra.mxu0 0.0
    %1373 = vmatprep.subr.mxu0 0.0
    %1374 = vmatpush1.xpose.msra.mxu0 0.0
    %1375 = vmatprep.subr.mxu0 0.0
    %1376 = vmatpush1.xpose.msra.mxu0 0.0
    %1377 = vmatprep.subr.mxu0 0.0
    %1378 = vmatpush1.xpose.msra.mxu0 0.0
    %1379 = vmatprep.subr.mxu0 0.0
    %1380 = vmatpush1.xpose.msra.mxu0 0.0
    %1381 = vmatprep.subr.mxu0 0.0
    %1382 = vmatpush1.xpose.msra.mxu0 0.0
    %1383 = vmatprep.subr.mxu0 0.0
    %1384 = vmatpush1.xpose.msra.mxu0 0.0
    %1385 = vmatprep.subr.mxu0 0.0
    %1386 = vmatpush1.xpose.msra.mxu0 0.0
    %1387 = vmatprep.subr.mxu0 0.0
    %1388 = vmatpush1.xpose.msra.mxu0 0.0
    %1389 = vmatprep.subr.mxu0 0.0
    %1390 = vmatpush1.xpose.msra.mxu0 0.0
    %1391 = vmatprep.subr.mxu0 0.0
    %1392 = vmatpush1.xpose.msra.mxu0 0.0
    %1393 = vmatprep.subr.mxu0 0.0
    %1394 = vmatpush1.xpose.msra.mxu0 0.0
    %1395 = vmatprep.subr.mxu0 0.0
    %1396 = vmatpush1.xpose.msra.mxu0 0.0
    %1397 = vmatprep.subr.mxu0 0.0
    %1398 = vmatpush1.xpose.msra.mxu0 0.0
    %1399 = vmatprep.subr.mxu0 0.0
    %1400 = vmatpush1.xpose.msra.mxu0 0.0
    %1401 = vmatprep.subr.mxu0 0.0
    %1402 = vmatpush1.xpose.msra.mxu0 0.0
    %1403 = vmatprep.subr.mxu0 0.0
    %1404 = vmatpush1.xpose.msra.mxu0 0.0
    %1405 = vmatprep.subr.mxu0 0.0
    %1406 = vmatpush1.xpose.msra.mxu0 0.0
    %1407 = vmatprep.subr.mxu0 0.0
    %1408 = vmatpush1.xpose.msra.mxu0 0.0
    %1409 = vmatprep.subr.mxu0 0.0
    %1410 = vmatpush1.xpose.msra.mxu0 0.0
    %1411 = vmatprep.subr.mxu0 0.0
    %1412 = vmatpush1.xpose.msra.mxu0 0.0
    %1413 = vmatprep.subr.mxu0 0.0
    %1414 = vmatpush1.xpose.msra.mxu0 0.0
    %1415 = vmatprep.subr.mxu0 0.0
    %1416 = vmatpush1.xpose.msra.mxu0 0.0
    %1417 = vmatprep.subr.mxu0 0.0
    %1418 = vmatpush1.xpose.msra.mxu0 0.0
    %1419 = vmatprep.mubr.f32.mxu0 0.0
    %v1420 = vand.u32 %v983, 4294901760
    %v1421 = vsub.f32 %v983, %v1420
    %v1422 = vand.u32 %v1421, 4294901760
    %1423 = vmatmul.mubr.f32.gmra.mrb[0].mxu0 %v1422
    %v1424 = vpop.f32.mrb[0].mxu0
    %v1425 = vadd.f32 %v1320, %v1424
    %v1426 = vpop.f32.mrb[0].mxu0
    %1427 = vmatprep.mubr.f32.mxu0 0.0
    %v1428 = vand.u32 %v986, 4294901760
    %v1429 = vsub.f32 %v986, %v1428
    %v1430 = vand.u32 %v1429, 4294901760
    %1431 = vmatmul.mubr.f32.gmra.mrb[0].mxu0 %v1430
    %v1432 = vpop.f32.mrb[0].mxu0
    %v1433 = vadd.f32 %v1327, %v1432
    %v1434 = vpop.f32.mrb[0].mxu0
    %1435 = vmatprep.mubr.f32.mxu0 0.0
    %v1436 = vand.u32 %v989, 4294901760
    %v1437 = vsub.f32 %v989, %v1436
    %v1438 = vand.u32 %v1437, 4294901760
    %1439 = vmatmul.mubr.f32.gmra.mrb[0].mxu0 %v1438
    %v1440 = vpop.f32.mrb[0].mxu0
    %v1441 = vadd.f32 %v1334, %v1440
    %v1442 = vpop.f32.mrb[0].mxu0
    %1443 = vmatprep.mubr.f32.mxu0 0.0
    %v1444 = vand.u32 %v992, 4294901760
    %v1445 = vsub.f32 %v992, %v1444
    %v1446 = vand.u32 %v1445, 4294901760
    %1447 = vmatmul.mubr.f32.gmra.mrb[0].mxu0 %v1446
    %v1448 = vpop.f32.mrb[0].mxu0
    %v1449 = vadd.f32 %v1341, %v1448
    %v1450 = vpop.f32.mrb[0].mxu0
    %1451 = vmatprep.mubr.f32.mxu0 0.0
    %v1452 = vand.u32 %v995, 4294901760
    %v1453 = vsub.f32 %v995, %v1452
    %v1454 = vand.u32 %v1453, 4294901760
    %1455 = vmatmul.mubr.f32.gmra.mrb[0].mxu0 %v1454
    %v1456 = vpop.f32.mrb[0].mxu0
    %v1457 = vadd.f32 %v1348, %v1456
    %v1458 = vpop.f32.mrb[0].mxu0
    %1459 = vdwg.mxu0
    %1460 = vmatprep.subr.mxu0 0.0
    %v1461 = vand.u32 %v998, 4294901760
    %v1462 = vsub.f32 %v998, %v1461
    %v1463 = vand.u32 %v1462, 4294901760
    %1464 = vmatpush1.xpose.msra.mxu0 %v1463
    %1465 = vmatprep.subr.mxu0 0.0
    %v1466 = vand.u32 %v1001, 4294901760
    %v1467 = vsub.f32 %v1001, %v1466
    %v1468 = vand.u32 %v1467, 4294901760
    %1469 = vmatpush1.xpose.msra.mxu0 %v1468
    %1470 = vmatprep.subr.mxu0 0.0
    %v1471 = vand.u32 %v1004, 4294901760
    %v1472 = vsub.f32 %v1004, %v1471
    %v1473 = vand.u32 %v1472, 4294901760
    %1474 = vmatpush1.xpose.msra.mxu0 %v1473
    %1475 = vmatprep.subr.mxu0 0.0
    %v1476 = vand.u32 %v1007, 4294901760
    %v1477 = vsub.f32 %v1007, %v1476
    %v1478 = vand.u32 %v1477, 4294901760
    %1479 = vmatpush1.xpose.msra.mxu0 %v1478
    %1480 = vmatprep.subr.mxu0 0.0
    %1481 = vmatpush1.xpose.msra.mxu0 0.0
    %1482 = vmatprep.subr.mxu0 0.0
    %1483 = vmatpush1.xpose.msra.mxu0 0.0
    %1484 = vmatprep.subr.mxu0 0.0
    %1485 = vmatpush1.xpose.msra.mxu0 0.0
    %1486 = vmatprep.subr.mxu0 0.0
    %1487 = vmatpush1.xpose.msra.mxu0 0.0
    %1488 = vmatprep.subr.mxu0 0.0
    %1489 = vmatpush1.xpose.msra.mxu0 0.0
    %1490 = vmatprep.subr.mxu0 0.0
    %1491 = vmatpush1.xpose.msra.mxu0 0.0
    %1492 = vmatprep.subr.mxu0 0.0
    %1493 = vmatpush1.xpose.msra.mxu0 0.0
    %1494 = vmatprep.subr.mxu0 0.0
    %1495 = vmatpush1.xpose.msra.mxu0 0.0
    %1496 = vmatprep.subr.mxu0 0.0
    %1497 = vmatpush1.xpose.msra.mxu0 0.0
    %1498 = vmatprep.subr.mxu0 0.0
    %1499 = vmatpush1.xpose.msra.mxu0 0.0
    %1500 = vmatprep.subr.mxu0 0.0
    %1501 = vmatpush1.xpose.msra.mxu0 0.0
    %1502 = vmatprep.subr.mxu0 0.0
    %1503 = vmatpush1.xpose.msra.mxu0 0.0
    %1504 = vmatprep.subr.mxu0 0.0
    %1505 = vmatpush1.xpose.msra.mxu0 0.0
    %1506 = vmatprep.subr.mxu0 0.0
    %1507 = vmatpush1.xpose.msra.mxu0 0.0
    %1508 = vmatprep.subr.mxu0 0.0
    %1509 = vmatpush1.xpose.msra.mxu0 0.0
    %1510 = vmatprep.subr.mxu0 0.0
    %1511 = vmatpush1.xpose.msra.mxu0 0.0
    %1512 = vmatprep.subr.mxu0 0.0
    %1513 = vmatpush1.xpose.msra.mxu0 0.0
    %1514 = vmatprep.subr.mxu0 0.0
    %1515 = vmatpush1.xpose.msra.mxu0 0.0
    %1516 = vmatprep.subr.mxu0 0.0
    %1517 = vmatpush1.xpose.msra.mxu0 0.0
    %1518 = vmatprep.subr.mxu0 0.0
    %1519 = vmatpush1.xpose.msra.mxu0 0.0
    %1520 = vmatprep.subr.mxu0 0.0
    %1521 = vmatpush1.xpose.msra.mxu0 0.0
    %1522 = vmatprep.subr.mxu0 0.0
    %1523 = vmatpush1.xpose.msra.mxu0 0.0
    %1524 = vmatprep.subr.mxu0 0.0
    %1525 = vmatpush1.xpose.msra.mxu0 0.0
    %1526 = vmatprep.subr.mxu0 0.0
    %1527 = vmatpush1.xpose.msra.mxu0 0.0
    %1528 = vmatprep.subr.mxu0 0.0
    %1529 = vmatpush1.xpose.msra.mxu0 0.0
    %1530 = vmatprep.subr.mxu0 0.0
    %1531 = vmatpush1.xpose.msra.mxu0 0.0
    %1532 = vmatprep.subr.mxu0 0.0
    %1533 = vmatpush1.xpose.msra.mxu0 0.0
    %1534 = vmatprep.subr.mxu0 0.0
    %1535 = vmatpush1.xpose.msra.mxu0 0.0
    %1536 = vmatprep.mubr.f32.mxu0 0.0
    %v1537 = vand.u32 %v983, 4294901760
    %1538 = vmatmul.mubr.f32.gmra.mrb[0].mxu0 %v1537
    %v1539 = vpop.f32.mrb[0].mxu0
    %v1540 = vadd.f32 %v1425, %v1539
    %v1541 = vpop.f32.mrb[0].mxu0
    %1542 = vmatprep.mubr.f32.mxu0 0.0
    %v1543 = vand.u32 %v986, 4294901760
    %1544 = vmatmul.mubr.f32.gmra.mrb[0].mxu0 %v1543
    %v1545 = vpop.f32.mrb[0].mxu0
    %v1546 = vadd.f32 %v1433, %v1545
    %v1547 = vpop.f32.mrb[0].mxu0
    %1548 = vmatprep.mubr.f32.mxu0 0.0
    %v1549 = vand.u32 %v989, 4294901760
    %1550 = vmatmul.mubr.f32.gmra.mrb[0].mxu0 %v1549
    %v1551 = vpop.f32.mrb[0].mxu0
    %v1552 = vadd.f32 %v1441, %v1551
    %v1553 = vpop.f32.mrb[0].mxu0
    %1554 = vmatprep.mubr.f32.mxu0 0.0
    %v1555 = vand.u32 %v992, 4294901760
    %1556 = vmatmul.mubr.f32.gmra.mrb[0].mxu0 %v1555
    %v1557 = vpop.f32.mrb[0].mxu0
    %v1558 = vadd.f32 %v1449, %v1557
    %v1559 = vpop.f32.mrb[0].mxu0
    %1560 = vmatprep.mubr.f32.mxu0 0.0
    %v1561 = vand.u32 %v995, 4294901760
    %1562 = vmatmul.mubr.f32.gmra.mrb[0].mxu0 %v1561
    %v1563 = vpop.f32.mrb[0].mxu0
    %v1564 = vadd.f32 %v1457, %v1563
    %v1565 = vpop.f32.mrb[0].mxu0
    %1566 = vdwg.mxu0
    %1567 = vmatprep.subr.mxu0 0.0
    %v1568 = vand.u32 %v998, 4294901760
    %1569 = vmatpush1.xpose.msra.mxu0 %v1568
    %1570 = vmatprep.subr.mxu0 0.0
    %v1571 = vand.u32 %v1001, 4294901760
    %1572 = vmatpush1.xpose.msra.mxu0 %v1571
    %1573 = vmatprep.subr.mxu0 0.0
    %v1574 = vand.u32 %v1004, 4294901760
    %1575 = vmatpush1.xpose.msra.mxu0 %v1574
    %1576 = vmatprep.subr.mxu0 0.0
    %v1577 = vand.u32 %v1007, 4294901760
    %1578 = vmatpush1.xpose.msra.mxu0 %v1577
    %1579 = vmatprep.subr.mxu0 0.0
    %1580 = vmatpush1.xpose.msra.mxu0 0.0
    %1581 = vmatprep.subr.mxu0 0.0
    %1582 = vmatpush1.xpose.msra.mxu0 0.0
    %1583 = vmatprep.subr.mxu0 0.0
    %1584 = vmatpush1.xpose.msra.mxu0 0.0
    %1585 = vmatprep.subr.mxu0 0.0
    %1586 = vmatpush1.xpose.msra.mxu0 0.0
    %1587 = vmatprep.subr.mxu0 0.0
    %1588 = vmatpush1.xpose.msra.mxu0 0.0
    %1589 = vmatprep.subr.mxu0 0.0
    %1590 = vmatpush1.xpose.msra.mxu0 0.0
    %1591 = vmatprep.subr.mxu0 0.0
    %1592 = vmatpush1.xpose.msra.mxu0 0.0
    %1593 = vmatprep.subr.mxu0 0.0
    %1594 = vmatpush1.xpose.msra.mxu0 0.0
    %1595 = vmatprep.subr.mxu0 0.0
    %1596 = vmatpush1.xpose.msra.mxu0 0.0
    %1597 = vmatprep.subr.mxu0 0.0
    %1598 = vmatpush1.xpose.msra.mxu0 0.0
    %1599 = vmatprep.subr.mxu0 0.0
    %1600 = vmatpush1.xpose.msra.mxu0 0.0
    %1601 = vmatprep.subr.mxu0 0.0
    %1602 = vmatpush1.xpose.msra.mxu0 0.0
    %1603 = vmatprep.subr.mxu0 0.0
    %1604 = vmatpush1.xpose.msra.mxu0 0.0
    %1605 = vmatprep.subr.mxu0 0.0
    %1606 = vmatpush1.xpose.msra.mxu0 0.0
    %1607 = vmatprep.subr.mxu0 0.0
    %1608 = vmatpush1.xpose.msra.mxu0 0.0
    %1609 = vmatprep.subr.mxu0 0.0
    %1610 = vmatpush1.xpose.msra.mxu0 0.0
    %1611 = vmatprep.subr.mxu0 0.0
    %1612 = vmatpush1.xpose.msra.mxu0 0.0
    %1613 = vmatprep.subr.mxu0 0.0
    %1614 = vmatpush1.xpose.msra.mxu0 0.0
    %1615 = vmatprep.subr.mxu0 0.0
    %1616 = vmatpush1.xpose.msra.mxu0 0.0
    %1617 = vmatprep.subr.mxu0 0.0
    %1618 = vmatpush1.xpose.msra.mxu0 0.0
    %1619 = vmatprep.subr.mxu0 0.0
    %1620 = vmatpush1.xpose.msra.mxu0 0.0
    %1621 = vmatprep.subr.mxu0 0.0
    %1622 = vmatpush1.xpose.msra.mxu0 0.0
    %1623 = vmatprep.subr.mxu0 0.0
    %1624 = vmatpush1.xpose.msra.mxu0 0.0
    %1625 = vmatprep.subr.mxu0 0.0
    %1626 = vmatpush1.xpose.msra.mxu0 0.0
    %1627 = vmatprep.subr.mxu0 0.0
    %1628 = vmatpush1.xpose.msra.mxu0 0.0
    %1629 = vmatprep.subr.mxu0 0.0
    %1630 = vmatpush1.xpose.msra.mxu0 0.0
    %1631 = vmatprep.subr.mxu0 0.0
    %1632 = vmatpush1.xpose.msra.mxu0 0.0
    %1633 = vmatprep.subr.mxu0 0.0
    %1634 = vmatpush1.xpose.msra.mxu0 0.0
    %1635 = vmatprep.mubr.f32.mxu0 0.0
    %v1636 = vand.u32 %v983, 4294901760
    %1637 = vmatmul.mubr.f32.gmra.mrb[0].mxu0 %v1636
    %v1638 = vpop.f32.mrb[0].mxu0
    %v1639 = vadd.f32 %v1540, %v1638
    %v1640 = vpop.f32.mrb[0].mxu0
    %1641 = vmatprep.mubr.f32.mxu0 0.0
    %v1642 = vand.u32 %v986, 4294901760
    %1643 = vmatmul.mubr.f32.gmra.mrb[0].mxu0 %v1642
    %v1644 = vpop.f32.mrb[0].mxu0
    %v1645 = vadd.f32 %v1546, %v1644
    %v1646 = vpop.f32.mrb[0].mxu0
    %1647 = vmatprep.mubr.f32.mxu0 0.0
    %v1648 = vand.u32 %v989, 4294901760
    %1649 = vmatmul.mubr.f32.gmra.mrb[0].mxu0 %v1648
    %v1650 = vpop.f32.mrb[0].mxu0
    %v1651 = vadd.f32 %v1552, %v1650
    %v1652 = vpop.f32.mrb[0].mxu0
    %1653 = vmatprep.mubr.f32.mxu0 0.0
    %v1654 = vand.u32 %v992, 4294901760
    %1655 = vmatmul.mubr.f32.gmra.mrb[0].mxu0 %v1654
    %v1656 = vpop.f32.mrb[0].mxu0
    %v1657 = vadd.f32 %v1558, %v1656
    %v1658 = vpop.f32.mrb[0].mxu0
    %1659 = vmatprep.mubr.f32.mxu0 0.0
    %v1660 = vand.u32 %v995, 4294901760
    %1661 = vmatmul.mubr.f32.gmra.mrb[0].mxu0 %v1660
    %v1662 = vpop.f32.mrb[0].mxu0
    %v1663 = vadd.f32 %v1564, %v1662
    %v1664 = vpop.f32.mrb[0].mxu0
    %1665 = vdwg.mxu0
    %v1667 = vlaneseq
    %v1668 = vshrl.u32 %v1667, 7
    %v1669 = vsub.s32 0, %v1668
    %v1670 = vrot.slane %v981, %v1669
    %v1672 = vadd.f32 %v1639, %v1670
    %v1673 = vand.u32 2147483647, %v1672
    %vm1674 = vcmp.le.f32.partialorder %v1673, 0.7853982
    %vm1675 = vcmp.lt.s32.totalorder %v1672, 0
    %v1676 = vand.u32 %v1672, 2139095040
    %v1677 = vshrl.u32 %v1676, 23
    %v1678 = vsub.s32 %v1677, 127
    %v1679 = vand.u32 2147483647, %v1672
    %v1680 = vand.u32 %v1679, 8388607
    %v1681 = vor.u32 %v1680, 8388608
    %v1682 = vsub.s32 0, %v1681
    %v1683 = vadd.s32 %v1678, 1
    %vm1684 = vcmp.gt.s32.totalorder %v1683, 0
    %v1685 = vsel %vm1684, %v1683, 0
    %v1686 = vshrl.u32 %v1685, 5
    %v1687 = vand.u32 %v1685, 31
    %v1688 = vsub.s32 32, %v1687
    %v1689 = vshrl.u32 683565275, %v1688
    %v1690 = vshll.u32 683565275, %v1687
    %v1691 = vshrl.u32 2475754826, %v1688
    %v1692 = vor.u32 %v1690, %v1691
    %v1693 = vshll.u32 2475754826, %v1687
    %v1694 = vshrl.u32 2131351028, %v1688
    %v1695 = vor.u32 %v1693, %v1694
    %v1696 = vshll.u32 2131351028, %v1687
    %v1697 = vshrl.u32 2102212464, %v1688
    %v1698 = vor.u32 %v1696, %v1697
    %v1699 = vshll.u32 2102212464, %v1687
    %v1700 = vshrl.u32 920167782, %v1688
    %v1701 = vor.u32 %v1699, %v1700
    %v1702 = vshll.u32 920167782, %v1687
    %v1703 = vshrl.u32 1326507024, %v1688
    %v1704 = vor.u32 %v1702, %v1703
    %vm1705 = vcmp.lt.s32.totalorder %v1686, 1
    %vm1706 = vcmp.lt.s32.totalorder %v1686, 2
    %vm1707 = vcmp.lt.s32.totalorder %v1686, 3
    %vm1708 = vcmp.lt.s32.totalorder %v1686, 4
    %v1709 = vsel %vm1705, %v1689, %v1692
    %v1710 = vsel %vm1708, %v1698, 2102212464
    %v1711 = vsel %vm1707, %v1695, %v1710
    %v1712 = vsel %vm1706, %v1709, %v1711
    %v1713 = vsel %vm1705, %v1692, %v1695
    %v1714 = vsel %vm1708, %v1701, 920167782
    %v1715 = vsel %vm1707, %v1698, %v1714
    %v1716 = vsel %vm1706, %v1713, %v1715
    %v1717 = vsel %vm1705, %v1695, %v1698
    %v1718 = vsel %vm1708, %v1704, 1326507024
    %v1719 = vsel %vm1707, %v1701, %v1718
    %v1720 = vsel %vm1706, %v1717, %v1719
    %v1721 = vshll.u32 %v1681, 8
    %v1722 = vmul.u32.u64.compose %v1721, %v1720
    %v1723 = vextract.low.u32 %v1722
    %v1724 = vextract.high.u32 %v1722
    %v1725 = vmul.u32.u64.compose %v1721, %v1716
    %v1726 = vextract.low.u32 %v1725
    %v1727 = vextract.high.u32 %v1725
    %v1728 = vmul.u32 %v1721, %v1712
    %v1729 = vadd.s32 %v1724, %v1726
    %vm1730 = vc.u32 %v1724, %v1726
    %v1731 = vadd.s32 %v1727, 1
    %v1732 = vsel %vm1730, %v1731, %v1727
    %v1733 = vadd.s32 %v1728, %v1732
    %v1734 = vadd.s32 %v1733, 536870912
    %v1735 = vshrl.u32 %v1734, 30
    %v1736 = vshll.u32 %v1735, 30
    %v1737 = vsub.s32 %v1733, %v1736
    %vm1738 = vcmp.lt.s32.totalorder %v1737, 0
    %v1739 = vsub.s32 0, %v1737
    %v1740 = vsel %vm1738, %v1739, %v1737
    %v1741 = vclz %v1740
    %v1742 = vsub.s32 %v1741, 2
    %vm1743 = vcmp.gt.s32.totalorder 0, %v1742
    %v1744 = vsel %vm1743, 0, %v1742
    %v1745 = vsub.s32 32, %v1744
    %v1746 = vshll.u32 %v1737, %v1744
    %v1747 = vshrl.u32 %v1729, %v1745
    %v1748 = vor.u32 %v1746, %v1747
    %v1749 = vsub.s32 4294967266, %v1744
    %v1750 = vadd.s32 %v1749, 127
    %v1751 = vshll.u32 %v1750, 23
    %v1752 = vor.u32 4788187, %v1751
    %v1753 = vand.u32 2147483647, %v1752
    %v1755 = vcvt.s32.f32 %v1748
    %v1756 = vmul.f32 %v1755, %v1753
    %v1757 = vxor.u32 %v1756, 2147483648
    %v1758 = vsel %vm1675, %v1757, %v1756
    %v1759 = vsub.s32 4, %v1735
    %v1760 = vsel %vm1675, %v1759, %v1735
    %v1761 = vsel %vm1674, %v1672, %v1758
    %v1762 = vsel %vm1674, 0, %v1760
    %v1763 = vcosq.f32.pop %v1761
    %v1764 = vsinq.f32.pop %v1761
    %vm1765 = vweird.f32 %v1672
    %v1766 = vadd.s32 %v1762, 3
    %v1767 = vand.u32 %v1766, 3
    %vm1768 = vcmp.lt.s32.totalorder %v1767, 2
    %vm1769 = vcmp.eq.s32.totalorder %v1767, 0
    %v1770 = vxor.u32 %v1764, 2147483648
    %v1771 = vsel %vm1769, %v1763, %v1770
    %vm1772 = vcmp.eq.s32.totalorder %v1767, 2
    %v1773 = vxor.u32 %v1763, 2147483648
    %v1774 = vsel %vm1772, %v1773, %v1764
    %v1775 = vsel %vm1768, %v1771, %v1774
    %v1776 = vsel %vm1765, nan, %v1775
    %v1777 = vand.u32 2147483647, %v1672
    %vm1778 = vcmp.le.f32.partialorder %v1777, 0.7853982
    %vm1779 = vcmp.lt.s32.totalorder %v1672, 0
    %v1780 = vand.u32 %v1672, 2139095040
    %v1781 = vshrl.u32 %v1780, 23
    %v1782 = vsub.s32 %v1781, 127
    %v1783 = vand.u32 2147483647, %v1672
    %v1784 = vand.u32 %v1783, 8388607
    %v1785 = vor.u32 %v1784, 8388608
    %v1786 = vsub.s32 0, %v1785
    %v1787 = vadd.s32 %v1782, 1
    %vm1788 = vcmp.gt.s32.totalorder %v1787, 0
    %v1789 = vsel %vm1788, %v1787, 0
    %v1790 = vshrl.u32 %v1789, 5
    %v1791 = vand.u32 %v1789, 31
    %v1792 = vsub.s32 32, %v1791
    %v1793 = vshrl.u32 683565275, %v1792
    %v1794 = vshll.u32 683565275, %v1791
    %v1795 = vshrl.u32 2475754826, %v1792
    %v1796 = vor.u32 %v1794, %v1795
    %v1797 = vshll.u32 2475754826, %v1791
    %v1798 = vshrl.u32 2131351028, %v1792
    %v1799 = vor.u32 %v1797, %v1798
    %v1800 = vshll.u32 2131351028, %v1791
    %v1801 = vshrl.u32 2102212464, %v1792
    %v1802 = vor.u32 %v1800, %v1801
    %v1803 = vshll.u32 2102212464, %v1791
    %v1804 = vshrl.u32 920167782, %v1792
    %v1805 = vor.u32 %v1803, %v1804
    %v1806 = vshll.u32 920167782, %v1791
    %v1807 = vshrl.u32 1326507024, %v1792
    %v1808 = vor.u32 %v1806, %v1807
    %vm1809 = vcmp.lt.s32.totalorder %v1790, 1
    %vm1810 = vcmp.lt.s32.totalorder %v1790, 2
    %vm1811 = vcmp.lt.s32.totalorder %v1790, 3
    %vm1812 = vcmp.lt.s32.totalorder %v1790, 4
    %v1813 = vsel %vm1809, %v1793, %v1796
    %v1814 = vsel %vm1812, %v1802, 2102212464
    %v1815 = vsel %vm1811, %v1799, %v1814
    %v1816 = vsel %vm1810, %v1813, %v1815
    %v1817 = vsel %vm1809, %v1796, %v1799
    %v1818 = vsel %vm1812, %v1805, 920167782
    %v1819 = vsel %vm1811, %v1802, %v1818
    %v1820 = vsel %vm1810, %v1817, %v1819
    %v1821 = vsel %vm1809, %v1799, %v1802
    %v1822 = vsel %vm1812, %v1808, 1326507024
    %v1823 = vsel %vm1811, %v1805, %v1822
    %v1824 = vsel %vm1810, %v1821, %v1823
    %v1825 = vshll.u32 %v1785, 8
    %v1826 = vmul.u32.u64.compose %v1825, %v1824
    %v1827 = vextract.low.u32 %v1826
    %v1828 = vextract.high.u32 %v1826
    %v1829 = vmul.u32.u64.compose %v1825, %v1820
    %v1830 = vextract.low.u32 %v1829
    %v1831 = vextract.high.u32 %v1829
    %v1832 = vmul.u32 %v1825, %v1816
    %v1833 = vadd.s32 %v1828, %v1830
    %vm1834 = vc.u32 %v1828, %v1830
    %v1835 = vadd.s32 %v1831, 1
    %v1836 = vsel %vm1834, %v1835, %v1831
    %v1837 = vadd.s32 %v1832, %v1836
    %v1838 = vadd.s32 %v1837, 536870912
    %v1839 = vshrl.u32 %v1838, 30
    %v1840 = vshll.u32 %v1839, 30
    %v1841 = vsub.s32 %v1837, %v1840
    %vm1842 = vcmp.lt.s32.totalorder %v1841, 0
    %v1843 = vsub.s32 0, %v1841
    %v1844 = vsel %vm1842, %v1843, %v1841
    %v1845 = vclz %v1844
    %v1846 = vsub.s32 %v1845, 2
    %vm1847 = vcmp.gt.s32.totalorder 0, %v1846
    %v1848 = vsel %vm1847, 0, %v1846
    %v1849 = vsub.s32 32, %v1848
    %v1850 = vshll.u32 %v1841, %v1848
    %v1851 = vshrl.u32 %v1833, %v1849
    %v1852 = vor.u32 %v1850, %v1851
    %v1853 = vsub.s32 4294967266, %v1848
    %v1854 = vadd.s32 %v1853, 127
    %v1855 = vshll.u32 %v1854, 23
    %v1856 = vor.u32 4788187, %v1855
    %v1857 = vand.u32 2147483647, %v1856
    %v1859 = vcvt.s32.f32 %v1852
    %v1860 = vmul.f32 %v1859, %v1857
    %v1861 = vxor.u32 %v1860, 2147483648
    %v1862 = vsel %vm1779, %v1861, %v1860
    %v1863 = vsub.s32 4, %v1839
    %v1864 = vsel %vm1779, %v1863, %v1839
    %v1865 = vsel %vm1778, %v1672, %v1862
    %v1866 = vsel %vm1778, 0, %v1864
    %v1867 = vcosq.f32.pop %v1865
    %v1868 = vsinq.f32.pop %v1865
    %vm1869 = vweird.f32 %v1672
    %v1870 = vand.u32 %v1866, 3
    %vm1871 = vcmp.lt.s32.totalorder %v1870, 2
    %vm1872 = vcmp.eq.s32.totalorder %v1870, 0
    %v1873 = vxor.u32 %v1868, 2147483648
    %v1874 = vsel %vm1872, %v1867, %v1873
    %vm1875 = vcmp.eq.s32.totalorder %v1870, 2
    %v1876 = vxor.u32 %v1867, 2147483648
    %v1877 = vsel %vm1875, %v1876, %v1868
    %v1878 = vsel %vm1871, %v1874, %v1877
    %v1879 = vsel %vm1869, nan, %v1878
    %v1880 = vsub.f32 0.0, %v1776
    %1881 = vst.msk [vmem:[#allocation7] sm:$0xff] %vm53, %v1776
    %v1882 = vmul.f32 %v1879, %v1645
    %v1883 = vmul.f32 %v1879, %v1651
    %1884 = vst.msk [vmem:[%s956] sm:$0xff] %vm53, %v1882
    %1885 = vst.msk [vmem:[%s956 + $0x8] sm:$0xff] %vm53, %v1883
    %v1886 = vmul.f32 %v1879, %v1657
    %v1887 = vmul.f32 %v1879, %v1663
    %v1888 = vmul.f32 %v1645, %v1645
    %v1889 = vmul.f32 %v1651, %v1651
    %v1890 = vmul.f32 %v1880, %v1888
    %v1891 = vmul.f32 %v1880, %v1889
    %v1892 = vadd.f32 %v1886, %v1890
    %v1893 = vadd.f32 %v1887, %v1891
    %1894 = vst.msk [vmem:[%s967] sm:$0xff] %vm53, %v1892
    %1895 = vst.msk [vmem:[%s967 + $0x8] sm:$0xff] %vm53, %v1893
    %v1896 = vld [vmem:[#allocation7] sm:$0xff]
    %v1897 = vld [vmem:[#allocation7 + $0x8] sm:$0xff]
    %v1898 = vld [vmem:[#allocation7 + $0x10] sm:$0xff]
    %v1899 = vld [vmem:[#allocation7 + $0x18] sm:$0xff]
    %v1900 = vld [vmem:[#allocation7 + $0x20] sm:$0xff]
    %s1901 = scalar_lea.vmem [#allocation5], 64
    %v1902 = vld [vmem:[%s1901] sm:$0xff]
    %v1903 = vld [vmem:[%s1901 + $0x8] sm:$0xff]
    %v1904 = vld [vmem:[%s1901 + $0x10] sm:$0xff]
    %v1905 = vld [vmem:[%s1901 + $0x18] sm:$0xff]
    %s1906 = scalar_lea.vmem %s2, 2
    %v1907 = vld [vmem:[%s1906] sm:$0x1]
    %v1909 = vsel %vm53, %v1896, 0
    %v1912 = vsel %vm53, %v1897, 0
    %v1915 = vsel %vm53, %v1898, 0
    %v1918 = vsel %vm53, %v1899, 0
    %v1921 = vsel %vm53, %v1900, 0
    %v1924 = vsel %vm53, %v1902, 0
    %v1927 = vsel %vm53, %v1903, 0
    %v1930 = vsel %vm53, %v1904, 0
    %v1933 = vsel %vm53, %v1905, 0
    %1935 = vmatprep.subr.mxu0 0.0
    %v1936 = vand.u32 %v1924, 4294901760
    %1937 = vmatpush1.xpose.msra.mxu0 %v1936
    %1938 = vmatprep.subr.mxu0 0.0
    %v1939 = vand.u32 %v1927, 4294901760
    %1940 = vmatpush1.xpose.msra.mxu0 %v1939
    %1941 = vmatprep.subr.mxu0 0.0
    %v1942 = vand.u32 %v1930, 4294901760
    %1943 = vmatpush1.xpose.msra.mxu0 %v1942
    %1944 = vmatprep.subr.mxu0 0.0
    %v1945 = vand.u32 %v1933, 4294901760
    %1946 = vmatpush1.xpose.msra.mxu0 %v1945
    %1947 = vmatprep.subr.mxu0 0.0
    %1948 = vmatpush1.xpose.msra.mxu0 0.0
    %1949 = vmatprep.subr.mxu0 0.0
    %1950 = vmatpush1.xpose.msra.mxu0 0.0
    %1951 = vmatprep.subr.mxu0 0.0
    %1952 = vmatpush1.xpose.msra.mxu0 0.0
    %1953 = vmatprep.subr.mxu0 0.0
    %1954 = vmatpush1.xpose.msra.mxu0 0.0
    %1955 = vmatprep.subr.mxu0 0.0
    %1956 = vmatpush1.xpose.msra.mxu0 0.0
    %1957 = vmatprep.subr.mxu0 0.0
    %1958 = vmatpush1.xpose.msra.mxu0 0.0
    %1959 = vmatprep.subr.mxu0 0.0
    %1960 = vmatpush1.xpose.msra.mxu0 0.0
    %1961 = vmatprep.subr.mxu0 0.0
    %1962 = vmatpush1.xpose.msra.mxu0 0.0
    %1963 = vmatprep.subr.mxu0 0.0
    %1964 = vmatpush1.xpose.msra.mxu0 0.0
    %1965 = vmatprep.subr.mxu0 0.0
    %1966 = vmatpush1.xpose.msra.mxu0 0.0
    %1967 = vmatprep.subr.mxu0 0.0
    %1968 = vmatpush1.xpose.msra.mxu0 0.0
    %1969 = vmatprep.subr.mxu0 0.0
    %1970 = vmatpush1.xpose.msra.mxu0 0.0
    %1971 = vmatprep.subr.mxu0 0.0
    %1972 = vmatpush1.xpose.msra.mxu0 0.0
    %1973 = vmatprep.subr.mxu0 0.0
    %1974 = vmatpush1.xpose.msra.mxu0 0.0
    %1975 = vmatprep.subr.mxu0 0.0
    %1976 = vmatpush1.xpose.msra.mxu0 0.0
    %1977 = vmatprep.subr.mxu0 0.0
    %1978 = vmatpush1.xpose.msra.mxu0 0.0
    %1979 = vmatprep.subr.mxu0 0.0
    %1980 = vmatpush1.xpose.msra.mxu0 0.0
    %1981 = vmatprep.subr.mxu0 0.0
    %1982 = vmatpush1.xpose.msra.mxu0 0.0
    %1983 = vmatprep.subr.mxu0 0.0
    %1984 = vmatpush1.xpose.msra.mxu0 0.0
    %1985 = vmatprep.subr.mxu0 0.0
    %1986 = vmatpush1.xpose.msra.mxu0 0.0
    %1987 = vmatprep.subr.mxu0 0.0
    %1988 = vmatpush1.xpose.msra.mxu0 0.0
    %1989 = vmatprep.subr.mxu0 0.0
    %1990 = vmatpush1.xpose.msra.mxu0 0.0
    %1991 = vmatprep.subr.mxu0 0.0
    %1992 = vmatpush1.xpose.msra.mxu0 0.0
    %1993 = vmatprep.subr.mxu0 0.0
    %1994 = vmatpush1.xpose.msra.mxu0 0.0
    %1995 = vmatprep.subr.mxu0 0.0
    %1996 = vmatpush1.xpose.msra.mxu0 0.0
    %1997 = vmatprep.subr.mxu0 0.0
    %1998 = vmatpush1.xpose.msra.mxu0 0.0
    %1999 = vmatprep.subr.mxu0 0.0
    %2000 = vmatpush1.xpose.msra.mxu0 0.0
    %2001 = vmatprep.subr.mxu0 0.0
    %2002 = vmatpush1.xpose.msra.mxu0 0.0
    %2003 = vmatprep.mubr.f32.mxu0 0.0
    %v2004 = vand.u32 %v1909, 4294901760
    %v2005 = vsub.f32 %v1909, %v2004
    %v2006 = vand.u32 %v2005, 4294901760
    %v2007 = vsub.f32 %v2005, %v2006
    %v2008 = vand.u32 %v2007, 4294901760
    %2009 = vmatmul.mubr.f32.gmra.mrb[0].mxu0 %v2008
    %v2010 = vpop.f32.mrb[0].mxu0
    %v2011 = vadd.f32 0.0, %v2010
    %v2012 = vpop.f32.mrb[0].mxu0
    %2013 = vmatprep.mubr.f32.mxu0 0.0
    %v2014 = vand.u32 %v1912, 4294901760
    %v2015 = vsub.f32 %v1912, %v2014
    %v2016 = vand.u32 %v2015, 4294901760
    %v2017 = vsub.f32 %v2015, %v2016
    %v2018 = vand.u32 %v2017, 4294901760
    %2019 = vmatmul.mubr.f32.gmra.mrb[0].mxu0 %v2018
    %v2020 = vpop.f32.mrb[0].mxu0
    %v2021 = vadd.f32 0.0, %v2020
    %v2022 = vpop.f32.mrb[0].mxu0
    %2023 = vmatprep.mubr.f32.mxu0 0.0
    %v2024 = vand.u32 %v1915, 4294901760
    %v2025 = vsub.f32 %v1915, %v2024
    %v2026 = vand.u32 %v2025, 4294901760
    %v2027 = vsub.f32 %v2025, %v2026
    %v2028 = vand.u32 %v2027, 4294901760
    %2029 = vmatmul.mubr.f32.gmra.mrb[0].mxu0 %v2028
    %v2030 = vpop.f32.mrb[0].mxu0
    %v2031 = vadd.f32 0.0, %v2030
    %v2032 = vpop.f32.mrb[0].mxu0
    %2033 = vmatprep.mubr.f32.mxu0 0.0
    %v2034 = vand.u32 %v1918, 4294901760
    %v2035 = vsub.f32 %v1918, %v2034
    %v2036 = vand.u32 %v2035, 4294901760
    %v2037 = vsub.f32 %v2035, %v2036
    %v2038 = vand.u32 %v2037, 4294901760
    %2039 = vmatmul.mubr.f32.gmra.mrb[0].mxu0 %v2038
    %v2040 = vpop.f32.mrb[0].mxu0
    %v2041 = vadd.f32 0.0, %v2040
    %v2042 = vpop.f32.mrb[0].mxu0
    %2043 = vmatprep.mubr.f32.mxu0 0.0
    %v2044 = vand.u32 %v1921, 4294901760
    %v2045 = vsub.f32 %v1921, %v2044
    %v2046 = vand.u32 %v2045, 4294901760
    %v2047 = vsub.f32 %v2045, %v2046
    %v2048 = vand.u32 %v2047, 4294901760
    %2049 = vmatmul.mubr.f32.gmra.mrb[0].mxu0 %v2048
    %v2050 = vpop.f32.mrb[0].mxu0
    %v2051 = vadd.f32 0.0, %v2050
    %v2052 = vpop.f32.mrb[0].mxu0
    %2053 = vdwg.mxu0
    %2054 = vmatprep.subr.mxu0 0.0
    %v2055 = vand.u32 %v1924, 4294901760
    %v2056 = vsub.f32 %v1924, %v2055
    %v2057 = vand.u32 %v2056, 4294901760
    %v2058 = vsub.f32 %v2056, %v2057
    %v2059 = vand.u32 %v2058, 4294901760
    %2060 = vmatpush1.xpose.msra.mxu0 %v2059
    %2061 = vmatprep.subr.mxu0 0.0
    %v2062 = vand.u32 %v1927, 4294901760
    %v2063 = vsub.f32 %v1927, %v2062
    %v2064 = vand.u32 %v2063, 4294901760
    %v2065 = vsub.f32 %v2063, %v2064
    %v2066 = vand.u32 %v2065, 4294901760
    %2067 = vmatpush1.xpose.msra.mxu0 %v2066
    %2068 = vmatprep.subr.mxu0 0.0
    %v2069 = vand.u32 %v1930, 4294901760
    %v2070 = vsub.f32 %v1930, %v2069
    %v2071 = vand.u32 %v2070, 4294901760
    %v2072 = vsub.f32 %v2070, %v2071
    %v2073 = vand.u32 %v2072, 4294901760
    %2074 = vmatpush1.xpose.msra.mxu0 %v2073
    %2075 = vmatprep.subr.mxu0 0.0
    %v2076 = vand.u32 %v1933, 4294901760
    %v2077 = vsub.f32 %v1933, %v2076
    %v2078 = vand.u32 %v2077, 4294901760
    %v2079 = vsub.f32 %v2077, %v2078
    %v2080 = vand.u32 %v2079, 4294901760
    %2081 = vmatpush1.xpose.msra.mxu0 %v2080
    %2082 = vmatprep.subr.mxu0 0.0
    %2083 = vmatpush1.xpose.msra.mxu0 0.0
    %2084 = vmatprep.subr.mxu0 0.0
    %2085 = vmatpush1.xpose.msra.mxu0 0.0
    %2086 = vmatprep.subr.mxu0 0.0
    %2087 = vmatpush1.xpose.msra.mxu0 0.0
    %2088 = vmatprep.subr.mxu0 0.0
    %2089 = vmatpush1.xpose.msra.mxu0 0.0
    %2090 = vmatprep.subr.mxu0 0.0
    %2091 = vmatpush1.xpose.msra.mxu0 0.0
    %2092 = vmatprep.subr.mxu0 0.0
    %2093 = vmatpush1.xpose.msra.mxu0 0.0
    %2094 = vmatprep.subr.mxu0 0.0
    %2095 = vmatpush1.xpose.msra.mxu0 0.0
    %2096 = vmatprep.subr.mxu0 0.0
    %2097 = vmatpush1.xpose.msra.mxu0 0.0
    %2098 = vmatprep.subr.mxu0 0.0
    %2099 = vmatpush1.xpose.msra.mxu0 0.0
    %2100 = vmatprep.subr.mxu0 0.0
    %2101 = vmatpush1.xpose.msra.mxu0 0.0
    %2102 = vmatprep.subr.mxu0 0.0
    %2103 = vmatpush1.xpose.msra.mxu0 0.0
    %2104 = vmatprep.subr.mxu0 0.0
    %2105 = vmatpush1.xpose.msra.mxu0 0.0
    %2106 = vmatprep.subr.mxu0 0.0
    %2107 = vmatpush1.xpose.msra.mxu0 0.0
    %2108 = vmatprep.subr.mxu0 0.0
    %2109 = vmatpush1.xpose.msra.mxu0 0.0
    %2110 = vmatprep.subr.mxu0 0.0
    %2111 = vmatpush1.xpose.msra.mxu0 0.0
    %2112 = vmatprep.subr.mxu0 0.0
    %2113 = vmatpush1.xpose.msra.mxu0 0.0
    %2114 = vmatprep.subr.mxu0 0.0
    %2115 = vmatpush1.xpose.msra.mxu0 0.0
    %2116 = vmatprep.subr.mxu0 0.0
    %2117 = vmatpush1.xpose.msra.mxu0 0.0
    %2118 = vmatprep.subr.mxu0 0.0
    %2119 = vmatpush1.xpose.msra.mxu0 0.0
    %2120 = vmatprep.subr.mxu0 0.0
    %2121 = vmatpush1.xpose.msra.mxu0 0.0
    %2122 = vmatprep.subr.mxu0 0.0
    %2123 = vmatpush1.xpose.msra.mxu0 0.0
    %2124 = vmatprep.subr.mxu0 0.0
    %2125 = vmatpush1.xpose.msra.mxu0 0.0
    %2126 = vmatprep.subr.mxu0 0.0
    %2127 = vmatpush1.xpose.msra.mxu0 0.0
    %2128 = vmatprep.subr.mxu0 0.0
    %2129 = vmatpush1.xpose.msra.mxu0 0.0
    %2130 = vmatprep.subr.mxu0 0.0
    %2131 = vmatpush1.xpose.msra.mxu0 0.0
    %2132 = vmatprep.subr.mxu0 0.0
    %2133 = vmatpush1.xpose.msra.mxu0 0.0
    %2134 = vmatprep.subr.mxu0 0.0
    %2135 = vmatpush1.xpose.msra.mxu0 0.0
    %2136 = vmatprep.subr.mxu0 0.0
    %2137 = vmatpush1.xpose.msra.mxu0 0.0
    %2138 = vmatprep.mubr.f32.mxu0 0.0
    %v2139 = vand.u32 %v1909, 4294901760
    %2140 = vmatmul.mubr.f32.gmra.mrb[0].mxu0 %v2139
    %v2141 = vpop.f32.mrb[0].mxu0
    %v2142 = vadd.f32 %v2011, %v2141
    %v2143 = vpop.f32.mrb[0].mxu0
    %2144 = vmatprep.mubr.f32.mxu0 0.0
    %v2145 = vand.u32 %v1912, 4294901760
    %2146 = vmatmul.mubr.f32.gmra.mrb[0].mxu0 %v2145
    %v2147 = vpop.f32.mrb[0].mxu0
    %v2148 = vadd.f32 %v2021, %v2147
    %v2149 = vpop.f32.mrb[0].mxu0
    %2150 = vmatprep.mubr.f32.mxu0 0.0
    %v2151 = vand.u32 %v1915, 4294901760
    %2152 = vmatmul.mubr.f32.gmra.mrb[0].mxu0 %v2151
    %v2153 = vpop.f32.mrb[0].mxu0
    %v2154 = vadd.f32 %v2031, %v2153
    %v2155 = vpop.f32.mrb[0].mxu0
    %2156 = vmatprep.mubr.f32.mxu0 0.0
    %v2157 = vand.u32 %v1918, 4294901760
    %2158 = vmatmul.mubr.f32.gmra.mrb[0].mxu0 %v2157
    %v2159 = vpop.f32.mrb[0].mxu0
    %v2160 = vadd.f32 %v2041, %v2159
    %v2161 = vpop.f32.mrb[0].mxu0
    %2162 = vmatprep.mubr.f32.mxu0 0.0
    %v2163 = vand.u32 %v1921, 4294901760
    %2164 = vmatmul.mubr.f32.gmra.mrb[0].mxu0 %v2163
    %v2165 = vpop.f32.mrb[0].mxu0
    %v2166 = vadd.f32 %v2051, %v2165
    %v2167 = vpop.f32.mrb[0].mxu0
    %2168 = vdwg.mxu0
    %2169 = vmatprep.subr.mxu0 0.0
    %v2170 = vand.u32 %v1924, 4294901760
    %v2171 = vsub.f32 %v1924, %v2170
    %2172 = vmatpush1.xpose.msra.mxu0 %v2171
    %2173 = vmatprep.subr.mxu0 0.0
    %v2174 = vand.u32 %v1927, 4294901760
    %v2175 = vsub.f32 %v1927, %v2174
    %2176 = vmatpush1.xpose.msra.mxu0 %v2175
    %2177 = vmatprep.subr.mxu0 0.0
    %v2178 = vand.u32 %v1930, 4294901760
    %v2179 = vsub.f32 %v1930, %v2178
    %2180 = vmatpush1.xpose.msra.mxu0 %v2179
    %2181 = vmatprep.subr.mxu0 0.0
    %v2182 = vand.u32 %v1933, 4294901760
    %v2183 = vsub.f32 %v1933, %v2182
    %2184 = vmatpush1.xpose.msra.mxu0 %v2183
    %2185 = vmatprep.subr.mxu0 0.0
    %2186 = vmatpush1.xpose.msra.mxu0 0.0
    %2187 = vmatprep.subr.mxu0 0.0
    %2188 = vmatpush1.xpose.msra.mxu0 0.0
    %2189 = vmatprep.subr.mxu0 0.0
    %2190 = vmatpush1.xpose.msra.mxu0 0.0
    %2191 = vmatprep.subr.mxu0 0.0
    %2192 = vmatpush1.xpose.msra.mxu0 0.0
    %2193 = vmatprep.subr.mxu0 0.0
    %2194 = vmatpush1.xpose.msra.mxu0 0.0
    %2195 = vmatprep.subr.mxu0 0.0
    %2196 = vmatpush1.xpose.msra.mxu0 0.0
    %2197 = vmatprep.subr.mxu0 0.0
    %2198 = vmatpush1.xpose.msra.mxu0 0.0
    %2199 = vmatprep.subr.mxu0 0.0
    %2200 = vmatpush1.xpose.msra.mxu0 0.0
    %2201 = vmatprep.subr.mxu0 0.0
    %2202 = vmatpush1.xpose.msra.mxu0 0.0
    %2203 = vmatprep.subr.mxu0 0.0
    %2204 = vmatpush1.xpose.msra.mxu0 0.0
    %2205 = vmatprep.subr.mxu0 0.0
    %2206 = vmatpush1.xpose.msra.mxu0 0.0
    %2207 = vmatprep.subr.mxu0 0.0
    %2208 = vmatpush1.xpose.msra.mxu0 0.0
    %2209 = vmatprep.subr.mxu0 0.0
    %2210 = vmatpush1.xpose.msra.mxu0 0.0
    %2211 = vmatprep.subr.mxu0 0.0
    %2212 = vmatpush1.xpose.msra.mxu0 0.0
    %2213 = vmatprep.subr.mxu0 0.0
    %2214 = vmatpush1.xpose.msra.mxu0 0.0
    %2215 = vmatprep.subr.mxu0 0.0
    %2216 = vmatpush1.xpose.msra.mxu0 0.0
    %2217 = vmatprep.subr.mxu0 0.0
    %2218 = vmatpush1.xpose.msra.mxu0 0.0
    %2219 = vmatprep.subr.mxu0 0.0
    %2220 = vmatpush1.xpose.msra.mxu0 0.0
    %2221 = vmatprep.subr.mxu0 0.0
    %2222 = vmatpush1.xpose.msra.mxu0 0.0
    %2223 = vmatprep.subr.mxu0 0.0
    %2224 = vmatpush1.xpose.msra.mxu0 0.0
    %2225 = vmatprep.subr.mxu0 0.0
    %2226 = vmatpush1.xpose.msra.mxu0 0.0
    %2227 = vmatprep.subr.mxu0 0.0
    %2228 = vmatpush1.xpose.msra.mxu0 0.0
    %2229 = vmatprep.subr.mxu0 0.0
    %2230 = vmatpush1.xpose.msra.mxu0 0.0
    %2231 = vmatprep.subr.mxu0 0.0
    %2232 = vmatpush1.xpose.msra.mxu0 0.0
    %2233 = vmatprep.subr.mxu0 0.0
    %2234 = vmatpush1.xpose.msra.mxu0 0.0
    %2235 = vmatprep.subr.mxu0 0.0
    %2236 = vmatpush1.xpose.msra.mxu0 0.0
    %2237 = vmatprep.subr.mxu0 0.0
    %2238 = vmatpush1.xpose.msra.mxu0 0.0
    %2239 = vmatprep.subr.mxu0 0.0
    %2240 = vmatpush1.xpose.msra.mxu0 0.0
    %2241 = vmatprep.mubr.f32.mxu0 0.0
    %v2242 = vand.u32 %v1909, 4294901760
    %v2243 = vsub.f32 %v1909, %v2242
    %2244 = vmatmul.mubr.f32.gmra.mrb[0].mxu0 %v2243
    %v2245 = vpop.f32.mrb[0].mxu0
    %v2246 = vadd.f32 %v2142, %v2245
    %v2247 = vpop.f32.mrb[0].mxu0
    %2248 = vmatprep.mubr.f32.mxu0 0.0
    %v2249 = vand.u32 %v1912, 4294901760
    %v2250 = vsub.f32 %v1912, %v2249
    %2251 = vmatmul.mubr.f32.gmra.mrb[0].mxu0 %v2250
    %v2252 = vpop.f32.mrb[0].mxu0
    %v2253 = vadd.f32 %v2148, %v2252
    %v2254 = vpop.f32.mrb[0].mxu0
    %2255 = vmatprep.mubr.f32.mxu0 0.0
    %v2256 = vand.u32 %v1915, 4294901760
    %v2257 = vsub.f32 %v1915, %v2256
    %2258 = vmatmul.mubr.f32.gmra.mrb[0].mxu0 %v2257
    %v2259 = vpop.f32.mrb[0].mxu0
    %v2260 = vadd.f32 %v2154, %v2259
    %v2261 = vpop.f32.mrb[0].mxu0
    %2262 = vmatprep.mubr.f32.mxu0 0.0
    %v2263 = vand.u32 %v1918, 4294901760
    %v2264 = vsub.f32 %v1918, %v2263
    %2265 = vmatmul.mubr.f32.gmra.mrb[0].mxu0 %v2264
    %v2266 = vpop.f32.mrb[0].mxu0
    %v2267 = vadd.f32 %v2160, %v2266
    %v2268 = vpop.f32.mrb[0].mxu0
    %2269 = vmatprep.mubr.f32.mxu0 0.0
    %v2270 = vand.u32 %v1921, 4294901760
    %v2271 = vsub.f32 %v1921, %v2270
    %2272 = vmatmul.mubr.f32.gmra.mrb[0].mxu0 %v2271
    %v2273 = vpop.f32.mrb[0].mxu0
    %v2274 = vadd.f32 %v2166, %v2273
    %v2275 = vpop.f32.mrb[0].mxu0
    %2276 = vdwg.mxu0
    %2277 = vmatprep.subr.mxu0 0.0
    %v2278 = vand.u32 %v1924, 4294901760
    %2279 = vmatpush1.xpose.msra.mxu0 %v2278
    %2280 = vmatprep.subr.mxu0 0.0
    %v2281 = vand.u32 %v1927, 4294901760
    %2282 = vmatpush1.xpose.msra.mxu0 %v2281
    %2283 = vmatprep.subr.mxu0 0.0
    %v2284 = vand.u32 %v1930, 4294901760
    %2285 = vmatpush1.xpose.msra.mxu0 %v2284
    %2286 = vmatprep.subr.mxu0 0.0
    %v2287 = vand.u32 %v1933, 4294901760
    %2288 = vmatpush1.xpose.msra.mxu0 %v2287
    %2289 = vmatprep.subr.mxu0 0.0
    %2290 = vmatpush1.xpose.msra.mxu0 0.0
    %2291 = vmatprep.subr.mxu0 0.0
    %2292 = vmatpush1.xpose.msra.mxu0 0.0
    %2293 = vmatprep.subr.mxu0 0.0
    %2294 = vmatpush1.xpose.msra.mxu0 0.0
    %2295 = vmatprep.subr.mxu0 0.0
    %2296 = vmatpush1.xpose.msra.mxu0 0.0
    %2297 = vmatprep.subr.mxu0 0.0
    %2298 = vmatpush1.xpose.msra.mxu0 0.0
    %2299 = vmatprep.subr.mxu0 0.0
    %2300 = vmatpush1.xpose.msra.mxu0 0.0
    %2301 = vmatprep.subr.mxu0 0.0
    %2302 = vmatpush1.xpose.msra.mxu0 0.0
    %2303 = vmatprep.subr.mxu0 0.0
    %2304 = vmatpush1.xpose.msra.mxu0 0.0
    %2305 = vmatprep.subr.mxu0 0.0
    %2306 = vmatpush1.xpose.msra.mxu0 0.0
    %2307 = vmatprep.subr.mxu0 0.0
    %2308 = vmatpush1.xpose.msra.mxu0 0.0
    %2309 = vmatprep.subr.mxu0 0.0
    %2310 = vmatpush1.xpose.msra.mxu0 0.0
    %2311 = vmatprep.subr.mxu0 0.0
    %2312 = vmatpush1.xpose.msra.mxu0 0.0
    %2313 = vmatprep.subr.mxu0 0.0
    %2314 = vmatpush1.xpose.msra.mxu0 0.0
    %2315 = vmatprep.subr.mxu0 0.0
    %2316 = vmatpush1.xpose.msra.mxu0 0.0
    %2317 = vmatprep.subr.mxu0 0.0
    %2318 = vmatpush1.xpose.msra.mxu0 0.0
    %2319 = vmatprep.subr.mxu0 0.0
    %2320 = vmatpush1.xpose.msra.mxu0 0.0
    %2321 = vmatprep.subr.mxu0 0.0
    %2322 = vmatpush1.xpose.msra.mxu0 0.0
    %2323 = vmatprep.subr.mxu0 0.0
    %2324 = vmatpush1.xpose.msra.mxu0 0.0
    %2325 = vmatprep.subr.mxu0 0.0
    %2326 = vmatpush1.xpose.msra.mxu0 0.0
    %2327 = vmatprep.subr.mxu0 0.0
    %2328 = vmatpush1.xpose.msra.mxu0 0.0
    %2329 = vmatprep.subr.mxu0 0.0
    %2330 = vmatpush1.xpose.msra.mxu0 0.0
    %2331 = vmatprep.subr.mxu0 0.0
    %2332 = vmatpush1.xpose.msra.mxu0 0.0
    %2333 = vmatprep.subr.mxu0 0.0
    %2334 = vmatpush1.xpose.msra.mxu0 0.0
    %2335 = vmatprep.subr.mxu0 0.0
    %2336 = vmatpush1.xpose.msra.mxu0 0.0
    %2337 = vmatprep.subr.mxu0 0.0
    %2338 = vmatpush1.xpose.msra.mxu0 0.0
    %2339 = vmatprep.subr.mxu0 0.0
    %2340 = vmatpush1.xpose.msra.mxu0 0.0
    %2341 = vmatprep.subr.mxu0 0.0
    %2342 = vmatpush1.xpose.msra.mxu0 0.0
    %2343 = vmatprep.subr.mxu0 0.0
    %2344 = vmatpush1.xpose.msra.mxu0 0.0
    %2345 = vmatprep.mubr.f32.mxu0 0.0
    %v2346 = vand.u32 %v1909, 4294901760
    %v2347 = vsub.f32 %v1909, %v2346
    %v2348 = vand.u32 %v2347, 4294901760
    %2349 = vmatmul.mubr.f32.gmra.mrb[0].mxu0 %v2348
    %v2350 = vpop.f32.mrb[0].mxu0
    %v2351 = vadd.f32 %v2246, %v2350
    %v2352 = vpop.f32.mrb[0].mxu0
    %2353 = vmatprep.mubr.f32.mxu0 0.0
    %v2354 = vand.u32 %v1912, 4294901760
    %v2355 = vsub.f32 %v1912, %v2354
    %v2356 = vand.u32 %v2355, 4294901760
    %2357 = vmatmul.mubr.f32.gmra.mrb[0].mxu0 %v2356
    %v2358 = vpop.f32.mrb[0].mxu0
    %v2359 = vadd.f32 %v2253, %v2358
    %v2360 = vpop.f32.mrb[0].mxu0
    %2361 = vmatprep.mubr.f32.mxu0 0.0
    %v2362 = vand.u32 %v1915, 4294901760
    %v2363 = vsub.f32 %v1915, %v2362
    %v2364 = vand.u32 %v2363, 4294901760
    %2365 = vmatmul.mubr.f32.gmra.mrb[0].mxu0 %v2364
    %v2366 = vpop.f32.mrb[0].mxu0
    %v2367 = vadd.f32 %v2260, %v2366
    %v2368 = vpop.f32.mrb[0].mxu0
    %2369 = vmatprep.mubr.f32.mxu0 0.0
    %v2370 = vand.u32 %v1918, 4294901760
    %v2371 = vsub.f32 %v1918, %v2370
    %v2372 = vand.u32 %v2371, 4294901760
    %2373 = vmatmul.mubr.f32.gmra.mrb[0].mxu0 %v2372
    %v2374 = vpop.f32.mrb[0].mxu0
    %v2375 = vadd.f32 %v2267, %v2374
    %v2376 = vpop.f32.mrb[0].mxu0
    %2377 = vmatprep.mubr.f32.mxu0 0.0
    %v2378 = vand.u32 %v1921, 4294901760
    %v2379 = vsub.f32 %v1921, %v2378
    %v2380 = vand.u32 %v2379, 4294901760
    %2381 = vmatmul.mubr.f32.gmra.mrb[0].mxu0 %v2380
    %v2382 = vpop.f32.mrb[0].mxu0
    %v2383 = vadd.f32 %v2274, %v2382
    %v2384 = vpop.f32.mrb[0].mxu0
    %2385 = vdwg.mxu0
    %2386 = vmatprep.subr.mxu0 0.0
    %v2387 = vand.u32 %v1924, 4294901760
    %v2388 = vsub.f32 %v1924, %v2387
    %v2389 = vand.u32 %v2388, 4294901760
    %2390 = vmatpush1.xpose.msra.mxu0 %v2389
    %2391 = vmatprep.subr.mxu0 0.0
    %v2392 = vand.u32 %v1927, 4294901760
    %v2393 = vsub.f32 %v1927, %v2392
    %v2394 = vand.u32 %v2393, 4294901760
    %2395 = vmatpush1.xpose.msra.mxu0 %v2394
    %2396 = vmatprep.subr.mxu0 0.0
    %v2397 = vand.u32 %v1930, 4294901760
    %v2398 = vsub.f32 %v1930, %v2397
    %v2399 = vand.u32 %v2398, 4294901760
    %2400 = vmatpush1.xpose.msra.mxu0 %v2399
    %2401 = vmatprep.subr.mxu0 0.0
    %v2402 = vand.u32 %v1933, 4294901760
    %v2403 = vsub.f32 %v1933, %v2402
    %v2404 = vand.u32 %v2403, 4294901760
    %2405 = vmatpush1.xpose.msra.mxu0 %v2404
    %2406 = vmatprep.subr.mxu0 0.0
    %2407 = vmatpush1.xpose.msra.mxu0 0.0
    %2408 = vmatprep.subr.mxu0 0.0
    %2409 = vmatpush1.xpose.msra.mxu0 0.0
    %2410 = vmatprep.subr.mxu0 0.0
    %2411 = vmatpush1.xpose.msra.mxu0 0.0
    %2412 = vmatprep.subr.mxu0 0.0
    %2413 = vmatpush1.xpose.msra.mxu0 0.0
    %2414 = vmatprep.subr.mxu0 0.0
    %2415 = vmatpush1.xpose.msra.mxu0 0.0
    %2416 = vmatprep.subr.mxu0 0.0
    %2417 = vmatpush1.xpose.msra.mxu0 0.0
    %2418 = vmatprep.subr.mxu0 0.0
    %2419 = vmatpush1.xpose.msra.mxu0 0.0
    %2420 = vmatprep.subr.mxu0 0.0
    %2421 = vmatpush1.xpose.msra.mxu0 0.0
    %2422 = vmatprep.subr.mxu0 0.0
    %2423 = vmatpush1.xpose.msra.mxu0 0.0
    %2424 = vmatprep.subr.mxu0 0.0
    %2425 = vmatpush1.xpose.msra.mxu0 0.0
    %2426 = vmatprep.subr.mxu0 0.0
    %2427 = vmatpush1.xpose.msra.mxu0 0.0
    %2428 = vmatprep.subr.mxu0 0.0
    %2429 = vmatpush1.xpose.msra.mxu0 0.0
    %2430 = vmatprep.subr.mxu0 0.0
    %2431 = vmatpush1.xpose.msra.mxu0 0.0
    %2432 = vmatprep.subr.mxu0 0.0
    %2433 = vmatpush1.xpose.msra.mxu0 0.0
    %2434 = vmatprep.subr.mxu0 0.0
    %2435 = vmatpush1.xpose.msra.mxu0 0.0
    %2436 = vmatprep.subr.mxu0 0.0
    %2437 = vmatpush1.xpose.msra.mxu0 0.0
    %2438 = vmatprep.subr.mxu0 0.0
    %2439 = vmatpush1.xpose.msra.mxu0 0.0
    %2440 = vmatprep.subr.mxu0 0.0
    %2441 = vmatpush1.xpose.msra.mxu0 0.0
    %2442 = vmatprep.subr.mxu0 0.0
    %2443 = vmatpush1.xpose.msra.mxu0 0.0
    %2444 = vmatprep.subr.mxu0 0.0
    %2445 = vmatpush1.xpose.msra.mxu0 0.0
    %2446 = vmatprep.subr.mxu0 0.0
    %2447 = vmatpush1.xpose.msra.mxu0 0.0
    %2448 = vmatprep.subr.mxu0 0.0
    %2449 = vmatpush1.xpose.msra.mxu0 0.0
    %2450 = vmatprep.subr.mxu0 0.0
    %2451 = vmatpush1.xpose.msra.mxu0 0.0
    %2452 = vmatprep.subr.mxu0 0.0
    %2453 = vmatpush1.xpose.msra.mxu0 0.0
    %2454 = vmatprep.subr.mxu0 0.0
    %2455 = vmatpush1.xpose.msra.mxu0 0.0
    %2456 = vmatprep.subr.mxu0 0.0
    %2457 = vmatpush1.xpose.msra.mxu0 0.0
    %2458 = vmatprep.subr.mxu0 0.0
    %2459 = vmatpush1.xpose.msra.mxu0 0.0
    %2460 = vmatprep.subr.mxu0 0.0
    %2461 = vmatpush1.xpose.msra.mxu0 0.0
    %2462 = vmatprep.mubr.f32.mxu0 0.0
    %v2463 = vand.u32 %v1909, 4294901760
    %2464 = vmatmul.mubr.f32.gmra.mrb[0].mxu0 %v2463
    %v2465 = vpop.f32.mrb[0].mxu0
    %v2466 = vadd.f32 %v2351, %v2465
    %v2467 = vpop.f32.mrb[0].mxu0
    %2468 = vmatprep.mubr.f32.mxu0 0.0
    %v2469 = vand.u32 %v1912, 4294901760
    %2470 = vmatmul.mubr.f32.gmra.mrb[0].mxu0 %v2469
    %v2471 = vpop.f32.mrb[0].mxu0
    %v2472 = vadd.f32 %v2359, %v2471
    %v2473 = vpop.f32.mrb[0].mxu0
    %2474 = vmatprep.mubr.f32.mxu0 0.0
    %v2475 = vand.u32 %v1915, 4294901760
    %2476 = vmatmul.mubr.f32.gmra.mrb[0].mxu0 %v2475
    %v2477 = vpop.f32.mrb[0].mxu0
    %v2478 = vadd.f32 %v2367, %v2477
    %v2479 = vpop.f32.mrb[0].mxu0
    %2480 = vmatprep.mubr.f32.mxu0 0.0
    %v2481 = vand.u32 %v1918, 4294901760
    %2482 = vmatmul.mubr.f32.gmra.mrb[0].mxu0 %v2481
    %v2483 = vpop.f32.mrb[0].mxu0
    %v2484 = vadd.f32 %v2375, %v2483
    %v2485 = vpop.f32.mrb[0].mxu0
    %2486 = vmatprep.mubr.f32.mxu0 0.0
    %v2487 = vand.u32 %v1921, 4294901760
    %2488 = vmatmul.mubr.f32.gmra.mrb[0].mxu0 %v2487
    %v2489 = vpop.f32.mrb[0].mxu0
    %v2490 = vadd.f32 %v2383, %v2489
    %v2491 = vpop.f32.mrb[0].mxu0
    %2492 = vdwg.mxu0
    %2493 = vmatprep.subr.mxu0 0.0
    %v2494 = vand.u32 %v1924, 4294901760
    %2495 = vmatpush1.xpose.msra.mxu0 %v2494
    %2496 = vmatprep.subr.mxu0 0.0
    %v2497 = vand.u32 %v1927, 4294901760
    %2498 = vmatpush1.xpose.msra.mxu0 %v2497
    %2499 = vmatprep.subr.mxu0 0.0
    %v2500 = vand.u32 %v1930, 4294901760
    %2501 = vmatpush1.xpose.msra.mxu0 %v2500
    %2502 = vmatprep.subr.mxu0 0.0
    %v2503 = vand.u32 %v1933, 4294901760
    %2504 = vmatpush1.xpose.msra.mxu0 %v2503
    %2505 = vmatprep.subr.mxu0 0.0
    %2506 = vmatpush1.xpose.msra.mxu0 0.0
    %2507 = vmatprep.subr.mxu0 0.0
    %2508 = vmatpush1.xpose.msra.mxu0 0.0
    %2509 = vmatprep.subr.mxu0 0.0
    %2510 = vmatpush1.xpose.msra.mxu0 0.0
    %2511 = vmatprep.subr.mxu0 0.0
    %2512 = vmatpush1.xpose.msra.mxu0 0.0
    %2513 = vmatprep.subr.mxu0 0.0
    %2514 = vmatpush1.xpose.msra.mxu0 0.0
    %2515 = vmatprep.subr.mxu0 0.0
    %2516 = vmatpush1.xpose.msra.mxu0 0.0
    %2517 = vmatprep.subr.mxu0 0.0
    %2518 = vmatpush1.xpose.msra.mxu0 0.0
    %2519 = vmatprep.subr.mxu0 0.0
    %2520 = vmatpush1.xpose.msra.mxu0 0.0
    %2521 = vmatprep.subr.mxu0 0.0
    %2522 = vmatpush1.xpose.msra.mxu0 0.0
    %2523 = vmatprep.subr.mxu0 0.0
    %2524 = vmatpush1.xpose.msra.mxu0 0.0
    %2525 = vmatprep.subr.mxu0 0.0
    %2526 = vmatpush1.xpose.msra.mxu0 0.0
    %2527 = vmatprep.subr.mxu0 0.0
    %2528 = vmatpush1.xpose.msra.mxu0 0.0
    %2529 = vmatprep.subr.mxu0 0.0
    %2530 = vmatpush1.xpose.msra.mxu0 0.0
    %2531 = vmatprep.subr.mxu0 0.0
    %2532 = vmatpush1.xpose.msra.mxu0 0.0
    %2533 = vmatprep.subr.mxu0 0.0
    %2534 = vmatpush1.xpose.msra.mxu0 0.0
    %2535 = vmatprep.subr.mxu0 0.0
    %2536 = vmatpush1.xpose.msra.mxu0 0.0
    %2537 = vmatprep.subr.mxu0 0.0
    %2538 = vmatpush1.xpose.msra.mxu0 0.0
    %2539 = vmatprep.subr.mxu0 0.0
    %2540 = vmatpush1.xpose.msra.mxu0 0.0
    %2541 = vmatprep.subr.mxu0 0.0
    %2542 = vmatpush1.xpose.msra.mxu0 0.0
    %2543 = vmatprep.subr.mxu0 0.0
    %2544 = vmatpush1.xpose.msra.mxu0 0.0
    %2545 = vmatprep.subr.mxu0 0.0
    %2546 = vmatpush1.xpose.msra.mxu0 0.0
    %2547 = vmatprep.subr.mxu0 0.0
    %2548 = vmatpush1.xpose.msra.mxu0 0.0
    %2549 = vmatprep.subr.mxu0 0.0
    %2550 = vmatpush1.xpose.msra.mxu0 0.0
    %2551 = vmatprep.subr.mxu0 0.0
    %2552 = vmatpush1.xpose.msra.mxu0 0.0
    %2553 = vmatprep.subr.mxu0 0.0
    %2554 = vmatpush1.xpose.msra.mxu0 0.0
    %2555 = vmatprep.subr.mxu0 0.0
    %2556 = vmatpush1.xpose.msra.mxu0 0.0
    %2557 = vmatprep.subr.mxu0 0.0
    %2558 = vmatpush1.xpose.msra.mxu0 0.0
    %2559 = vmatprep.subr.mxu0 0.0
    %2560 = vmatpush1.xpose.msra.mxu0 0.0
    %2561 = vmatprep.mubr.f32.mxu0 0.0
    %v2562 = vand.u32 %v1909, 4294901760
    %2563 = vmatmul.mubr.f32.gmra.mrb[0].mxu0 %v2562
    %v2564 = vpop.f32.mrb[0].mxu0
    %v2565 = vadd.f32 %v2466, %v2564
    %v2566 = vpop.f32.mrb[0].mxu0
    %2567 = vmatprep.mubr.f32.mxu0 0.0
    %v2568 = vand.u32 %v1912, 4294901760
    %2569 = vmatmul.mubr.f32.gmra.mrb[0].mxu0 %v2568
    %v2570 = vpop.f32.mrb[0].mxu0
    %v2571 = vadd.f32 %v2472, %v2570
    %v2572 = vpop.f32.mrb[0].mxu0
    %2573 = vmatprep.mubr.f32.mxu0 0.0
    %v2574 = vand.u32 %v1915, 4294901760
    %2575 = vmatmul.mubr.f32.gmra.mrb[0].mxu0 %v2574
    %v2576 = vpop.f32.mrb[0].mxu0
    %v2577 = vadd.f32 %v2478, %v2576
    %v2578 = vpop.f32.mrb[0].mxu0
    %2579 = vmatprep.mubr.f32.mxu0 0.0
    %v2580 = vand.u32 %v1918, 4294901760
    %2581 = vmatmul.mubr.f32.gmra.mrb[0].mxu0 %v2580
    %v2582 = vpop.f32.mrb[0].mxu0
    %v2583 = vadd.f32 %v2484, %v2582
    %v2584 = vpop.f32.mrb[0].mxu0
    %2585 = vmatprep.mubr.f32.mxu0 0.0
    %v2586 = vand.u32 %v1921, 4294901760
    %2587 = vmatmul.mubr.f32.gmra.mrb[0].mxu0 %v2586
    %v2588 = vpop.f32.mrb[0].mxu0
    %v2589 = vadd.f32 %v2490, %v2588
    %v2590 = vpop.f32.mrb[0].mxu0
    %2591 = vdwg.mxu0
    %v2593 = vlaneseq
    %v2594 = vshrl.u32 %v2593, 7
    %v2595 = vsub.s32 0, %v2594
    %v2596 = vrot.slane %v1907, %v2595
    %v2598 = vadd.f32 %v2565, %v2596
    %v2599 = vand.u32 2147483647, %v2598
    %vm2600 = vcmp.le.f32.partialorder %v2599, 0.7853982
    %vm2601 = vcmp.lt.s32.totalorder %v2598, 0
    %v2602 = vand.u32 %v2598, 2139095040
    %v2603 = vshrl.u32 %v2602, 23
    %v2604 = vsub.s32 %v2603, 127
    %v2605 = vand.u32 2147483647, %v2598
    %v2606 = vand.u32 %v2605, 8388607
    %v2607 = vor.u32 %v2606, 8388608
    %v2608 = vsub.s32 0, %v2607
    %v2609 = vadd.s32 %v2604, 1
    %vm2610 = vcmp.gt.s32.totalorder %v2609, 0
    %v2611 = vsel %vm2610, %v2609, 0
    %v2612 = vshrl.u32 %v2611, 5
    %v2613 = vand.u32 %v2611, 31
    %v2614 = vsub.s32 32, %v2613
    %v2615 = vshrl.u32 683565275, %v2614
    %v2616 = vshll.u32 683565275, %v2613
    %v2617 = vshrl.u32 2475754826, %v2614
    %v2618 = vor.u32 %v2616, %v2617
    %v2619 = vshll.u32 2475754826, %v2613
    %v2620 = vshrl.u32 2131351028, %v2614
    %v2621 = vor.u32 %v2619, %v2620
    %v2622 = vshll.u32 2131351028, %v2613
    %v2623 = vshrl.u32 2102212464, %v2614
    %v2624 = vor.u32 %v2622, %v2623
    %v2625 = vshll.u32 2102212464, %v2613
    %v2626 = vshrl.u32 920167782, %v2614
    %v2627 = vor.u32 %v2625, %v2626
    %v2628 = vshll.u32 920167782, %v2613
    %v2629 = vshrl.u32 1326507024, %v2614
    %v2630 = vor.u32 %v2628, %v2629
    %vm2631 = vcmp.lt.s32.totalorder %v2612, 1
    %vm2632 = vcmp.lt.s32.totalorder %v2612, 2
    %vm2633 = vcmp.lt.s32.totalorder %v2612, 3
    %vm2634 = vcmp.lt.s32.totalorder %v2612, 4
    %v2635 = vsel %vm2631, %v2615, %v2618
    %v2636 = vsel %vm2634, %v2624, 2102212464
    %v2637 = vsel %vm2633, %v2621, %v2636
    %v2638 = vsel %vm2632, %v2635, %v2637
    %v2639 = vsel %vm2631, %v2618, %v2621
    %v2640 = vsel %vm2634, %v2627, 920167782
    %v2641 = vsel %vm2633, %v2624, %v2640
    %v2642 = vsel %vm2632, %v2639, %v2641
    %v2643 = vsel %vm2631, %v2621, %v2624
    %v2644 = vsel %vm2634, %v2630, 1326507024
    %v2645 = vsel %vm2633, %v2627, %v2644
    %v2646 = vsel %vm2632, %v2643, %v2645
    %v2647 = vshll.u32 %v2607, 8
    %v2648 = vmul.u32.u64.compose %v2647, %v2646
    %v2649 = vextract.low.u32 %v2648
    %v2650 = vextract.high.u32 %v2648
    %v2651 = vmul.u32.u64.compose %v2647, %v2642
    %v2652 = vextract.low.u32 %v2651
    %v2653 = vextract.high.u32 %v2651
    %v2654 = vmul.u32 %v2647, %v2638
    %v2655 = vadd.s32 %v2650, %v2652
    %vm2656 = vc.u32 %v2650, %v2652
    %v2657 = vadd.s32 %v2653, 1
    %v2658 = vsel %vm2656, %v2657, %v2653
    %v2659 = vadd.s32 %v2654, %v2658
    %v2660 = vadd.s32 %v2659, 536870912
    %v2661 = vshrl.u32 %v2660, 30
    %v2662 = vshll.u32 %v2661, 30
    %v2663 = vsub.s32 %v2659, %v2662
    %vm2664 = vcmp.lt.s32.totalorder %v2663, 0
    %v2665 = vsub.s32 0, %v2663
    %v2666 = vsel %vm2664, %v2665, %v2663
    %v2667 = vclz %v2666
    %v2668 = vsub.s32 %v2667, 2
    %vm2669 = vcmp.gt.s32.totalorder 0, %v2668
    %v2670 = vsel %vm2669, 0, %v2668
    %v2671 = vsub.s32 32, %v2670
    %v2672 = vshll.u32 %v2663, %v2670
    %v2673 = vshrl.u32 %v2655, %v2671
    %v2674 = vor.u32 %v2672, %v2673
    %v2675 = vsub.s32 4294967266, %v2670
    %v2676 = vadd.s32 %v2675, 127
    %v2677 = vshll.u32 %v2676, 23
    %v2678 = vor.u32 4788187, %v2677
    %v2679 = vand.u32 2147483647, %v2678
    %v2681 = vcvt.s32.f32 %v2674
    %v2682 = vmul.f32 %v2681, %v2679
    %v2683 = vxor.u32 %v2682, 2147483648
    %v2684 = vsel %vm2601, %v2683, %v2682
    %v2685 = vsub.s32 4, %v2661
    %v2686 = vsel %vm2601, %v2685, %v2661
    %v2687 = vsel %vm2600, %v2598, %v2684
    %v2688 = vsel %vm2600, 0, %v2686
    %v2689 = vcosq.f32.pop %v2687
    %v2690 = vsinq.f32.pop %v2687
    %vm2691 = vweird.f32 %v2598
    %v2692 = vadd.s32 %v2688, 3
    %v2693 = vand.u32 %v2692, 3
    %vm2694 = vcmp.lt.s32.totalorder %v2693, 2
    %vm2695 = vcmp.eq.s32.totalorder %v2693, 0
    %v2696 = vxor.u32 %v2690, 2147483648
    %v2697 = vsel %vm2695, %v2689, %v2696
    %vm2698 = vcmp.eq.s32.totalorder %v2693, 2
    %v2699 = vxor.u32 %v2689, 2147483648
    %v2700 = vsel %vm2698, %v2699, %v2690
    %v2701 = vsel %vm2694, %v2697, %v2700
    %v2702 = vsel %vm2691, nan, %v2701
    %v2703 = vand.u32 2147483647, %v2598
    %vm2704 = vcmp.le.f32.partialorder %v2703, 0.7853982
    %vm2705 = vcmp.lt.s32.totalorder %v2598, 0
    %v2706 = vand.u32 %v2598, 2139095040
    %v2707 = vshrl.u32 %v2706, 23
    %v2708 = vsub.s32 %v2707, 127
    %v2709 = vand.u32 2147483647, %v2598
    %v2710 = vand.u32 %v2709, 8388607
    %v2711 = vor.u32 %v2710, 8388608
    %v2712 = vsub.s32 0, %v2711
    %v2713 = vadd.s32 %v2708, 1
    %vm2714 = vcmp.gt.s32.totalorder %v2713, 0
    %v2715 = vsel %vm2714, %v2713, 0
    %v2716 = vshrl.u32 %v2715, 5
    %v2717 = vand.u32 %v2715, 31
    %v2718 = vsub.s32 32, %v2717
    %v2719 = vshrl.u32 683565275, %v2718
    %v2720 = vshll.u32 683565275, %v2717
    %v2721 = vshrl.u32 2475754826, %v2718
    %v2722 = vor.u32 %v2720, %v2721
    %v2723 = vshll.u32 2475754826, %v2717
    %v2724 = vshrl.u32 2131351028, %v2718
    %v2725 = vor.u32 %v2723, %v2724
    %v2726 = vshll.u32 2131351028, %v2717
    %v2727 = vshrl.u32 2102212464, %v2718
    %v2728 = vor.u32 %v2726, %v2727
    %v2729 = vshll.u32 2102212464, %v2717
    %v2730 = vshrl.u32 920167782, %v2718
    %v2731 = vor.u32 %v2729, %v2730
    %v2732 = vshll.u32 920167782, %v2717
    %v2733 = vshrl.u32 1326507024, %v2718
    %v2734 = vor.u32 %v2732, %v2733
    %vm2735 = vcmp.lt.s32.totalorder %v2716, 1
    %vm2736 = vcmp.lt.s32.totalorder %v2716, 2
    %vm2737 = vcmp.lt.s32.totalorder %v2716, 3
    %vm2738 = vcmp.lt.s32.totalorder %v2716, 4
    %v2739 = vsel %vm2735, %v2719, %v2722
    %v2740 = vsel %vm2738, %v2728, 2102212464
    %v2741 = vsel %vm2737, %v2725, %v2740
    %v2742 = vsel %vm2736, %v2739, %v2741
    %v2743 = vsel %vm2735, %v2722, %v2725
    %v2744 = vsel %vm2738, %v2731, 920167782
    %v2745 = vsel %vm2737, %v2728, %v2744
    %v2746 = vsel %vm2736, %v2743, %v2745
    %v2747 = vsel %vm2735, %v2725, %v2728
    %v2748 = vsel %vm2738, %v2734, 1326507024
    %v2749 = vsel %vm2737, %v2731, %v2748
    %v2750 = vsel %vm2736, %v2747, %v2749
    %v2751 = vshll.u32 %v2711, 8
    %v2752 = vmul.u32.u64.compose %v2751, %v2750
    %v2753 = vextract.low.u32 %v2752
    %v2754 = vextract.high.u32 %v2752
    %v2755 = vmul.u32.u64.compose %v2751, %v2746
    %v2756 = vextract.low.u32 %v2755
    %v2757 = vextract.high.u32 %v2755
    %v2758 = vmul.u32 %v2751, %v2742
    %v2759 = vadd.s32 %v2754, %v2756
    %vm2760 = vc.u32 %v2754, %v2756
    %v2761 = vadd.s32 %v2757, 1
    %v2762 = vsel %vm2760, %v2761, %v2757
    %v2763 = vadd.s32 %v2758, %v2762
    %v2764 = vadd.s32 %v2763, 536870912
    %v2765 = vshrl.u32 %v2764, 30
    %v2766 = vshll.u32 %v2765, 30
    %v2767 = vsub.s32 %v2763, %v2766
    %vm2768 = vcmp.lt.s32.totalorder %v2767, 0
    %v2769 = vsub.s32 0, %v2767
    %v2770 = vsel %vm2768, %v2769, %v2767
    %v2771 = vclz %v2770
    %v2772 = vsub.s32 %v2771, 2
    %vm2773 = vcmp.gt.s32.totalorder 0, %v2772
    %v2774 = vsel %vm2773, 0, %v2772
    %v2775 = vsub.s32 32, %v2774
    %v2776 = vshll.u32 %v2767, %v2774
    %v2777 = vshrl.u32 %v2759, %v2775
    %v2778 = vor.u32 %v2776, %v2777
    %v2779 = vsub.s32 4294967266, %v2774
    %v2780 = vadd.s32 %v2779, 127
    %v2781 = vshll.u32 %v2780, 23
    %v2782 = vor.u32 4788187, %v2781
    %v2783 = vand.u32 2147483647, %v2782
    %v2785 = vcvt.s32.f32 %v2778
    %v2786 = vmul.f32 %v2785, %v2783
    %v2787 = vxor.u32 %v2786, 2147483648
    %v2788 = vsel %vm2705, %v2787, %v2786
    %v2789 = vsub.s32 4, %v2765
    %v2790 = vsel %vm2705, %v2789, %v2765
    %v2791 = vsel %vm2704, %v2598, %v2788
    %v2792 = vsel %vm2704, 0, %v2790
    %v2793 = vcosq.f32.pop %v2791
    %v2794 = vsinq.f32.pop %v2791
    %vm2795 = vweird.f32 %v2598
    %v2796 = vand.u32 %v2792, 3
    %vm2797 = vcmp.lt.s32.totalorder %v2796, 2
    %vm2798 = vcmp.eq.s32.totalorder %v2796, 0
    %v2799 = vxor.u32 %v2794, 2147483648
    %v2800 = vsel %vm2798, %v2793, %v2799
    %vm2801 = vcmp.eq.s32.totalorder %v2796, 2
    %v2802 = vxor.u32 %v2793, 2147483648
    %v2803 = vsel %vm2801, %v2802, %v2794
    %v2804 = vsel %vm2797, %v2800, %v2803
    %v2805 = vsel %vm2795, nan, %v2804
    %v2806 = vsub.f32 0.0, %v2702
    %2807 = vst.msk [vmem:[#allocation7] sm:$0xff] %vm53, %v2702
    %v2808 = vmul.f32 %v2805, %v2571
    %v2809 = vmul.f32 %v2805, %v2577
    %2810 = vst.msk [vmem:[%s956] sm:$0xff] %vm53, %v2808
    %2811 = vst.msk [vmem:[%s956 + $0x8] sm:$0xff] %vm53, %v2809
    %v2812 = vmul.f32 %v2805, %v2583
    %v2813 = vmul.f32 %v2805, %v2589
    %v2814 = vmul.f32 %v2571, %v2571
    %v2815 = vmul.f32 %v2577, %v2577
    %v2816 = vmul.f32 %v2806, %v2814
    %v2817 = vmul.f32 %v2806, %v2815
    %v2818 = vadd.f32 %v2812, %v2816
    %v2819 = vadd.f32 %v2813, %v2817
    %2820 = vst.msk [vmem:[%s967] sm:$0xff] %vm53, %v2818
    %2821 = vst.msk [vmem:[%s967 + $0x8] sm:$0xff] %vm53, %v2819
    %v2822 = vld [vmem:[#allocation7] sm:$0xff]
    %v2823 = vld [vmem:[#allocation7 + $0x8] sm:$0xff]
    %v2824 = vld [vmem:[#allocation7 + $0x10] sm:$0xff]
    %v2825 = vld [vmem:[#allocation7 + $0x18] sm:$0xff]
    %v2826 = vld [vmem:[#allocation7 + $0x20] sm:$0xff]
    %s2827 = scalar_lea.vmem [#allocation5], 96
    %v2828 = vld [vmem:[%s2827] sm:$0xff]
    %v2829 = vld [vmem:[%s2827 + $0x8] sm:$0xff]
    %v2830 = vld [vmem:[%s2827 + $0x10] sm:$0xff]
    %v2831 = vld [vmem:[%s2827 + $0x18] sm:$0xff]
    %s2832 = scalar_lea.vmem %s2, 3
    %v2833 = vld [vmem:[%s2832] sm:$0x1]
    %v2835 = vsel %vm53, %v2822, 0
    %v2838 = vsel %vm53, %v2823, 0
    %v2841 = vsel %vm53, %v2824, 0
    %v2844 = vsel %vm53, %v2825, 0
    %v2847 = vsel %vm53, %v2826, 0
    %v2850 = vsel %vm53, %v2828, 0
    %v2853 = vsel %vm53, %v2829, 0
    %v2856 = vsel %vm53, %v2830, 0
    %v2859 = vsel %vm53, %v2831, 0
    %2861 = vmatprep.subr.mxu0 0.0
    %v2862 = vand.u32 %v2850, 4294901760
    %2863 = vmatpush1.xpose.msra.mxu0 %v2862
    %2864 = vmatprep.subr.mxu0 0.0
    %v2865 = vand.u32 %v2853, 4294901760
    %2866 = vmatpush1.xpose.msra.mxu0 %v2865
    %2867 = vmatprep.subr.mxu0 0.0
    %v2868 = vand.u32 %v2856, 4294901760
    %2869 = vmatpush1.xpose.msra.mxu0 %v2868
    %2870 = vmatprep.subr.mxu0 0.0
    %v2871 = vand.u32 %v2859, 4294901760
    %2872 = vmatpush1.xpose.msra.mxu0 %v2871
    %2873 = vmatprep.subr.mxu0 0.0
    %2874 = vmatpush1.xpose.msra.mxu0 0.0
    %2875 = vmatprep.subr.mxu0 0.0
    %2876 = vmatpush1.xpose.msra.mxu0 0.0
    %2877 = vmatprep.subr.mxu0 0.0
    %2878 = vmatpush1.xpose.msra.mxu0 0.0
    %2879 = vmatprep.subr.mxu0 0.0
    %2880 = vmatpush1.xpose.msra.mxu0 0.0
    %2881 = vmatprep.subr.mxu0 0.0
    %2882 = vmatpush1.xpose.msra.mxu0 0.0
    %2883 = vmatprep.subr.mxu0 0.0
    %2884 = vmatpush1.xpose.msra.mxu0 0.0
    %2885 = vmatprep.subr.mxu0 0.0
    %2886 = vmatpush1.xpose.msra.mxu0 0.0
    %2887 = vmatprep.subr.mxu0 0.0
    %2888 = vmatpush1.xpose.msra.mxu0 0.0
    %2889 = vmatprep.subr.mxu0 0.0
    %2890 = vmatpush1.xpose.msra.mxu0 0.0
    %2891 = vmatprep.subr.mxu0 0.0
    %2892 = vmatpush1.xpose.msra.mxu0 0.0
    %2893 = vmatprep.subr.mxu0 0.0
    %2894 = vmatpush1.xpose.msra.mxu0 0.0
    %2895 = vmatprep.subr.mxu0 0.0
    %2896 = vmatpush1.xpose.msra.mxu0 0.0
    %2897 = vmatprep.subr.mxu0 0.0
    %2898 = vmatpush1.xpose.msra.mxu0 0.0
    %2899 = vmatprep.subr.mxu0 0.0
    %2900 = vmatpush1.xpose.msra.mxu0 0.0
    %2901 = vmatprep.subr.mxu0 0.0
    %2902 = vmatpush1.xpose.msra.mxu0 0.0
    %2903 = vmatprep.subr.mxu0 0.0
    %2904 = vmatpush1.xpose.msra.mxu0 0.0
    %2905 = vmatprep.subr.mxu0 0.0
    %2906 = vmatpush1.xpose.msra.mxu0 0.0
    %2907 = vmatprep.subr.mxu0 0.0
    %2908 = vmatpush1.xpose.msra.mxu0 0.0
    %2909 = vmatprep.subr.mxu0 0.0
    %2910 = vmatpush1.xpose.msra.mxu0 0.0
    %2911 = vmatprep.subr.mxu0 0.0
    %2912 = vmatpush1.xpose.msra.mxu0 0.0
    %2913 = vmatprep.subr.mxu0 0.0
    %2914 = vmatpush1.xpose.msra.mxu0 0.0
    %2915 = vmatprep.subr.mxu0 0.0
    %2916 = vmatpush1.xpose.msra.mxu0 0.0
    %2917 = vmatprep.subr.mxu0 0.0
    %2918 = vmatpush1.xpose.msra.mxu0 0.0
    %2919 = vmatprep.subr.mxu0 0.0
    %2920 = vmatpush1.xpose.msra.mxu0 0.0
    %2921 = vmatprep.subr.mxu0 0.0
    %2922 = vmatpush1.xpose.msra.mxu0 0.0
    %2923 = vmatprep.subr.mxu0 0.0
    %2924 = vmatpush1.xpose.msra.mxu0 0.0
    %2925 = vmatprep.subr.mxu0 0.0
    %2926 = vmatpush1.xpose.msra.mxu0 0.0
    %2927 = vmatprep.subr.mxu0 0.0
    %2928 = vmatpush1.xpose.msra.mxu0 0.0
    %2929 = vmatprep.mubr.f32.mxu0 0.0
    %v2930 = vand.u32 %v2835, 4294901760
    %v2931 = vsub.f32 %v2835, %v2930
    %v2932 = vand.u32 %v2931, 4294901760
    %v2933 = vsub.f32 %v2931, %v2932
    %v2934 = vand.u32 %v2933, 4294901760
    %2935 = vmatmul.mubr.f32.gmra.mrb[0].mxu0 %v2934
    %v2936 = vpop.f32.mrb[0].mxu0
    %v2937 = vadd.f32 0.0, %v2936
    %v2938 = vpop.f32.mrb[0].mxu0
    %2939 = vmatprep.mubr.f32.mxu0 0.0
    %v2940 = vand.u32 %v2838, 4294901760
    %v2941 = vsub.f32 %v2838, %v2940
    %v2942 = vand.u32 %v2941, 4294901760
    %v2943 = vsub.f32 %v2941, %v2942
    %v2944 = vand.u32 %v2943, 4294901760
    %2945 = vmatmul.mubr.f32.gmra.mrb[0].mxu0 %v2944
    %v2946 = vpop.f32.mrb[0].mxu0
    %v2947 = vadd.f32 0.0, %v2946
    %v2948 = vpop.f32.mrb[0].mxu0
    %2949 = vmatprep.mubr.f32.mxu0 0.0
    %v2950 = vand.u32 %v2841, 4294901760
    %v2951 = vsub.f32 %v2841, %v2950
    %v2952 = vand.u32 %v2951, 4294901760
    %v2953 = vsub.f32 %v2951, %v2952
    %v2954 = vand.u32 %v2953, 4294901760
    %2955 = vmatmul.mubr.f32.gmra.mrb[0].mxu0 %v2954
    %v2956 = vpop.f32.mrb[0].mxu0
    %v2957 = vadd.f32 0.0, %v2956
    %v2958 = vpop.f32.mrb[0].mxu0
    %2959 = vmatprep.mubr.f32.mxu0 0.0
    %v2960 = vand.u32 %v2844, 4294901760
    %v2961 = vsub.f32 %v2844, %v2960
    %v2962 = vand.u32 %v2961, 4294901760
    %v2963 = vsub.f32 %v2961, %v2962
    %v2964 = vand.u32 %v2963, 4294901760
    %2965 = vmatmul.mubr.f32.gmra.mrb[0].mxu0 %v2964
    %v2966 = vpop.f32.mrb[0].mxu0
    %v2967 = vadd.f32 0.0, %v2966
    %v2968 = vpop.f32.mrb[0].mxu0
    %2969 = vmatprep.mubr.f32.mxu0 0.0
    %v2970 = vand.u32 %v2847, 4294901760
    %v2971 = vsub.f32 %v2847, %v2970
    %v2972 = vand.u32 %v2971, 4294901760
    %v2973 = vsub.f32 %v2971, %v2972
    %v2974 = vand.u32 %v2973, 4294901760
    %2975 = vmatmul.mubr.f32.gmra.mrb[0].mxu0 %v2974
    %v2976 = vpop.f32.mrb[0].mxu0
    %v2977 = vadd.f32 0.0, %v2976
    %v2978 = vpop.f32.mrb[0].mxu0
    %2979 = vdwg.mxu0
    %2980 = vmatprep.subr.mxu0 0.0
    %v2981 = vand.u32 %v2850, 4294901760
    %v2982 = vsub.f32 %v2850, %v2981
    %v2983 = vand.u32 %v2982, 4294901760
    %v2984 = vsub.f32 %v2982, %v2983
    %v2985 = vand.u32 %v2984, 4294901760
    %2986 = vmatpush1.xpose.msra.mxu0 %v2985
    %2987 = vmatprep.subr.mxu0 0.0
    %v2988 = vand.u32 %v2853, 4294901760
    %v2989 = vsub.f32 %v2853, %v2988
    %v2990 = vand.u32 %v2989, 4294901760
    %v2991 = vsub.f32 %v2989, %v2990
    %v2992 = vand.u32 %v2991, 4294901760
    %2993 = vmatpush1.xpose.msra.mxu0 %v2992
    %2994 = vmatprep.subr.mxu0 0.0
    %v2995 = vand.u32 %v2856, 4294901760
    %v2996 = vsub.f32 %v2856, %v2995
    %v2997 = vand.u32 %v2996, 4294901760
    %v2998 = vsub.f32 %v2996, %v2997
    %v2999 = vand.u32 %v2998, 4294901760
    %3000 = vmatpush1.xpose.msra.mxu0 %v2999
    %3001 = vmatprep.subr.mxu0 0.0
    %v3002 = vand.u32 %v2859, 4294901760
    %v3003 = vsub.f32 %v2859, %v3002
    %v3004 = vand.u32 %v3003, 4294901760
    %v3005 = vsub.f32 %v3003, %v3004
    %v3006 = vand.u32 %v3005, 4294901760
    %3007 = vmatpush1.xpose.msra.mxu0 %v3006
    %3008 = vmatprep.subr.mxu0 0.0
    %3009 = vmatpush1.xpose.msra.mxu0 0.0
    %3010 = vmatprep.subr.mxu0 0.0
    %3011 = vmatpush1.xpose.msra.mxu0 0.0
    %3012 = vmatprep.subr.mxu0 0.0
    %3013 = vmatpush1.xpose.msra.mxu0 0.0
    %3014 = vmatprep.subr.mxu0 0.0
    %3015 = vmatpush1.xpose.msra.mxu0 0.0
    %3016 = vmatprep.subr.mxu0 0.0
    %3017 = vmatpush1.xpose.msra.mxu0 0.0
    %3018 = vmatprep.subr.mxu0 0.0
    %3019 = vmatpush1.xpose.msra.mxu0 0.0
    %3020 = vmatprep.subr.mxu0 0.0
    %3021 = vmatpush1.xpose.msra.mxu0 0.0
    %3022 = vmatprep.subr.mxu0 0.0
    %3023 = vmatpush1.xpose.msra.mxu0 0.0
    %3024 = vmatprep.subr.mxu0 0.0
    %3025 = vmatpush1.xpose.msra.mxu0 0.0
    %3026 = vmatprep.subr.mxu0 0.0
    %3027 = vmatpush1.xpose.msra.mxu0 0.0
    %3028 = vmatprep.subr.mxu0 0.0
    %3029 = vmatpush1.xpose.msra.mxu0 0.0
    %3030 = vmatprep.subr.mxu0 0.0
    %3031 = vmatpush1.xpose.msra.mxu0 0.0
    %3032 = vmatprep.subr.mxu0 0.0
    %3033 = vmatpush1.xpose.msra.mxu0 0.0
    %3034 = vmatprep.subr.mxu0 0.0
    %3035 = vmatpush1.xpose.msra.mxu0 0.0
    %3036 = vmatprep.subr.mxu0 0.0
    %3037 = vmatpush1.xpose.msra.mxu0 0.0
    %3038 = vmatprep.subr.mxu0 0.0
    %3039 = vmatpush1.xpose.msra.mxu0 0.0
    %3040 = vmatprep.subr.mxu0 0.0
    %3041 = vmatpush1.xpose.msra.mxu0 0.0
    %3042 = vmatprep.subr.mxu0 0.0
    %3043 = vmatpush1.xpose.msra.mxu0 0.0
    %3044 = vmatprep.subr.mxu0 0.0
    %3045 = vmatpush1.xpose.msra.mxu0 0.0
    %3046 = vmatprep.subr.mxu0 0.0
    %3047 = vmatpush1.xpose.msra.mxu0 0.0
    %3048 = vmatprep.subr.mxu0 0.0
    %3049 = vmatpush1.xpose.msra.mxu0 0.0
    %3050 = vmatprep.subr.mxu0 0.0
    %3051 = vmatpush1.xpose.msra.mxu0 0.0
    %3052 = vmatprep.subr.mxu0 0.0
    %3053 = vmatpush1.xpose.msra.mxu0 0.0
    %3054 = vmatprep.subr.mxu0 0.0
    %3055 = vmatpush1.xpose.msra.mxu0 0.0
    %3056 = vmatprep.subr.mxu0 0.0
    %3057 = vmatpush1.xpose.msra.mxu0 0.0
    %3058 = vmatprep.subr.mxu0 0.0
    %3059 = vmatpush1.xpose.msra.mxu0 0.0
    %3060 = vmatprep.subr.mxu0 0.0
    %3061 = vmatpush1.xpose.msra.mxu0 0.0
    %3062 = vmatprep.subr.mxu0 0.0
    %3063 = vmatpush1.xpose.msra.mxu0 0.0
    %3064 = vmatprep.mubr.f32.mxu0 0.0
    %v3065 = vand.u32 %v2835, 4294901760
    %3066 = vmatmul.mubr.f32.gmra.mrb[0].mxu0 %v3065
    %v3067 = vpop.f32.mrb[0].mxu0
    %v3068 = vadd.f32 %v2937, %v3067
    %v3069 = vpop.f32.mrb[0].mxu0
    %3070 = vmatprep.mubr.f32.mxu0 0.0
    %v3071 = vand.u32 %v2838, 4294901760
    %3072 = vmatmul.mubr.f32.gmra.mrb[0].mxu0 %v3071
    %v3073 = vpop.f32.mrb[0].mxu0
    %v3074 = vadd.f32 %v2947, %v3073
    %v3075 = vpop.f32.mrb[0].mxu0
    %3076 = vmatprep.mubr.f32.mxu0 0.0
    %v3077 = vand.u32 %v2841, 4294901760
    %3078 = vmatmul.mubr.f32.gmra.mrb[0].mxu0 %v3077
    %v3079 = vpop.f32.mrb[0].mxu0
    %v3080 = vadd.f32 %v2957, %v3079
    %v3081 = vpop.f32.mrb[0].mxu0
    %3082 = vmatprep.mubr.f32.mxu0 0.0
    %v3083 = vand.u32 %v2844, 4294901760
    %3084 = vmatmul.mubr.f32.gmra.mrb[0].mxu0 %v3083
    %v3085 = vpop.f32.mrb[0].mxu0
    %v3086 = vadd.f32 %v2967, %v3085
    %v3087 = vpop.f32.mrb[0].mxu0
    %3088 = vmatprep.mubr.f32.mxu0 0.0
    %v3089 = vand.u32 %v2847, 4294901760
    %3090 = vmatmul.mubr.f32.gmra.mrb[0].mxu0 %v3089
    %v3091 = vpop.f32.mrb[0].mxu0
    %v3092 = vadd.f32 %v2977, %v3091
    %v3093 = vpop.f32.mrb[0].mxu0
    %3094 = vdwg.mxu0
    %3095 = vmatprep.subr.mxu0 0.0
    %v3096 = vand.u32 %v2850, 4294901760
    %v3097 = vsub.f32 %v2850, %v3096
    %3098 = vmatpush1.xpose.msra.mxu0 %v3097
    %3099 = vmatprep.subr.mxu0 0.0
    %v3100 = vand.u32 %v2853, 4294901760
    %v3101 = vsub.f32 %v2853, %v3100
    %3102 = vmatpush1.xpose.msra.mxu0 %v3101
    %3103 = vmatprep.subr.mxu0 0.0
    %v3104 = vand.u32 %v2856, 4294901760
    %v3105 = vsub.f32 %v2856, %v3104
    %3106 = vmatpush1.xpose.msra.mxu0 %v3105
    %3107 = vmatprep.subr.mxu0 0.0
    %v3108 = vand.u32 %v2859, 4294901760
    %v3109 = vsub.f32 %v2859, %v3108
    %3110 = vmatpush1.xpose.msra.mxu0 %v3109
    %3111 = vmatprep.subr.mxu0 0.0
    %3112 = vmatpush1.xpose.msra.mxu0 0.0
    %3113 = vmatprep.subr.mxu0 0.0
    %3114 = vmatpush1.xpose.msra.mxu0 0.0
    %3115 = vmatprep.subr.mxu0 0.0
    %3116 = vmatpush1.xpose.msra.mxu0 0.0
    %3117 = vmatprep.subr.mxu0 0.0
    %3118 = vmatpush1.xpose.msra.mxu0 0.0
    %3119 = vmatprep.subr.mxu0 0.0
    %3120 = vmatpush1.xpose.msra.mxu0 0.0
    %3121 = vmatprep.subr.mxu0 0.0
    %3122 = vmatpush1.xpose.msra.mxu0 0.0
    %3123 = vmatprep.subr.mxu0 0.0
    %3124 = vmatpush1.xpose.msra.mxu0 0.0
    %3125 = vmatprep.subr.mxu0 0.0
    %3126 = vmatpush1.xpose.msra.mxu0 0.0
    %3127 = vmatprep.subr.mxu0 0.0
    %3128 = vmatpush1.xpose.msra.mxu0 0.0
    %3129 = vmatprep.subr.mxu0 0.0
    %3130 = vmatpush1.xpose.msra.mxu0 0.0
    %3131 = vmatprep.subr.mxu0 0.0
    %3132 = vmatpush1.xpose.msra.mxu0 0.0
    %3133 = vmatprep.subr.mxu0 0.0
    %3134 = vmatpush1.xpose.msra.mxu0 0.0
    %3135 = vmatprep.subr.mxu0 0.0
    %3136 = vmatpush1.xpose.msra.mxu0 0.0
    %3137 = vmatprep.subr.mxu0 0.0
    %3138 = vmatpush1.xpose.msra.mxu0 0.0
    %3139 = vmatprep.subr.mxu0 0.0
    %3140 = vmatpush1.xpose.msra.mxu0 0.0
    %3141 = vmatprep.subr.mxu0 0.0
    %3142 = vmatpush1.xpose.msra.mxu0 0.0
    %3143 = vmatprep.subr.mxu0 0.0
    %3144 = vmatpush1.xpose.msra.mxu0 0.0
    %3145 = vmatprep.subr.mxu0 0.0
    %3146 = vmatpush1.xpose.msra.mxu0 0.0
    %3147 = vmatprep.subr.mxu0 0.0
    %3148 = vmatpush1.xpose.msra.mxu0 0.0
    %3149 = vmatprep.subr.mxu0 0.0
    %3150 = vmatpush1.xpose.msra.mxu0 0.0
    %3151 = vmatprep.subr.mxu0 0.0
    %3152 = vmatpush1.xpose.msra.mxu0 0.0
    %3153 = vmatprep.subr.mxu0 0.0
    %3154 = vmatpush1.xpose.msra.mxu0 0.0
    %3155 = vmatprep.subr.mxu0 0.0
    %3156 = vmatpush1.xpose.msra.mxu0 0.0
    %3157 = vmatprep.subr.mxu0 0.0
    %3158 = vmatpush1.xpose.msra.mxu0 0.0
    %3159 = vmatprep.subr.mxu0 0.0
    %3160 = vmatpush1.xpose.msra.mxu0 0.0
    %3161 = vmatprep.subr.mxu0 0.0
    %3162 = vmatpush1.xpose.msra.mxu0 0.0
    %3163 = vmatprep.subr.mxu0 0.0
    %3164 = vmatpush1.xpose.msra.mxu0 0.0
    %3165 = vmatprep.subr.mxu0 0.0
    %3166 = vmatpush1.xpose.msra.mxu0 0.0
    %3167 = vmatprep.mubr.f32.mxu0 0.0
    %v3168 = vand.u32 %v2835, 4294901760
    %v3169 = vsub.f32 %v2835, %v3168
    %3170 = vmatmul.mubr.f32.gmra.mrb[0].mxu0 %v3169
    %v3171 = vpop.f32.mrb[0].mxu0
    %v3172 = vadd.f32 %v3068, %v3171
    %v3173 = vpop.f32.mrb[0].mxu0
    %3174 = vmatprep.mubr.f32.mxu0 0.0
    %v3175 = vand.u32 %v2838, 4294901760
    %v3176 = vsub.f32 %v2838, %v3175
    %3177 = vmatmul.mubr.f32.gmra.mrb[0].mxu0 %v3176
    %v3178 = vpop.f32.mrb[0].mxu0
    %v3179 = vadd.f32 %v3074, %v3178
    %v3180 = vpop.f32.mrb[0].mxu0
    %3181 = vmatprep.mubr.f32.mxu0 0.0
    %v3182 = vand.u32 %v2841, 4294901760
    %v3183 = vsub.f32 %v2841, %v3182
    %3184 = vmatmul.mubr.f32.gmra.mrb[0].mxu0 %v3183
    %v3185 = vpop.f32.mrb[0].mxu0
    %v3186 = vadd.f32 %v3080, %v3185
    %v3187 = vpop.f32.mrb[0].mxu0
    %3188 = vmatprep.mubr.f32.mxu0 0.0
    %v3189 = vand.u32 %v2844, 4294901760
    %v3190 = vsub.f32 %v2844, %v3189
    %3191 = vmatmul.mubr.f32.gmra.mrb[0].mxu0 %v3190
    %v3192 = vpop.f32.mrb[0].mxu0
    %v3193 = vadd.f32 %v3086, %v3192
    %v3194 = vpop.f32.mrb[0].mxu0
    %3195 = vmatprep.mubr.f32.mxu0 0.0
    %v3196 = vand.u32 %v2847, 4294901760
    %v3197 = vsub.f32 %v2847, %v3196
    %3198 = vmatmul.mubr.f32.gmra.mrb[0].mxu0 %v3197
    %v3199 = vpop.f32.mrb[0].mxu0
    %v3200 = vadd.f32 %v3092, %v3199
    %v3201 = vpop.f32.mrb[0].mxu0
    %3202 = vdwg.mxu0
    %3203 = vmatprep.subr.mxu0 0.0
    %v3204 = vand.u32 %v2850, 4294901760
    %3205 = vmatpush1.xpose.msra.mxu0 %v3204
    %3206 = vmatprep.subr.mxu0 0.0
    %v3207 = vand.u32 %v2853, 4294901760
    %3208 = vmatpush1.xpose.msra.mxu0 %v3207
    %3209 = vmatprep.subr.mxu0 0.0
    %v3210 = vand.u32 %v2856, 4294901760
    %3211 = vmatpush1.xpose.msra.mxu0 %v3210
    %3212 = vmatprep.subr.mxu0 0.0
    %v3213 = vand.u32 %v2859, 4294901760
    %3214 = vmatpush1.xpose.msra.mxu0 %v3213
    %3215 = vmatprep.subr.mxu0 0.0
    %3216 = vmatpush1.xpose.msra.mxu0 0.0
    %3217 = vmatprep.subr.mxu0 0.0
    %3218 = vmatpush1.xpose.msra.mxu0 0.0
    %3219 = vmatprep.subr.mxu0 0.0
    %3220 = vmatpush1.xpose.msra.mxu0 0.0
    %3221 = vmatprep.subr.mxu0 0.0
    %3222 = vmatpush1.xpose.msra.mxu0 0.0
    %3223 = vmatprep.subr.mxu0 0.0
    %3224 = vmatpush1.xpose.msra.mxu0 0.0
    %3225 = vmatprep.subr.mxu0 0.0
    %3226 = vmatpush1.xpose.msra.mxu0 0.0
    %3227 = vmatprep.subr.mxu0 0.0
    %3228 = vmatpush1.xpose.msra.mxu0 0.0
    %3229 = vmatprep.subr.mxu0 0.0
    %3230 = vmatpush1.xpose.msra.mxu0 0.0
    %3231 = vmatprep.subr.mxu0 0.0
    %3232 = vmatpush1.xpose.msra.mxu0 0.0
    %3233 = vmatprep.subr.mxu0 0.0
    %3234 = vmatpush1.xpose.msra.mxu0 0.0
    %3235 = vmatprep.subr.mxu0 0.0
    %3236 = vmatpush1.xpose.msra.mxu0 0.0
    %3237 = vmatprep.subr.mxu0 0.0
    %3238 = vmatpush1.xpose.msra.mxu0 0.0
    %3239 = vmatprep.subr.mxu0 0.0
    %3240 = vmatpush1.xpose.msra.mxu0 0.0
    %3241 = vmatprep.subr.mxu0 0.0
    %3242 = vmatpush1.xpose.msra.mxu0 0.0
    %3243 = vmatprep.subr.mxu0 0.0
    %3244 = vmatpush1.xpose.msra.mxu0 0.0
    %3245 = vmatprep.subr.mxu0 0.0
    %3246 = vmatpush1.xpose.msra.mxu0 0.0
    %3247 = vmatprep.subr.mxu0 0.0
    %3248 = vmatpush1.xpose.msra.mxu0 0.0
    %3249 = vmatprep.subr.mxu0 0.0
    %3250 = vmatpush1.xpose.msra.mxu0 0.0
    %3251 = vmatprep.subr.mxu0 0.0
    %3252 = vmatpush1.xpose.msra.mxu0 0.0
    %3253 = vmatprep.subr.mxu0 0.0
    %3254 = vmatpush1.xpose.msra.mxu0 0.0
    %3255 = vmatprep.subr.mxu0 0.0
    %3256 = vmatpush1.xpose.msra.mxu0 0.0
    %3257 = vmatprep.subr.mxu0 0.0
    %3258 = vmatpush1.xpose.msra.mxu0 0.0
    %3259 = vmatprep.subr.mxu0 0.0
    %3260 = vmatpush1.xpose.msra.mxu0 0.0
    %3261 = vmatprep.subr.mxu0 0.0
    %3262 = vmatpush1.xpose.msra.mxu0 0.0
    %3263 = vmatprep.subr.mxu0 0.0
    %3264 = vmatpush1.xpose.msra.mxu0 0.0
    %3265 = vmatprep.subr.mxu0 0.0
    %3266 = vmatpush1.xpose.msra.mxu0 0.0
    %3267 = vmatprep.subr.mxu0 0.0
    %3268 = vmatpush1.xpose.msra.mxu0 0.0
    %3269 = vmatprep.subr.mxu0 0.0
    %3270 = vmatpush1.xpose.msra.mxu0 0.0
    %3271 = vmatprep.mubr.f32.mxu0 0.0
    %v3272 = vand.u32 %v2835, 4294901760
    %v3273 = vsub.f32 %v2835, %v3272
    %v3274 = vand.u32 %v3273, 4294901760
    %3275 = vmatmul.mubr.f32.gmra.mrb[0].mxu0 %v3274
    %v3276 = vpop.f32.mrb[0].mxu0
    %v3277 = vadd.f32 %v3172, %v3276
    %v3278 = vpop.f32.mrb[0].mxu0
    %3279 = vmatprep.mubr.f32.mxu0 0.0
    %v3280 = vand.u32 %v2838, 4294901760
    %v3281 = vsub.f32 %v2838, %v3280
    %v3282 = vand.u32 %v3281, 4294901760
    %3283 = vmatmul.mubr.f32.gmra.mrb[0].mxu0 %v3282
    %v3284 = vpop.f32.mrb[0].mxu0
    %v3285 = vadd.f32 %v3179, %v3284
    %v3286 = vpop.f32.mrb[0].mxu0
    %3287 = vmatprep.mubr.f32.mxu0 0.0
    %v3288 = vand.u32 %v2841, 4294901760
    %v3289 = vsub.f32 %v2841, %v3288
    %v3290 = vand.u32 %v3289, 4294901760
    %3291 = vmatmul.mubr.f32.gmra.mrb[0].mxu0 %v3290
    %v3292 = vpop.f32.mrb[0].mxu0
    %v3293 = vadd.f32 %v3186, %v3292
    %v3294 = vpop.f32.mrb[0].mxu0
    %3295 = vmatprep.mubr.f32.mxu0 0.0
    %v3296 = vand.u32 %v2844, 4294901760
    %v3297 = vsub.f32 %v2844, %v3296
    %v3298 = vand.u32 %v3297, 4294901760
    %3299 = vmatmul.mubr.f32.gmra.mrb[0].mxu0 %v3298
    %v3300 = vpop.f32.mrb[0].mxu0
    %v3301 = vadd.f32 %v3193, %v3300
    %v3302 = vpop.f32.mrb[0].mxu0
    %3303 = vmatprep.mubr.f32.mxu0 0.0
    %v3304 = vand.u32 %v2847, 4294901760
    %v3305 = vsub.f32 %v2847, %v3304
    %v3306 = vand.u32 %v3305, 4294901760
    %3307 = vmatmul.mubr.f32.gmra.mrb[0].mxu0 %v3306
    %v3308 = vpop.f32.mrb[0].mxu0
    %v3309 = vadd.f32 %v3200, %v3308
    %v3310 = vpop.f32.mrb[0].mxu0
    %3311 = vdwg.mxu0
    %3312 = vmatprep.subr.mxu0 0.0
    %v3313 = vand.u32 %v2850, 4294901760
    %v3314 = vsub.f32 %v2850, %v3313
    %v3315 = vand.u32 %v3314, 4294901760
    %3316 = vmatpush1.xpose.msra.mxu0 %v3315
    %3317 = vmatprep.subr.mxu0 0.0
    %v3318 = vand.u32 %v2853, 4294901760
    %v3319 = vsub.f32 %v2853, %v3318
    %v3320 = vand.u32 %v3319, 4294901760
    %3321 = vmatpush1.xpose.msra.mxu0 %v3320
    %3322 = vmatprep.subr.mxu0 0.0
    %v3323 = vand.u32 %v2856, 4294901760
    %v3324 = vsub.f32 %v2856, %v3323
    %v3325 = vand.u32 %v3324, 4294901760
    %3326 = vmatpush1.xpose.msra.mxu0 %v3325
    %3327 = vmatprep.subr.mxu0 0.0
    %v3328 = vand.u32 %v2859, 4294901760
    %v3329 = vsub.f32 %v2859, %v3328
    %v3330 = vand.u32 %v3329, 4294901760
    %3331 = vmatpush1.xpose.msra.mxu0 %v3330
    %3332 = vmatprep.subr.mxu0 0.0
    %3333 = vmatpush1.xpose.msra.mxu0 0.0
    %3334 = vmatprep.subr.mxu0 0.0
    %3335 = vmatpush1.xpose.msra.mxu0 0.0
    %3336 = vmatprep.subr.mxu0 0.0
    %3337 = vmatpush1.xpose.msra.mxu0 0.0
    %3338 = vmatprep.subr.mxu0 0.0
    %3339 = vmatpush1.xpose.msra.mxu0 0.0
    %3340 = vmatprep.subr.mxu0 0.0
    %3341 = vmatpush1.xpose.msra.mxu0 0.0
    %3342 = vmatprep.subr.mxu0 0.0
    %3343 = vmatpush1.xpose.msra.mxu0 0.0
    %3344 = vmatprep.subr.mxu0 0.0
    %3345 = vmatpush1.xpose.msra.mxu0 0.0
    %3346 = vmatprep.subr.mxu0 0.0
    %3347 = vmatpush1.xpose.msra.mxu0 0.0
    %3348 = vmatprep.subr.mxu0 0.0
    %3349 = vmatpush1.xpose.msra.mxu0 0.0
    %3350 = vmatprep.subr.mxu0 0.0
    %3351 = vmatpush1.xpose.msra.mxu0 0.0
    %3352 = vmatprep.subr.mxu0 0.0
    %3353 = vmatpush1.xpose.msra.mxu0 0.0
    %3354 = vmatprep.subr.mxu0 0.0
    %3355 = vmatpush1.xpose.msra.mxu0 0.0
    %3356 = vmatprep.subr.mxu0 0.0
    %3357 = vmatpush1.xpose.msra.mxu0 0.0
    %3358 = vmatprep.subr.mxu0 0.0
    %3359 = vmatpush1.xpose.msra.mxu0 0.0
    %3360 = vmatprep.subr.mxu0 0.0
    %3361 = vmatpush1.xpose.msra.mxu0 0.0
    %3362 = vmatprep.subr.mxu0 0.0
    %3363 = vmatpush1.xpose.msra.mxu0 0.0
    %3364 = vmatprep.subr.mxu0 0.0
    %3365 = vmatpush1.xpose.msra.mxu0 0.0
    %3366 = vmatprep.subr.mxu0 0.0
    %3367 = vmatpush1.xpose.msra.mxu0 0.0
    %3368 = vmatprep.subr.mxu0 0.0
    %3369 = vmatpush1.xpose.msra.mxu0 0.0
    %3370 = vmatprep.subr.mxu0 0.0
    %3371 = vmatpush1.xpose.msra.mxu0 0.0
    %3372 = vmatprep.subr.mxu0 0.0
    %3373 = vmatpush1.xpose.msra.mxu0 0.0
    %3374 = vmatprep.subr.mxu0 0.0
    %3375 = vmatpush1.xpose.msra.mxu0 0.0
    %3376 = vmatprep.subr.mxu0 0.0
    %3377 = vmatpush1.xpose.msra.mxu0 0.0
    %3378 = vmatprep.subr.mxu0 0.0
    %3379 = vmatpush1.xpose.msra.mxu0 0.0
    %3380 = vmatprep.subr.mxu0 0.0
    %3381 = vmatpush1.xpose.msra.mxu0 0.0
    %3382 = vmatprep.subr.mxu0 0.0
    %3383 = vmatpush1.xpose.msra.mxu0 0.0
    %3384 = vmatprep.subr.mxu0 0.0
    %3385 = vmatpush1.xpose.msra.mxu0 0.0
    %3386 = vmatprep.subr.mxu0 0.0
    %3387 = vmatpush1.xpose.msra.mxu0 0.0
    %3388 = vmatprep.mubr.f32.mxu0 0.0
    %v3389 = vand.u32 %v2835, 4294901760
    %3390 = vmatmul.mubr.f32.gmra.mrb[0].mxu0 %v3389
    %v3391 = vpop.f32.mrb[0].mxu0
    %v3392 = vadd.f32 %v3277, %v3391
    %v3393 = vpop.f32.mrb[0].mxu0
    %3394 = vmatprep.mubr.f32.mxu0 0.0
    %v3395 = vand.u32 %v2838, 4294901760
    %3396 = vmatmul.mubr.f32.gmra.mrb[0].mxu0 %v3395
    %v3397 = vpop.f32.mrb[0].mxu0
    %v3398 = vadd.f32 %v3285, %v3397
    %v3399 = vpop.f32.mrb[0].mxu0
    %3400 = vmatprep.mubr.f32.mxu0 0.0
    %v3401 = vand.u32 %v2841, 4294901760
    %3402 = vmatmul.mubr.f32.gmra.mrb[0].mxu0 %v3401
    %v3403 = vpop.f32.mrb[0].mxu0
    %v3404 = vadd.f32 %v3293, %v3403
    %v3405 = vpop.f32.mrb[0].mxu0
    %3406 = vmatprep.mubr.f32.mxu0 0.0
    %v3407 = vand.u32 %v2844, 4294901760
    %3408 = vmatmul.mubr.f32.gmra.mrb[0].mxu0 %v3407
    %v3409 = vpop.f32.mrb[0].mxu0
    %v3410 = vadd.f32 %v3301, %v3409
    %v3411 = vpop.f32.mrb[0].mxu0
    %3412 = vmatprep.mubr.f32.mxu0 0.0
    %v3413 = vand.u32 %v2847, 4294901760
    %3414 = vmatmul.mubr.f32.gmra.mrb[0].mxu0 %v3413
    %v3415 = vpop.f32.mrb[0].mxu0
    %v3416 = vadd.f32 %v3309, %v3415
    %v3417 = vpop.f32.mrb[0].mxu0
    %3418 = vdwg.mxu0
    %3419 = vmatprep.subr.mxu0 0.0
    %v3420 = vand.u32 %v2850, 4294901760
    %3421 = vmatpush1.xpose.msra.mxu0 %v3420
    %3422 = vmatprep.subr.mxu0 0.0
    %v3423 = vand.u32 %v2853, 4294901760
    %3424 = vmatpush1.xpose.msra.mxu0 %v3423
    %3425 = vmatprep.subr.mxu0 0.0
    %v3426 = vand.u32 %v2856, 4294901760
    %3427 = vmatpush1.xpose.msra.mxu0 %v3426
    %3428 = vmatprep.subr.mxu0 0.0
    %v3429 = vand.u32 %v2859, 4294901760
    %3430 = vmatpush1.xpose.msra.mxu0 %v3429
    %3431 = vmatprep.subr.mxu0 0.0
    %3432 = vmatpush1.xpose.msra.mxu0 0.0
    %3433 = vmatprep.subr.mxu0 0.0
    %3434 = vmatpush1.xpose.msra.mxu0 0.0
    %3435 = vmatprep.subr.mxu0 0.0
    %3436 = vmatpush1.xpose.msra.mxu0 0.0
    %3437 = vmatprep.subr.mxu0 0.0
    %3438 = vmatpush1.xpose.msra.mxu0 0.0
    %3439 = vmatprep.subr.mxu0 0.0
    %3440 = vmatpush1.xpose.msra.mxu0 0.0
    %3441 = vmatprep.subr.mxu0 0.0
    %3442 = vmatpush1.xpose.msra.mxu0 0.0
    %3443 = vmatprep.subr.mxu0 0.0
    %3444 = vmatpush1.xpose.msra.mxu0 0.0
    %3445 = vmatprep.subr.mxu0 0.0
    %3446 = vmatpush1.xpose.msra.mxu0 0.0
    %3447 = vmatprep.subr.mxu0 0.0
    %3448 = vmatpush1.xpose.msra.mxu0 0.0
    %3449 = vmatprep.subr.mxu0 0.0
    %3450 = vmatpush1.xpose.msra.mxu0 0.0
    %3451 = vmatprep.subr.mxu0 0.0
    %3452 = vmatpush1.xpose.msra.mxu0 0.0
    %3453 = vmatprep.subr.mxu0 0.0
    %3454 = vmatpush1.xpose.msra.mxu0 0.0
    %3455 = vmatprep.subr.mxu0 0.0
    %3456 = vmatpush1.xpose.msra.mxu0 0.0
    %3457 = vmatprep.subr.mxu0 0.0
    %3458 = vmatpush1.xpose.msra.mxu0 0.0
    %3459 = vmatprep.subr.mxu0 0.0
    %3460 = vmatpush1.xpose.msra.mxu0 0.0
    %3461 = vmatprep.subr.mxu0 0.0
    %3462 = vmatpush1.xpose.msra.mxu0 0.0
    %3463 = vmatprep.subr.mxu0 0.0
    %3464 = vmatpush1.xpose.msra.mxu0 0.0
    %3465 = vmatprep.subr.mxu0 0.0
    %3466 = vmatpush1.xpose.msra.mxu0 0.0
    %3467 = vmatprep.subr.mxu0 0.0
    %3468 = vmatpush1.xpose.msra.mxu0 0.0
    %3469 = vmatprep.subr.mxu0 0.0
    %3470 = vmatpush1.xpose.msra.mxu0 0.0
    %3471 = vmatprep.subr.mxu0 0.0
    %3472 = vmatpush1.xpose.msra.mxu0 0.0
    %3473 = vmatprep.subr.mxu0 0.0
    %3474 = vmatpush1.xpose.msra.mxu0 0.0
    %3475 = vmatprep.subr.mxu0 0.0
    %3476 = vmatpush1.xpose.msra.mxu0 0.0
    %3477 = vmatprep.subr.mxu0 0.0
    %3478 = vmatpush1.xpose.msra.mxu0 0.0
    %3479 = vmatprep.subr.mxu0 0.0
    %3480 = vmatpush1.xpose.msra.mxu0 0.0
    %3481 = vmatprep.subr.mxu0 0.0
    %3482 = vmatpush1.xpose.msra.mxu0 0.0
    %3483 = vmatprep.subr.mxu0 0.0
    %3484 = vmatpush1.xpose.msra.mxu0 0.0
    %3485 = vmatprep.subr.mxu0 0.0
    %3486 = vmatpush1.xpose.msra.mxu0 0.0
    %3487 = vmatprep.mubr.f32.mxu0 0.0
    %v3488 = vand.u32 %v2835, 4294901760
    %3489 = vmatmul.mubr.f32.gmra.mrb[0].mxu0 %v3488
    %v3490 = vpop.f32.mrb[0].mxu0
    %v3491 = vadd.f32 %v3392, %v3490
    %v3492 = vpop.f32.mrb[0].mxu0
    %3493 = vmatprep.mubr.f32.mxu0 0.0
    %v3494 = vand.u32 %v2838, 4294901760
    %3495 = vmatmul.mubr.f32.gmra.mrb[0].mxu0 %v3494
    %v3496 = vpop.f32.mrb[0].mxu0
    %v3497 = vadd.f32 %v3398, %v3496
    %v3498 = vpop.f32.mrb[0].mxu0
    %3499 = vmatprep.mubr.f32.mxu0 0.0
    %v3500 = vand.u32 %v2841, 4294901760
    %3501 = vmatmul.mubr.f32.gmra.mrb[0].mxu0 %v3500
    %v3502 = vpop.f32.mrb[0].mxu0
    %v3503 = vadd.f32 %v3404, %v3502
    %v3504 = vpop.f32.mrb[0].mxu0
    %3505 = vmatprep.mubr.f32.mxu0 0.0
    %v3506 = vand.u32 %v2844, 4294901760
    %3507 = vmatmul.mubr.f32.gmra.mrb[0].mxu0 %v3506
    %v3508 = vpop.f32.mrb[0].mxu0
    %v3509 = vadd.f32 %v3410, %v3508
    %v3510 = vpop.f32.mrb[0].mxu0
    %3511 = vmatprep.mubr.f32.mxu0 0.0
    %v3512 = vand.u32 %v2847, 4294901760
    %3513 = vmatmul.mubr.f32.gmra.mrb[0].mxu0 %v3512
    %v3514 = vpop.f32.mrb[0].mxu0
    %v3515 = vadd.f32 %v3416, %v3514
    %v3516 = vpop.f32.mrb[0].mxu0
    %3517 = vdwg.mxu0
    %v3519 = vlaneseq
    %v3520 = vshrl.u32 %v3519, 7
    %v3521 = vsub.s32 0, %v3520
    %v3522 = vrot.slane %v2833, %v3521
    %v3524 = vadd.f32 %v3491, %v3522
    %3525 = vst.msk [vmem:[#allocation7] sm:$0xff] %vm53, %v3524
    %3526 = vst.msk [vmem:[%s956] sm:$0xff] %vm53, %v3497
    %3527 = vst.msk [vmem:[%s956 + $0x8] sm:$0xff] %vm53, %v3503
    %3528 = vst.msk [vmem:[%s967] sm:$0xff] %vm53, %v3509
    %3529 = vst.msk [vmem:[%s967 + $0x8] sm:$0xff] %vm53, %v3515
    // Predicated region
    $region22: #{tpu_custom_call.1} parent=1 // pred_check
      _
    $region23: #{tpu_custom_call.1} parent=1 // pred_check_branch
      %3531 = sbr.rel (0) target = $region25
    $region24: #{tpu_custom_call.1} parent=1 // pred_region
      %s3533 = ssub.s32 640, 640
      %3534 = vsyncadd [#allocation4], %s3533
      %s3535 = sshll.u32 [#allocation7], 4
      %s3536 = int_to_ptr.vmem [resolvable:$true] %s3535
      %3541 = dma.vmem_to_hbm [thread:$0]  %s3536, 640, %s3, [#allocation4], 128, 128, 8
    $region25: #{tpu_custom_call.1} parent=1 // pred_fallthru
      _
    // Predicated region
    $region26: #{tpu_custom_call.1} parent=1 // pred_check
      _
    $region27: #{tpu_custom_call.1} parent=1 // pred_check_branch
      %3543 = sbr.rel (0) target = $region29
    $region28: #{tpu_custom_call.1} parent=1 // pred_region
      %3544 = dma.done [#allocation4], 640
    $region29: #{tpu_custom_call.1} parent=1 // pred_fallthru
      _
    %3545 = vsyncpa [#allocation3], 1
    %3546 = vsyncpa [#allocation6], 1
    %3547 = vsyncpa [#allocation4], 1

</llo_original>
